<compile_context>
chip_gen: v7x
topology: tpu7x:2x2x1
jax: 0.10.0
libtpu: 0.0.40
codegen_flags: <defaults>
</compile_context>

<pallas_src>
import jax
import jax.numpy as jnp
import numpy as np
from jax.experimental import pallas as pl
from jax.experimental.pallas import tpu as pltpu

# logical dims (PyTorch VAE)
D_IN = 784
D_H = 400
D_Z = 20

# lane-aligned padded dims
D_IN_P = 896     # 7 * 128  (recon / fc4 output width)
D_H_P = 512      # 4 * 128  (hidden width)
D_MLV_P = 128    # packed head width: [mu(0:20) | 0 | logvar(64:84) | 0]
Z_PAD = 32       # z / eps padded width (clean bf16 sublane tile for w3)
LV_OFF = 64      # lane offset of logvar in the packed head (half-vreg aligned)

TB_MAX = 512     # max batch-tile rows per grid step


def _round_up(n, m):
    return ((n + m - 1) // m) * m


def _cdiv(a, b):
    return -(-a // b)


def _vae_kernel(x_ref, eps_ref,
                w1_ref, b1_ref,
                w2_ref, b2_ref,
                w3_ref, b3_ref,
                w4_ref, b4_ref,
                recon_ref, mlv_ref):
    # ---- encode: h1 = relu(x @ W1 + b1) ------------------------------------
    xb = x_ref[...].astype(jnp.bfloat16)                                    # (TB, 784)
    h1 = jnp.dot(xb, w1_ref[...], preferred_element_type=jnp.float32) + b1_ref[...]
    h1 = jnp.maximum(h1, 0.0)                                               # (TB, 512)

    # ---- fused heads: [mu | 0 | logvar | 0] = h1 @ W2 + b2 ------------------
    mlv = jnp.dot(h1.astype(jnp.bfloat16), w2_ref[...],
                  preferred_element_type=jnp.float32) + b2_ref[...]         # (TB, 128)
    mlv_ref[...] = mlv                                                      # lane-dense store

    mu = mlv[:, :Z_PAD]                        # [mu(0:20)     | 0]  (TB, 32)
    logvar = mlv[:, LV_OFF:LV_OFF + Z_PAD]     # [logvar(0:20) | 0]  (TB, 32)

    # ---- reparameterize: z = eps * exp(0.5 * logvar) + mu -------------------
    # padded cols: eps=0, logvar=0, mu=0  =>  z pad cols are exactly 0
    z = eps_ref[...] * jnp.exp(0.5 * logvar) + mu                           # (TB, 32)

    # ---- decode: h3 = relu(z @ W3 + b3) ------------------------------------
    h3 = jnp.dot(z.astype(jnp.bfloat16), w3_ref[...],
                 preferred_element_type=jnp.float32) + b3_ref[...]
    h3 = jnp.maximum(h3, 0.0)                                               # (TB, 512)

    logits = jnp.dot(h3.astype(jnp.bfloat16), w4_ref[...],
                     preferred_element_type=jnp.float32) + b4_ref[...]      # (TB, 896)

    # sigmoid(x) = 0.5 * (1 + tanh(0.5 x)): a single EUP transcendental per element
    # (vs exp + reciprocal) and exact; stored in bf16 to halve the widest writeback.
    # (A bf16-input tanh would be ~2x faster on v6e/v7x but buys nothing on v5e.)
    recon_ref[...] = (0.5 * (1.0 + jnp.tanh(0.5 * logits))).astype(recon_ref.dtype)


def pack_params(p):
    """Pad logical f32 params to lane-aligned shapes; weights cast to bf16."""
    def padw(w, rows, cols):
        out = jnp.zeros((rows, cols), jnp.float32)
        out = out.at[:w.shape[0], :w.shape[1]].set(w)
        return out.astype(jnp.bfloat16)

    def padb(b, cols):
        out = jnp.zeros((1, cols), jnp.float32)
        return out.at[:, :b.shape[1]].set(b)

    # fused heads, lane-64-aligned: cols [0:20]=mu, [64:84]=logvar, rest exactly zero
    w2 = jnp.zeros((D_H_P, D_MLV_P), jnp.float32)
    w2 = w2.at[:D_H, :D_Z].set(p["w21"])
    w2 = w2.at[:D_H, LV_OFF:LV_OFF + D_Z].set(p["w22"])
    b2 = jnp.zeros((1, D_MLV_P), jnp.float32)
    b2 = b2.at[:, :D_Z].set(p["b21"])
    b2 = b2.at[:, LV_OFF:LV_OFF + D_Z].set(p["b22"])

    return dict(
        w1=padw(p["w1"], D_IN, D_H_P),     b1=padb(p["b1"], D_H_P),
        w2=w2.astype(jnp.bfloat16),        b2=b2,
        w3=padw(p["w3"], Z_PAD, D_H_P),    b3=padb(p["b3"], D_H_P),
        w4=padw(p["w4"], D_H_P, D_IN_P),   b4=padb(p["b4"], D_IN_P),
    )


@jax.jit
def vae_forward(x_img, eps, packed):
    """x_img: (B, 1, 28, 28) bf16 (or f32), eps: (B, 20) f32.

    Returns (recon[bf16], mu[f32], logvar[f32]).
    """
    b = x_img.shape[0]
    x = x_img.reshape(-1, D_IN)                      # glue: x.view(-1, 784), keep dtype

    # eps padded with zeros to 32 lanes so z is computed 32-wide (clean bf16 w3 tile)
    eps32 = jnp.pad(eps.astype(jnp.float32), ((0, 0), (0, Z_PAD - D_Z)))

    # Batch tiling: >=2 near-even tiles whenever possible (v7x megacore) while
    # bounding last-tile padding waste; tb is a multiple of 8 sublanes, <= TB_MAX.
    n_target = max(_cdiv(b, TB_MAX), 2)
    tb = _round_up(_cdiv(b, n_target), 8)
    b_pad = _round_up(b, tb)
    if b_pad != b:
        x = jnp.pad(x, ((0, b_pad - b), (0, 0)))
        eps32 = jnp.pad(eps32, ((0, b_pad - b), (0, 0)))
    n_tiles = b_pad // tb

    def batch_spec(cols):
        return pl.BlockSpec((tb, cols), lambda i: (i, 0))

    def const_spec(shape):
        return pl.BlockSpec(shape, lambda i: (0,) * len(shape))   # VMEM-resident weights

    operands = (
        x, eps32,
        packed["w1"], packed["b1"],
        packed["w2"], packed["b2"],
        packed["w3"], packed["b3"],
        packed["w4"], packed["b4"],
    )
    in_specs = [batch_spec(D_IN), batch_spec(Z_PAD)] + \
               [const_spec(op.shape) for op in operands[2:]]

    recon_pad, mlv = pl.pallas_call(
        _vae_kernel,
        out_shape=(
            jax.ShapeDtypeStruct((b_pad, D_IN_P), jnp.bfloat16),   # padded recon (bf16)
            jax.ShapeDtypeStruct((b_pad, D_MLV_P), jnp.float32),   # packed [mu|0|logvar|0]
        ),
        grid=(n_tiles,),
        in_specs=in_specs,
        out_specs=(
            pl.BlockSpec((tb, D_IN_P), lambda i: (i, 0)),
            pl.BlockSpec((tb, D_MLV_P), lambda i: (i, 0)),
        ),
        compiler_params=pltpu.CompilerParams(
            dimension_semantics=("parallel",),        # shard batch tiles across TCs
            vmem_limit_bytes=48 * 1024 * 1024,        # TB=512 headroom (v5e default=16MiB)
        ),
    )(*operands)

    recon = recon_pad[:b, :D_IN]                      # bf16; upcast downstream if needed
    mu = mlv[:b, :D_Z]
    logvar = mlv[:b, LV_OFF:LV_OFF + D_Z]
    return recon, mu, logvar


def init_params(key):
    """Deterministic init mimicking nn.Linear's U(-1/sqrt(fan_in), 1/sqrt(fan_in))."""
    def linear(key, fan_in, fan_out):
        kw, kb = jax.random.split(key)
        bound = 1.0 / np.sqrt(fan_in)
        w = jax.random.uniform(kw, (fan_in, fan_out), jnp.float32, -bound, bound)
        b = jax.random.uniform(kb, (1, fan_out), jnp.float32, -bound, bound)
        return w, b

    k1, k2, k3, k4, k5 = jax.random.split(key, 5)
    w1, b1 = linear(k1, D_IN, D_H)
    w21, b21 = linear(k2, D_H, D_Z)
    w22, b22 = linear(k3, D_H, D_Z)
    w3, b3 = linear(k4, D_Z, D_H)
    w4, b4 = linear(k5, D_H, D_IN)
    return dict(w1=w1, b1=b1, w21=w21, b21=b21, w22=w22, b22=b22,
                w3=w3, b3=b3, w4=w4, b4=b4)


def vae_forward_ref(x_img, eps, p):
    """Pure-JAX reference mirroring the kernel's bf16-weight / f32-accum math."""
    def mm(a, w):
        return jnp.dot(a.astype(jnp.bfloat16), w.astype(jnp.bfloat16),
                       preferred_element_type=jnp.float32)

    x = x_img.reshape(-1, D_IN)
    h1 = jax.nn.relu(mm(x, p["w1"]) + p["b1"])
    mu = mm(h1, p["w21"]) + p["b21"]
    logvar = mm(h1, p["w22"]) + p["b22"]
    z = eps * jnp.exp(0.5 * logvar) + mu
    h3 = jax.nn.relu(mm(z, p["w3"]) + p["b3"])
    recon = jax.nn.sigmoid(mm(h3, p["w4"]) + p["b4"])
    return recon, mu, logvar


if __name__ == "__main__":
    key = jax.random.PRNGKey(0)
    k_param, k_x, k_eps = jax.random.split(key, 3)

    B = 8
    params = init_params(k_param)
    packed = pack_params(params)
    # x kept bf16 end-to-end (produced in bf16 upstream -> halves the x HBM stream,
    # no standalone wrapper cast). MNIST-like values in [0, 1].
    x_img = jax.random.uniform(k_x, (B, 1, 28, 28), jnp.float32).astype(jnp.bfloat16)
    # eps corresponds to torch.randn_like(std) in reparameterize (fixed for determinism)
    eps = jax.random.normal(k_eps, (B, D_Z), jnp.float32)

    recon, mu, logvar = vae_forward(x_img, eps, packed)
    jax.block_until_ready((recon, mu, logvar))

    recon_r, mu_r, logvar_r = vae_forward_ref(x_img, eps, params)
    np.testing.assert_allclose(np.asarray(mu), np.asarray(mu_r), atol=1e-3, rtol=1e-3)
    np.testing.assert_allclose(np.asarray(logvar), np.asarray(logvar_r), atol=1e-3, rtol=1e-3)
    # recon is bf16 (intentional: halves the dominant HBM writeback stream)
    np.testing.assert_allclose(np.asarray(recon.astype(jnp.float32)),
                               np.asarray(recon_r), atol=2e-2, rtol=2e-2)

    print("KERNEL_OK")
</pallas_src>

<mosaic_0001>
module attributes {stable_mosaic.version = 11 : i64} {
  func.func @_vae_kernel(%arg0: i32, %arg1: memref<8x784xbf16, #tpu.memory_space<vmem>>, %arg2: memref<8x32xf32, #tpu.memory_space<vmem>>, %arg3: memref<784x512xbf16, #tpu.memory_space<vmem>>, %arg4: memref<1x512xf32, #tpu.memory_space<vmem>>, %arg5: memref<512x128xbf16, #tpu.memory_space<vmem>>, %arg6: memref<1x128xf32, #tpu.memory_space<vmem>>, %arg7: memref<32x512xbf16, #tpu.memory_space<vmem>>, %arg8: memref<1x512xf32, #tpu.memory_space<vmem>>, %arg9: memref<512x896xbf16, #tpu.memory_space<vmem>>, %arg10: memref<1x896xf32, #tpu.memory_space<vmem>>, %arg11: memref<8x896xbf16, #tpu.memory_space<vmem>>, %arg12: memref<8x128xf32, #tpu.memory_space<vmem>>) attributes {dimension_semantics = [#tpu.dimension_semantics<parallel>], iteration_bounds = array<i64: 1>, scalar_prefetch = 0 : i64, scratch_operands = 0 : i64, tpu.core_type = #tpu.core_type<tc>, window_params = [{transform_indices = @transform_0, window_bounds = array<i64: 8, 784>}, {transform_indices = @transform_1, window_bounds = array<i64: 8, 32>}, {pipeline_mode = #tpu.pipeline_mode<synchronous>, transform_indices = @transform_2, window_bounds = array<i64: 784, 512>}, {pipeline_mode = #tpu.pipeline_mode<synchronous>, transform_indices = @transform_3, window_bounds = array<i64: 1, 512>}, {pipeline_mode = #tpu.pipeline_mode<synchronous>, transform_indices = @transform_4, window_bounds = array<i64: 512, 128>}, {pipeline_mode = #tpu.pipeline_mode<synchronous>, transform_indices = @transform_5, window_bounds = array<i64: 1, 128>}, {pipeline_mode = #tpu.pipeline_mode<synchronous>, transform_indices = @transform_6, window_bounds = array<i64: 32, 512>}, {pipeline_mode = #tpu.pipeline_mode<synchronous>, transform_indices = @transform_7, window_bounds = array<i64: 1, 512>}, {pipeline_mode = #tpu.pipeline_mode<synchronous>, transform_indices = @transform_8, window_bounds = array<i64: 512, 896>}, {pipeline_mode = #tpu.pipeline_mode<synchronous>, transform_indices = @transform_9, window_bounds = array<i64: 1, 896>}, {transform_indices = @transform_10, window_bounds = array<i64: 8, 896>}, {transform_indices = @transform_11, window_bounds = array<i64: 8, 128>}]} {
    %c0 = arith.constant 0 : index
    %c0_0 = arith.constant 0 : index
    %0 = vector.load %arg1[%c0, %c0_0] : memref<8x784xbf16, #tpu.memory_space<vmem>>, vector<8x784xbf16>
    %c0_1 = arith.constant 0 : index
    %c0_2 = arith.constant 0 : index
    %1 = vector.load %arg3[%c0_1, %c0_2] : memref<784x512xbf16, #tpu.memory_space<vmem>>, vector<784x512xbf16>
    %cst = arith.constant dense<0.000000e+00> : vector<8x512xf32>
    %2 = tpu.matmul %0, %1, %cst {dimension_numbers = #tpu.dot_dimension_numbers<[1], [0], [0], [1], [0, 0, 1, 1], [], []>} : vector<8x784xbf16>, vector<784x512xbf16>, vector<8x512xf32> -> vector<8x512xf32>
    %c0_3 = arith.constant 0 : index
    %c0_4 = arith.constant 0 : index
    %3 = vector.load %arg4[%c0_3, %c0_4] : memref<1x512xf32, #tpu.memory_space<vmem>>, vector<1x512xf32>
    %4 = vector.broadcast %3 : vector<1x512xf32> to vector<8x512xf32>
    %5 = arith.addf %2, %4 : vector<8x512xf32>
    %cst_5 = arith.constant 0.000000e+00 : f32
    %6 = vector.broadcast %cst_5 : f32 to vector<8x512xf32>
    %7 = arith.maximumf %5, %6 : vector<8x512xf32>
    %8 = arith.truncf %7 : vector<8x512xf32> to vector<8x512xbf16>
    %c0_6 = arith.constant 0 : index
    %c0_7 = arith.constant 0 : index
    %9 = vector.load %arg5[%c0_6, %c0_7] : memref<512x128xbf16, #tpu.memory_space<vmem>>, vector<512x128xbf16>
    %cst_8 = arith.constant dense<0.000000e+00> : vector<8x128xf32>
    %10 = tpu.matmul %8, %9, %cst_8 {dimension_numbers = #tpu.dot_dimension_numbers<[1], [0], [0], [1], [0, 0, 1, 1], [], []>} : vector<8x512xbf16>, vector<512x128xbf16>, vector<8x128xf32> -> vector<8x128xf32>
    %c0_9 = arith.constant 0 : index
    %c0_10 = arith.constant 0 : index
    %11 = vector.load %arg6[%c0_9, %c0_10] : memref<1x128xf32, #tpu.memory_space<vmem>>, vector<1x128xf32>
    %12 = vector.broadcast %11 : vector<1x128xf32> to vector<8x128xf32>
    %13 = arith.addf %10, %12 : vector<8x128xf32>
    %c0_11 = arith.constant 0 : index
    %c0_12 = arith.constant 0 : index
    %14 = vector.load %arg12[%c0_11, %c0_12] : memref<8x128xf32, #tpu.memory_space<vmem>>, vector<8x128xf32>
    tpu.vector_store %arg12[%c0_11, %c0_12], %13 {strides = array<i32>} : memref<8x128xf32, #tpu.memory_space<vmem>>, vector<8x128xf32>,
    %15 = vector.extract_strided_slice %13 {offsets = [0, 0], sizes = [8, 32], strides = [1, 1]} : vector<8x128xf32> to vector<8x32xf32>
    %16 = vector.extract_strided_slice %13 {offsets = [0, 64], sizes = [8, 32], strides = [1, 1]} : vector<8x128xf32> to vector<8x32xf32>
    %c0_13 = arith.constant 0 : index
    %c0_14 = arith.constant 0 : index
    %17 = vector.load %arg2[%c0_13, %c0_14] : memref<8x32xf32, #tpu.memory_space<vmem>>, vector<8x32xf32>
    %cst_15 = arith.constant 5.000000e-01 : f32
    %18 = vector.broadcast %cst_15 : f32 to vector<8x32xf32>
    %19 = arith.mulf %18, %16 : vector<8x32xf32>
    %20 = math.exp %19 : vector<8x32xf32>
    %21 = arith.mulf %17, %20 : vector<8x32xf32>
    %22 = arith.addf %21, %15 : vector<8x32xf32>
    %23 = arith.truncf %22 : vector<8x32xf32> to vector<8x32xbf16>
    %c0_16 = arith.constant 0 : index
    %c0_17 = arith.constant 0 : index
    %24 = vector.load %arg7[%c0_16, %c0_17] : memref<32x512xbf16, #tpu.memory_space<vmem>>, vector<32x512xbf16>
    %cst_18 = arith.constant dense<0.000000e+00> : vector<8x512xf32>
    %25 = tpu.matmul %23, %24, %cst_18 {dimension_numbers = #tpu.dot_dimension_numbers<[1], [0], [0], [1], [0, 0, 1, 1], [], []>} : vector<8x32xbf16>, vector<32x512xbf16>, vector<8x512xf32> -> vector<8x512xf32>
    %c0_19 = arith.constant 0 : index
    %c0_20 = arith.constant 0 : index
    %26 = vector.load %arg8[%c0_19, %c0_20] : memref<1x512xf32, #tpu.memory_space<vmem>>, vector<1x512xf32>
    %27 = vector.broadcast %26 : vector<1x512xf32> to vector<8x512xf32>
    %28 = arith.addf %25, %27 : vector<8x512xf32>
    %cst_21 = arith.constant 0.000000e+00 : f32
    %29 = vector.broadcast %cst_21 : f32 to vector<8x512xf32>
    %30 = arith.maximumf %28, %29 : vector<8x512xf32>
    %31 = arith.truncf %30 : vector<8x512xf32> to vector<8x512xbf16>
    %c0_22 = arith.constant 0 : index
    %c0_23 = arith.constant 0 : index
    %32 = vector.load %arg9[%c0_22, %c0_23] : memref<512x896xbf16, #tpu.memory_space<vmem>>, vector<512x896xbf16>
    %cst_24 = arith.constant dense<0.000000e+00> : vector<8x896xf32>
    %33 = tpu.matmul %31, %32, %cst_24 {dimension_numbers = #tpu.dot_dimension_numbers<[1], [0], [0], [1], [0, 0, 1, 1], [], []>} : vector<8x512xbf16>, vector<512x896xbf16>, vector<8x896xf32> -> vector<8x896xf32>
    %c0_25 = arith.constant 0 : index
    %c0_26 = arith.constant 0 : index
    %34 = vector.load %arg10[%c0_25, %c0_26] : memref<1x896xf32, #tpu.memory_space<vmem>>, vector<1x896xf32>
    %35 = vector.broadcast %34 : vector<1x896xf32> to vector<8x896xf32>
    %36 = arith.addf %33, %35 : vector<8x896xf32>
    %cst_27 = arith.constant 5.000000e-01 : f32
    %37 = vector.broadcast %cst_27 : f32 to vector<8x896xf32>
    %38 = arith.mulf %37, %36 : vector<8x896xf32>
    %39 = math.tanh %38 : vector<8x896xf32>
    %cst_28 = arith.constant 1.000000e+00 : f32
    %40 = vector.broadcast %cst_28 : f32 to vector<8x896xf32>
    %41 = arith.addf %40, %39 : vector<8x896xf32>
    %cst_29 = arith.constant 5.000000e-01 : f32
    %42 = vector.broadcast %cst_29 : f32 to vector<8x896xf32>
    %43 = arith.mulf %42, %41 : vector<8x896xf32>
    %44 = arith.truncf %43 : vector<8x896xf32> to vector<8x896xbf16>
    %c0_30 = arith.constant 0 : index
    %c0_31 = arith.constant 0 : index
    %45 = vector.load %arg11[%c0_30, %c0_31] : memref<8x896xbf16, #tpu.memory_space<vmem>>, vector<8x896xbf16>
    tpu.vector_store %arg11[%c0_30, %c0_31], %44 {strides = array<i32>} : memref<8x896xbf16, #tpu.memory_space<vmem>>, vector<8x896xbf16>,
    return
  }
  func.func @transform_0(%arg0: i32) -> (i32, i32) {
    %c0_i32 = arith.constant 0 : i32
    %c0_i32_0 = arith.constant 0 : i32
    return %arg0, %c0_i32 : i32, i32
  }
  func.func @transform_1(%arg0: i32) -> (i32, i32) {
    %c0_i32 = arith.constant 0 : i32
    %c0_i32_0 = arith.constant 0 : i32
    return %arg0, %c0_i32 : i32, i32
  }
  func.func @transform_2(%arg0: i32) -> (i32, i32) {
    %c0_i32 = arith.constant 0 : i32
    %c0_i32_0 = arith.constant 0 : i32
    %c0_i32_1 = arith.constant 0 : i32
    return %c0_i32, %c0_i32_0 : i32, i32
  }
  func.func @transform_3(%arg0: i32) -> (i32, i32) {
    %c0_i32 = arith.constant 0 : i32
    %c0_i32_0 = arith.constant 0 : i32
    %c0_i32_1 = arith.constant 0 : i32
    return %c0_i32, %c0_i32_0 : i32, i32
  }
  func.func @transform_4(%arg0: i32) -> (i32, i32) {
    %c0_i32 = arith.constant 0 : i32
    %c0_i32_0 = arith.constant 0 : i32
    %c0_i32_1 = arith.constant 0 : i32
    return %c0_i32, %c0_i32_0 : i32, i32
  }
  func.func @transform_5(%arg0: i32) -> (i32, i32) {
    %c0_i32 = arith.constant 0 : i32
    %c0_i32_0 = arith.constant 0 : i32
    %c0_i32_1 = arith.constant 0 : i32
    return %c0_i32, %c0_i32_0 : i32, i32
  }
  func.func @transform_6(%arg0: i32) -> (i32, i32) {
    %c0_i32 = arith.constant 0 : i32
    %c0_i32_0 = arith.constant 0 : i32
    %c0_i32_1 = arith.constant 0 : i32
    return %c0_i32, %c0_i32_0 : i32, i32
  }
  func.func @transform_7(%arg0: i32) -> (i32, i32) {
    %c0_i32 = arith.constant 0 : i32
    %c0_i32_0 = arith.constant 0 : i32
    %c0_i32_1 = arith.constant 0 : i32
    return %c0_i32, %c0_i32_0 : i32, i32
  }
  func.func @transform_8(%arg0: i32) -> (i32, i32) {
    %c0_i32 = arith.constant 0 : i32
    %c0_i32_0 = arith.constant 0 : i32
    %c0_i32_1 = arith.constant 0 : i32
    return %c0_i32, %c0_i32_0 : i32, i32
  }
  func.func @transform_9(%arg0: i32) -> (i32, i32) {
    %c0_i32 = arith.constant 0 : i32
    %c0_i32_0 = arith.constant 0 : i32
    %c0_i32_1 = arith.constant 0 : i32
    return %c0_i32, %c0_i32_0 : i32, i32
  }
  func.func @transform_10(%arg0: i32) -> (i32, i32) {
    %c0_i32 = arith.constant 0 : i32
    %c0_i32_0 = arith.constant 0 : i32
    return %arg0, %c0_i32 : i32, i32
  }
  func.func @transform_11(%arg0: i32) -> (i32, i32) {
    %c0_i32 = arith.constant 0 : i32
    %c0_i32_0 = arith.constant 0 : i32
    return %arg0, %c0_i32 : i32, i32
  }
}

</mosaic_0001>

<llo_original>
// kernel: vae_forward.1
$region0: #{vae_forward.1}
  #allocation0 [shape = 'u32[]', space=smem, size = 0x4, offset = 0x4, fixed_abs, tag = 'smem constant byte address 0x4 - core index']
  #allocation1 [shape = 'u32[144,128]{1,0:T(1,128)}', space=vmem, size = 0x12000, scoped, tag = 'internal scratch']
  %s0 = inlined_call_operand.vmem [shape: bf16[8,784], index: 0, kind: input, shape index: {}]
  %s1 = inlined_call_operand.vmem [shape: f32[8,32], index: 1, kind: input, shape index: {}]
  %s2 = inlined_call_operand.hbm [shape: bf16[784,512], index: 2, kind: input, shape index: {}]
  %s3 = inlined_call_operand.vmem [shape: f32[1,512], index: 3, kind: input, shape index: {}]
  %s4 = inlined_call_operand.vmem [shape: bf16[512,128], index: 4, kind: input, shape index: {}]
  %s5 = inlined_call_operand.vmem [shape: f32[1,128], index: 5, kind: input, shape index: {}]
  %s6 = inlined_call_operand.vmem [shape: bf16[32,512], index: 6, kind: input, shape index: {}]
  %s7 = inlined_call_operand.vmem [shape: f32[1,512], index: 7, kind: input, shape index: {}]
  %s8 = inlined_call_operand.hbm [shape: bf16[512,896], index: 8, kind: input, shape index: {}]
  %s9 = inlined_call_operand.vmem [shape: f32[1,896], index: 9, kind: input, shape index: {}]
  %s10 = inlined_call_operand.hbm [shape: bf16[8,896], index: 10, kind: output, shape index: {0}]
  %s11 = inlined_call_operand.vmem [shape: f32[8,128], index: 11, kind: output, shape index: {1}]
  %12 = xla_tuple %s10, %s11
  %s13 = sld [smem:[#allocation0]]
  $region66: #{vae_forward.1} parent=0
    _
  %s15 = ssub.s32 1, %s13
  %s16 = scalar_select 0, %s15, %s13
  $region1: #{vae_forward.1} parent=0
    #allocation2 [shape = 'u8[802816]{0}', space=vmem, size = 0xc4000, scoped, tag = 'input window, operand 2, single buffered']
    #allocation3 [shape = 's32[1]{0}', space=sflag, size = 0x4, scoped, tag = 'scoped memory for vae_forward.1']
    #allocation4 [shape = 's32[1]{0}', space=sflag, size = 0x4, scoped, tag = 'scoped memory for vae_forward.1']
    #allocation5 [shape = 'u8[917504]{0}', space=vmem, size = 0xe0000, scoped, tag = 'input window, operand 8, single buffered']
    #allocation6 [shape = 's32[1]{0}', space=sflag, size = 0x4, scoped, tag = 'scoped memory for vae_forward.1']
    #allocation7 [shape = 'u8[14336]{0}', space=vmem, size = 0x3800, scoped, tag = 'output window, operand 0, single buffered']
    %17 = vsyncpa [#allocation3], 0
    %18 = vsyncpa [#allocation6], 0
    %19 = vsyncpa [#allocation4], 0
    // Predicated region
    $region2: #{vae_forward.1} parent=1 // pred_check
      _
    $region3: #{vae_forward.1} parent=1 // pred_check_branch
      %21 = sbr.rel (0) target = $region5
    $region4: #{vae_forward.1} parent=1 // pred_region
      _
    $region5: #{vae_forward.1} parent=1 // pred_fallthru
      _
    // Predicated region
    $region6: #{vae_forward.1} parent=1 // pred_check
      _
    $region7: #{vae_forward.1} parent=1 // pred_check_branch
      %23 = sbr.rel (0) target = $region9
    $region8: #{vae_forward.1} parent=1 // pred_region
      _
    $region9: #{vae_forward.1} parent=1 // pred_fallthru
      _
    // Predicated region
    $region10: #{vae_forward.1} parent=1 // pred_check
      _
    $region11: #{vae_forward.1} parent=1 // pred_check_branch
      %25 = sbr.rel (0) target = $region13
    $region12: #{vae_forward.1} parent=1 // pred_region
      %s27 = ssub.s32 25088, 25088
      %28 = vsyncadd [#allocation3], %s27
      %s29 = sshll.u32 [#allocation2], 4
      %s30 = int_to_ptr.vmem [resolvable:$true] %s29
      %35 = dma.hbm_to_vmem [thread:$0]  %s2, 25088, %s30, [#allocation3], 256, 256, 16
    $region13: #{vae_forward.1} parent=1 // pred_fallthru
      _
    // Predicated region
    $region14: #{vae_forward.1} parent=1 // pred_check
      _
    $region15: #{vae_forward.1} parent=1 // pred_check_branch
      %37 = sbr.rel (0) target = $region17
    $region16: #{vae_forward.1} parent=1 // pred_region
      _
    $region17: #{vae_forward.1} parent=1 // pred_fallthru
      _
    // Predicated region
    $region18: #{vae_forward.1} parent=1 // pred_check
      _
    $region19: #{vae_forward.1} parent=1 // pred_check_branch
      %39 = sbr.rel (0) target = $region21
    $region20: #{vae_forward.1} parent=1 // pred_region
      _
    $region21: #{vae_forward.1} parent=1 // pred_fallthru
      _
    // Predicated region
    $region22: #{vae_forward.1} parent=1 // pred_check
      _
    $region23: #{vae_forward.1} parent=1 // pred_check_branch
      %41 = sbr.rel (0) target = $region25
    $region24: #{vae_forward.1} parent=1 // pred_region
      _
    $region25: #{vae_forward.1} parent=1 // pred_fallthru
      _
    // Predicated region
    $region26: #{vae_forward.1} parent=1 // pred_check
      _
    $region27: #{vae_forward.1} parent=1 // pred_check_branch
      %43 = sbr.rel (0) target = $region29
    $region28: #{vae_forward.1} parent=1 // pred_region
      _
    $region29: #{vae_forward.1} parent=1 // pred_fallthru
      _
    // Predicated region
    $region30: #{vae_forward.1} parent=1 // pred_check
      _
    $region31: #{vae_forward.1} parent=1 // pred_check_branch
      %45 = sbr.rel (0) target = $region33
    $region32: #{vae_forward.1} parent=1 // pred_region
      _
    $region33: #{vae_forward.1} parent=1 // pred_fallthru
      _
    // Predicated region
    $region34: #{vae_forward.1} parent=1 // pred_check
      _
    $region35: #{vae_forward.1} parent=1 // pred_check_branch
      %47 = sbr.rel (0) target = $region37
    $region36: #{vae_forward.1} parent=1 // pred_region
      %s49 = ssub.s32 28672, 28672
      %50 = vsyncadd [#allocation6], %s49
      %s51 = sshll.u32 [#allocation5], 4
      %s52 = int_to_ptr.vmem [resolvable:$true] %s51
      %57 = dma.hbm_to_vmem [thread:$0]  %s8, 28672, %s52, [#allocation6], 448, 448, 28
    $region37: #{vae_forward.1} parent=1 // pred_fallthru
      _
    // Predicated region
    $region38: #{vae_forward.1} parent=1 // pred_check
      _
    $region39: #{vae_forward.1} parent=1 // pred_check_branch
      %59 = sbr.rel (0) target = $region41
    $region40: #{vae_forward.1} parent=1 // pred_region
      _
    $region41: #{vae_forward.1} parent=1 // pred_fallthru
      _
    // Predicated region
    $region42: #{vae_forward.1} parent=1 // pred_check
      _
    $region43: #{vae_forward.1} parent=1 // pred_check_branch
      %61 = sbr.rel (0) target = $region45
    $region44: #{vae_forward.1} parent=1 // pred_region
      %62 = dma.done [#allocation3], 25088
    $region45: #{vae_forward.1} parent=1 // pred_fallthru
      _
    // Predicated region
    $region46: #{vae_forward.1} parent=1 // pred_check
      _
    $region47: #{vae_forward.1} parent=1 // pred_check_branch
      %64 = sbr.rel (0) target = $region49
    $region48: #{vae_forward.1} parent=1 // pred_region
      %65 = dma.done [#allocation6], 28672
    $region49: #{vae_forward.1} parent=1 // pred_fallthru
      _
    %v67 = vld [vmem:[%s0] sm:$0xff]
    %v68 = vld [vmem:[%s0 + $0x8] sm:$0xff]
    %v69 = vld [vmem:[%s0 + $0x10] sm:$0xff]
    %v70 = vld [vmem:[%s0 + $0x18] sm:$0xf]
    %v71 = vld [vmem:[#allocation2] sm:$0xff]
    %v72 = vld [vmem:[#allocation2 + $0x8] sm:$0xff]
    %v73 = vld [vmem:[#allocation2 + $0x10] sm:$0xff]
    %v74 = vld [vmem:[#allocation2 + $0x18] sm:$0xff]
    %v75 = vld [vmem:[#allocation2 + $0x20] sm:$0xff]
    %v76 = vld [vmem:[#allocation2 + $0x28] sm:$0xff]
    %v77 = vld [vmem:[#allocation2 + $0x30] sm:$0xff]
    %v78 = vld [vmem:[#allocation2 + $0x38] sm:$0xff]
    %v79 = vld [vmem:[#allocation2 + $0x40] sm:$0xff]
    %v80 = vld [vmem:[#allocation2 + $0x48] sm:$0xff]
    %v81 = vld [vmem:[#allocation2 + $0x50] sm:$0xff]
    %v82 = vld [vmem:[#allocation2 + $0x58] sm:$0xff]
    %v83 = vld [vmem:[#allocation2 + $0x60] sm:$0xff]
    %v84 = vld [vmem:[#allocation2 + $0x68] sm:$0xff]
    %v85 = vld [vmem:[#allocation2 + $0x70] sm:$0xff]
    %v86 = vld [vmem:[#allocation2 + $0x78] sm:$0xff]
    %v87 = vld [vmem:[#allocation2 + $0x80] sm:$0xff]
    %v88 = vld [vmem:[#allocation2 + $0x88] sm:$0xff]
    %v89 = vld [vmem:[#allocation2 + $0x90] sm:$0xff]
    %v90 = vld [vmem:[#allocation2 + $0x98] sm:$0xff]
    %v91 = vld [vmem:[#allocation2 + $0xa0] sm:$0xff]
    %v92 = vld [vmem:[#allocation2 + $0xa8] sm:$0xff]
    %v93 = vld [vmem:[#allocation2 + $0xb0] sm:$0xff]
    %v94 = vld [vmem:[#allocation2 + $0xb8] sm:$0xff]
    %v95 = vld [vmem:[#allocation2 + $0xc0] sm:$0xff]
    %v96 = vld [vmem:[#allocation2 + $0xc8] sm:$0xff]
    %v97 = vld [vmem:[#allocation2 + $0xd0] sm:$0xff]
    %v98 = vld [vmem:[#allocation2 + $0xd8] sm:$0xff]
    %v99 = vld [vmem:[#allocation2 + $0xe0] sm:$0xff]
    %v100 = vld [vmem:[#allocation2 + $0xe8] sm:$0xff]
    %v101 = vld [vmem:[#allocation2 + $0xf0] sm:$0xff]
    %v102 = vld [vmem:[#allocation2 + $0xf8] sm:$0xff]
    %v103 = vld [vmem:[#allocation2 + $0x100] sm:$0xff]
    %v104 = vld [vmem:[#allocation2 + $0x108] sm:$0xff]
    %v105 = vld [vmem:[#allocation2 + $0x110] sm:$0xff]
    %v106 = vld [vmem:[#allocation2 + $0x118] sm:$0xff]
    %v107 = vld [vmem:[#allocation2 + $0x120] sm:$0xff]
    %v108 = vld [vmem:[#allocation2 + $0x128] sm:$0xff]
    %v109 = vld [vmem:[#allocation2 + $0x130] sm:$0xff]
    %v110 = vld [vmem:[#allocation2 + $0x138] sm:$0xff]
    %v111 = vld [vmem:[#allocation2 + $0x140] sm:$0xff]
    %v112 = vld [vmem:[#allocation2 + $0x148] sm:$0xff]
    %v113 = vld [vmem:[#allocation2 + $0x150] sm:$0xff]
    %v114 = vld [vmem:[#allocation2 + $0x158] sm:$0xff]
    %v115 = vld [vmem:[#allocation2 + $0x160] sm:$0xff]
    %v116 = vld [vmem:[#allocation2 + $0x168] sm:$0xff]
    %v117 = vld [vmem:[#allocation2 + $0x170] sm:$0xff]
    %v118 = vld [vmem:[#allocation2 + $0x178] sm:$0xff]
    %v119 = vld [vmem:[#allocation2 + $0x180] sm:$0xff]
    %v120 = vld [vmem:[#allocation2 + $0x188] sm:$0xff]
    %v121 = vld [vmem:[#allocation2 + $0x190] sm:$0xff]
    %v122 = vld [vmem:[#allocation2 + $0x198] sm:$0xff]
    %v123 = vld [vmem:[#allocation2 + $0x1a0] sm:$0xff]
    %v124 = vld [vmem:[#allocation2 + $0x1a8] sm:$0xff]
    %v125 = vld [vmem:[#allocation2 + $0x1b0] sm:$0xff]
    %v126 = vld [vmem:[#allocation2 + $0x1b8] sm:$0xff]
    %v127 = vld [vmem:[#allocation2 + $0x1c0] sm:$0xff]
    %v128 = vld [vmem:[#allocation2 + $0x1c8] sm:$0xff]
    %v129 = vld [vmem:[#allocation2 + $0x1d0] sm:$0xff]
    %v130 = vld [vmem:[#allocation2 + $0x1d8] sm:$0xff]
    %v131 = vld [vmem:[#allocation2 + $0x1e0] sm:$0xff]
    %v132 = vld [vmem:[#allocation2 + $0x1e8] sm:$0xff]
    %v133 = vld [vmem:[#allocation2 + $0x1f0] sm:$0xff]
    %v134 = vld [vmem:[#allocation2 + $0x1f8] sm:$0xff]
    %v135 = vld [vmem:[#allocation2 + $0x200] sm:$0xff]
    %v136 = vld [vmem:[#allocation2 + $0x208] sm:$0xff]
    %v137 = vld [vmem:[#allocation2 + $0x210] sm:$0xff]
    %v138 = vld [vmem:[#allocation2 + $0x218] sm:$0xff]
    %v139 = vld [vmem:[#allocation2 + $0x220] sm:$0xff]
    %v140 = vld [vmem:[#allocation2 + $0x228] sm:$0xff]
    %v141 = vld [vmem:[#allocation2 + $0x230] sm:$0xff]
    %v142 = vld [vmem:[#allocation2 + $0x238] sm:$0xff]
    %v143 = vld [vmem:[#allocation2 + $0x240] sm:$0xff]
    %v144 = vld [vmem:[#allocation2 + $0x248] sm:$0xff]
    %v145 = vld [vmem:[#allocation2 + $0x250] sm:$0xff]
    %v146 = vld [vmem:[#allocation2 + $0x258] sm:$0xff]
    %v147 = vld [vmem:[#allocation2 + $0x260] sm:$0xff]
    %v148 = vld [vmem:[#allocation2 + $0x268] sm:$0xff]
    %v149 = vld [vmem:[#allocation2 + $0x270] sm:$0xff]
    %v150 = vld [vmem:[#allocation2 + $0x278] sm:$0xff]
    %v151 = vld [vmem:[#allocation2 + $0x280] sm:$0xff]
    %v152 = vld [vmem:[#allocation2 + $0x288] sm:$0xff]
    %v153 = vld [vmem:[#allocation2 + $0x290] sm:$0xff]
    %v154 = vld [vmem:[#allocation2 + $0x298] sm:$0xff]
    %v155 = vld [vmem:[#allocation2 + $0x2a0] sm:$0xff]
    %v156 = vld [vmem:[#allocation2 + $0x2a8] sm:$0xff]
    %v157 = vld [vmem:[#allocation2 + $0x2b0] sm:$0xff]
    %v158 = vld [vmem:[#allocation2 + $0x2b8] sm:$0xff]
    %v159 = vld [vmem:[#allocation2 + $0x2c0] sm:$0xff]
    %v160 = vld [vmem:[#allocation2 + $0x2c8] sm:$0xff]
    %v161 = vld [vmem:[#allocation2 + $0x2d0] sm:$0xff]
    %v162 = vld [vmem:[#allocation2 + $0x2d8] sm:$0xff]
    %v163 = vld [vmem:[#allocation2 + $0x2e0] sm:$0xff]
    %v164 = vld [vmem:[#allocation2 + $0x2e8] sm:$0xff]
    %v165 = vld [vmem:[#allocation2 + $0x2f0] sm:$0xff]
    %v166 = vld [vmem:[#allocation2 + $0x2f8] sm:$0xff]
    %v167 = vld [vmem:[#allocation2 + $0x300] sm:$0xff]
    %v168 = vld [vmem:[#allocation2 + $0x308] sm:$0xff]
    %v169 = vld [vmem:[#allocation2 + $0x310] sm:$0xff]
    %v170 = vld [vmem:[#allocation2 + $0x318] sm:$0xff]
    %v171 = vld [vmem:[#allocation2 + $0x320] sm:$0xff]
    %v172 = vld [vmem:[#allocation2 + $0x328] sm:$0xff]
    %v173 = vld [vmem:[#allocation2 + $0x330] sm:$0xff]
    %v174 = vld [vmem:[#allocation2 + $0x338] sm:$0xff]
    %v175 = vld [vmem:[#allocation2 + $0x340] sm:$0xff]
    %v176 = vld [vmem:[#allocation2 + $0x348] sm:$0xff]
    %v177 = vld [vmem:[#allocation2 + $0x350] sm:$0xff]
    %v178 = vld [vmem:[#allocation2 + $0x358] sm:$0xff]
    %v179 = vld [vmem:[#allocation2 + $0x360] sm:$0xff]
    %v180 = vld [vmem:[#allocation2 + $0x368] sm:$0xff]
    %v181 = vld [vmem:[#allocation2 + $0x370] sm:$0xff]
    %v182 = vld [vmem:[#allocation2 + $0x378] sm:$0xff]
    %v183 = vld [vmem:[#allocation2 + $0x380] sm:$0xff]
    %v184 = vld [vmem:[#allocation2 + $0x388] sm:$0xff]
    %v185 = vld [vmem:[#allocation2 + $0x390] sm:$0xff]
    %v186 = vld [vmem:[#allocation2 + $0x398] sm:$0xff]
    %v187 = vld [vmem:[#allocation2 + $0x3a0] sm:$0xff]
    %v188 = vld [vmem:[#allocation2 + $0x3a8] sm:$0xff]
    %v189 = vld [vmem:[#allocation2 + $0x3b0] sm:$0xff]
    %v190 = vld [vmem:[#allocation2 + $0x3b8] sm:$0xff]
    %v191 = vld [vmem:[#allocation2 + $0x3c0] sm:$0xff]
    %v192 = vld [vmem:[#allocation2 + $0x3c8] sm:$0xff]
    %v193 = vld [vmem:[#allocation2 + $0x3d0] sm:$0xff]
    %v194 = vld [vmem:[#allocation2 + $0x3d8] sm:$0xff]
    %v195 = vld [vmem:[#allocation2 + $0x3e0] sm:$0xff]
    %v196 = vld [vmem:[#allocation2 + $0x3e8] sm:$0xff]
    %v197 = vld [vmem:[#allocation2 + $0x3f0] sm:$0xff]
    %v198 = vld [vmem:[#allocation2 + $0x3f8] sm:$0xff]
    %v199 = vld [vmem:[#allocation2 + $0x400] sm:$0xff]
    %v200 = vld [vmem:[#allocation2 + $0x408] sm:$0xff]
    %v201 = vld [vmem:[#allocation2 + $0x410] sm:$0xff]
    %v202 = vld [vmem:[#allocation2 + $0x418] sm:$0xff]
    %v203 = vld [vmem:[#allocation2 + $0x420] sm:$0xff]
    %v204 = vld [vmem:[#allocation2 + $0x428] sm:$0xff]
    %v205 = vld [vmem:[#allocation2 + $0x430] sm:$0xff]
    %v206 = vld [vmem:[#allocation2 + $0x438] sm:$0xff]
    %v207 = vld [vmem:[#allocation2 + $0x440] sm:$0xff]
    %v208 = vld [vmem:[#allocation2 + $0x448] sm:$0xff]
    %v209 = vld [vmem:[#allocation2 + $0x450] sm:$0xff]
    %v210 = vld [vmem:[#allocation2 + $0x458] sm:$0xff]
    %v211 = vld [vmem:[#allocation2 + $0x460] sm:$0xff]
    %v212 = vld [vmem:[#allocation2 + $0x468] sm:$0xff]
    %v213 = vld [vmem:[#allocation2 + $0x470] sm:$0xff]
    %v214 = vld [vmem:[#allocation2 + $0x478] sm:$0xff]
    %v215 = vld [vmem:[#allocation2 + $0x480] sm:$0xff]
    %v216 = vld [vmem:[#allocation2 + $0x488] sm:$0xff]
    %v217 = vld [vmem:[#allocation2 + $0x490] sm:$0xff]
    %v218 = vld [vmem:[#allocation2 + $0x498] sm:$0xff]
    %v219 = vld [vmem:[#allocation2 + $0x4a0] sm:$0xff]
    %v220 = vld [vmem:[#allocation2 + $0x4a8] sm:$0xff]
    %v221 = vld [vmem:[#allocation2 + $0x4b0] sm:$0xff]
    %v222 = vld [vmem:[#allocation2 + $0x4b8] sm:$0xff]
    %v223 = vld [vmem:[#allocation2 + $0x4c0] sm:$0xff]
    %v224 = vld [vmem:[#allocation2 + $0x4c8] sm:$0xff]
    %v225 = vld [vmem:[#allocation2 + $0x4d0] sm:$0xff]
    %v226 = vld [vmem:[#allocation2 + $0x4d8] sm:$0xff]
    %v227 = vld [vmem:[#allocation2 + $0x4e0] sm:$0xff]
    %v228 = vld [vmem:[#allocation2 + $0x4e8] sm:$0xff]
    %v229 = vld [vmem:[#allocation2 + $0x4f0] sm:$0xff]
    %v230 = vld [vmem:[#allocation2 + $0x4f8] sm:$0xff]
    %v231 = vld [vmem:[#allocation2 + $0x500] sm:$0xff]
    %v232 = vld [vmem:[#allocation2 + $0x508] sm:$0xff]
    %v233 = vld [vmem:[#allocation2 + $0x510] sm:$0xff]
    %v234 = vld [vmem:[#allocation2 + $0x518] sm:$0xff]
    %v235 = vld [vmem:[#allocation2 + $0x520] sm:$0xff]
    %v236 = vld [vmem:[#allocation2 + $0x528] sm:$0xff]
    %v237 = vld [vmem:[#allocation2 + $0x530] sm:$0xff]
    %v238 = vld [vmem:[#allocation2 + $0x538] sm:$0xff]
    %v239 = vld [vmem:[#allocation2 + $0x540] sm:$0xff]
    %v240 = vld [vmem:[#allocation2 + $0x548] sm:$0xff]
    %v241 = vld [vmem:[#allocation2 + $0x550] sm:$0xff]
    %v242 = vld [vmem:[#allocation2 + $0x558] sm:$0xff]
    %v243 = vld [vmem:[#allocation2 + $0x560] sm:$0xff]
    %v244 = vld [vmem:[#allocation2 + $0x568] sm:$0xff]
    %v245 = vld [vmem:[#allocation2 + $0x570] sm:$0xff]
    %v246 = vld [vmem:[#allocation2 + $0x578] sm:$0xff]
    %v247 = vld [vmem:[#allocation2 + $0x580] sm:$0xff]
    %v248 = vld [vmem:[#allocation2 + $0x588] sm:$0xff]
    %v249 = vld [vmem:[#allocation2 + $0x590] sm:$0xff]
    %v250 = vld [vmem:[#allocation2 + $0x598] sm:$0xff]
    %v251 = vld [vmem:[#allocation2 + $0x5a0] sm:$0xff]
    %v252 = vld [vmem:[#allocation2 + $0x5a8] sm:$0xff]
    %v253 = vld [vmem:[#allocation2 + $0x5b0] sm:$0xff]
    %v254 = vld [vmem:[#allocation2 + $0x5b8] sm:$0xff]
    %v255 = vld [vmem:[#allocation2 + $0x5c0] sm:$0xff]
    %v256 = vld [vmem:[#allocation2 + $0x5c8] sm:$0xff]
    %v257 = vld [vmem:[#allocation2 + $0x5d0] sm:$0xff]
    %v258 = vld [vmem:[#allocation2 + $0x5d8] sm:$0xff]
    %v259 = vld [vmem:[#allocation2 + $0x5e0] sm:$0xff]
    %v260 = vld [vmem:[#allocation2 + $0x5e8] sm:$0xff]
    %v261 = vld [vmem:[#allocation2 + $0x5f0] sm:$0xff]
    %v262 = vld [vmem:[#allocation2 + $0x5f8] sm:$0xff]
    %v263 = vld [vmem:[#allocation2 + $0x600] sm:$0xff]
    %v264 = vld [vmem:[#allocation2 + $0x608] sm:$0xff]
    %v265 = vld [vmem:[#allocation2 + $0x610] sm:$0xff]
    %v266 = vld [vmem:[#allocation2 + $0x618] sm:$0xff]
    %v267 = vld [vmem:[%s3] sm:$0xf]
    %v269 = vlaneseq
    %v270 = vshrl.u32 %v269, 7
    %v271 = vsub.s32 0, %v270
    %v272 = vrot.slane %v267, %v271
    %v273 = vlaneseq
    %v274 = vshrl.u32 %v273, 7
    %v275 = vsub.s32 1, %v274
    %v276 = vrot.slane %v267, %v275
    %v277 = vlaneseq
    %v278 = vshrl.u32 %v277, 7
    %v279 = vsub.s32 2, %v278
    %v280 = vrot.slane %v267, %v279
    %v281 = vlaneseq
    %v282 = vshrl.u32 %v281, 7
    %v283 = vsub.s32 3, %v282
    %v284 = vrot.slane %v267, %v283
    %v293 = vunpack.c.l.b16 %v67
    %v294 = vunpack.c.h.b16 %v67
    %v295 = vunpack.c.l.b16 %v68
    %v296 = vunpack.c.h.b16 %v68
    %v297 = vunpack.c.l.b16 %v69
    %v298 = vunpack.c.h.b16 %v69
    %v299 = vunpack.c.l.b16 %v70
    %v300 = vpack.c.b16 %v293, %v293
    %v301 = vpack.c.b16 %v294, %v294
    %v302 = vpack.c.b16 %v295, %v295
    %v303 = vpack.c.b16 %v296, %v296
    %v304 = vpack.c.b16 %v297, %v297
    %v305 = vpack.c.b16 %v298, %v298
    %v306 = vpack.c.b16 %v299, %v299
    %v509 = vunpack.c.l.b16 %v71
    %v510 = vunpack.c.h.b16 %v71
    %v511 = vunpack.c.l.b16 %v72
    %v512 = vunpack.c.h.b16 %v72
    %v513 = vunpack.c.l.b16 %v73
    %v514 = vunpack.c.h.b16 %v73
    %v515 = vunpack.c.l.b16 %v74
    %v516 = vunpack.c.h.b16 %v74
    %v517 = vunpack.c.l.b16 %v75
    %v518 = vunpack.c.h.b16 %v75
    %v519 = vunpack.c.l.b16 %v76
    %v520 = vunpack.c.h.b16 %v76
    %v521 = vunpack.c.l.b16 %v77
    %v522 = vunpack.c.h.b16 %v77
    %v523 = vunpack.c.l.b16 %v78
    %v524 = vunpack.c.h.b16 %v78
    %v525 = vunpack.c.l.b16 %v79
    %v526 = vunpack.c.h.b16 %v79
    %v527 = vunpack.c.l.b16 %v80
    %v528 = vunpack.c.h.b16 %v80
    %v529 = vunpack.c.l.b16 %v81
    %v530 = vunpack.c.h.b16 %v81
    %v531 = vunpack.c.l.b16 %v82
    %v532 = vunpack.c.h.b16 %v82
    %v533 = vunpack.c.l.b16 %v83
    %v534 = vunpack.c.h.b16 %v83
    %v535 = vunpack.c.l.b16 %v84
    %v536 = vunpack.c.h.b16 %v84
    %v537 = vunpack.c.l.b16 %v85
    %v538 = vunpack.c.h.b16 %v85
    %v539 = vunpack.c.l.b16 %v86
    %v540 = vunpack.c.h.b16 %v86
    %v541 = vunpack.c.l.b16 %v87
    %v542 = vunpack.c.h.b16 %v87
    %v543 = vunpack.c.l.b16 %v88
    %v544 = vunpack.c.h.b16 %v88
    %v545 = vunpack.c.l.b16 %v89
    %v546 = vunpack.c.h.b16 %v89
    %v547 = vunpack.c.l.b16 %v90
    %v548 = vunpack.c.h.b16 %v90
    %v549 = vunpack.c.l.b16 %v91
    %v550 = vunpack.c.h.b16 %v91
    %v551 = vunpack.c.l.b16 %v92
    %v552 = vunpack.c.h.b16 %v92
    %v553 = vunpack.c.l.b16 %v93
    %v554 = vunpack.c.h.b16 %v93
    %v555 = vunpack.c.l.b16 %v94
    %v556 = vunpack.c.h.b16 %v94
    %v557 = vunpack.c.l.b16 %v95
    %v558 = vunpack.c.h.b16 %v95
    %v559 = vunpack.c.l.b16 %v96
    %v560 = vunpack.c.h.b16 %v96
    %v561 = vunpack.c.l.b16 %v97
    %v562 = vunpack.c.h.b16 %v97
    %v563 = vunpack.c.l.b16 %v98
    %v564 = vunpack.c.h.b16 %v98
    %v565 = vunpack.c.l.b16 %v99
    %v566 = vunpack.c.h.b16 %v99
    %v567 = vunpack.c.l.b16 %v100
    %v568 = vunpack.c.h.b16 %v100
    %v569 = vunpack.c.l.b16 %v101
    %v570 = vunpack.c.h.b16 %v101
    %v571 = vunpack.c.l.b16 %v102
    %v572 = vunpack.c.h.b16 %v102
    %v573 = vunpack.c.l.b16 %v103
    %v574 = vunpack.c.h.b16 %v103
    %v575 = vunpack.c.l.b16 %v104
    %v576 = vunpack.c.h.b16 %v104
    %v577 = vunpack.c.l.b16 %v105
    %v578 = vunpack.c.h.b16 %v105
    %v579 = vunpack.c.l.b16 %v106
    %v580 = vunpack.c.h.b16 %v106
    %v581 = vunpack.c.l.b16 %v107
    %v582 = vunpack.c.h.b16 %v107
    %v583 = vunpack.c.l.b16 %v108
    %v584 = vunpack.c.h.b16 %v108
    %v585 = vunpack.c.l.b16 %v109
    %v586 = vunpack.c.h.b16 %v109
    %v587 = vunpack.c.l.b16 %v110
    %v588 = vunpack.c.h.b16 %v110
    %v589 = vunpack.c.l.b16 %v111
    %v590 = vunpack.c.h.b16 %v111
    %v591 = vunpack.c.l.b16 %v112
    %v592 = vunpack.c.h.b16 %v112
    %v593 = vunpack.c.l.b16 %v113
    %v594 = vunpack.c.h.b16 %v113
    %v595 = vunpack.c.l.b16 %v114
    %v596 = vunpack.c.h.b16 %v114
    %v597 = vunpack.c.l.b16 %v115
    %v598 = vunpack.c.h.b16 %v115
    %v599 = vunpack.c.l.b16 %v116
    %v600 = vunpack.c.h.b16 %v116
    %v601 = vunpack.c.l.b16 %v117
    %v602 = vunpack.c.h.b16 %v117
    %v603 = vunpack.c.l.b16 %v118
    %v604 = vunpack.c.h.b16 %v118
    %v605 = vunpack.c.l.b16 %v119
    %v606 = vunpack.c.h.b16 %v119
    %v607 = vunpack.c.l.b16 %v120
    %v608 = vunpack.c.h.b16 %v120
    %v609 = vunpack.c.l.b16 %v121
    %v610 = vunpack.c.h.b16 %v121
    %v611 = vunpack.c.l.b16 %v122
    %v612 = vunpack.c.h.b16 %v122
    %v613 = vunpack.c.l.b16 %v123
    %v614 = vunpack.c.h.b16 %v123
    %v615 = vunpack.c.l.b16 %v124
    %v616 = vunpack.c.h.b16 %v124
    %v617 = vunpack.c.l.b16 %v125
    %v618 = vunpack.c.h.b16 %v125
    %v619 = vunpack.c.l.b16 %v126
    %v620 = vunpack.c.h.b16 %v126
    %v621 = vunpack.c.l.b16 %v127
    %v622 = vunpack.c.h.b16 %v127
    %v623 = vunpack.c.l.b16 %v128
    %v624 = vunpack.c.h.b16 %v128
    %v625 = vunpack.c.l.b16 %v129
    %v626 = vunpack.c.h.b16 %v129
    %v627 = vunpack.c.l.b16 %v130
    %v628 = vunpack.c.h.b16 %v130
    %v629 = vunpack.c.l.b16 %v131
    %v630 = vunpack.c.h.b16 %v131
    %v631 = vunpack.c.l.b16 %v132
    %v632 = vunpack.c.h.b16 %v132
    %v633 = vunpack.c.l.b16 %v133
    %v634 = vunpack.c.h.b16 %v133
    %v635 = vunpack.c.l.b16 %v134
    %v636 = vunpack.c.h.b16 %v134
    %v637 = vunpack.c.l.b16 %v135
    %v638 = vunpack.c.h.b16 %v135
    %v639 = vunpack.c.l.b16 %v136
    %v640 = vunpack.c.h.b16 %v136
    %v641 = vunpack.c.l.b16 %v137
    %v642 = vunpack.c.h.b16 %v137
    %v643 = vunpack.c.l.b16 %v138
    %v644 = vunpack.c.h.b16 %v138
    %v645 = vunpack.c.l.b16 %v139
    %v646 = vunpack.c.h.b16 %v139
    %v647 = vunpack.c.l.b16 %v140
    %v648 = vunpack.c.h.b16 %v140
    %v649 = vunpack.c.l.b16 %v141
    %v650 = vunpack.c.h.b16 %v141
    %v651 = vunpack.c.l.b16 %v142
    %v652 = vunpack.c.h.b16 %v142
    %v653 = vunpack.c.l.b16 %v143
    %v654 = vunpack.c.h.b16 %v143
    %v655 = vunpack.c.l.b16 %v144
    %v656 = vunpack.c.h.b16 %v144
    %v657 = vunpack.c.l.b16 %v145
    %v658 = vunpack.c.h.b16 %v145
    %v659 = vunpack.c.l.b16 %v146
    %v660 = vunpack.c.h.b16 %v146
    %v661 = vunpack.c.l.b16 %v147
    %v662 = vunpack.c.h.b16 %v147
    %v663 = vunpack.c.l.b16 %v148
    %v664 = vunpack.c.h.b16 %v148
    %v665 = vunpack.c.l.b16 %v149
    %v666 = vunpack.c.h.b16 %v149
    %v667 = vunpack.c.l.b16 %v150
    %v668 = vunpack.c.h.b16 %v150
    %v669 = vunpack.c.l.b16 %v151
    %v670 = vunpack.c.h.b16 %v151
    %v671 = vunpack.c.l.b16 %v152
    %v672 = vunpack.c.h.b16 %v152
    %v673 = vunpack.c.l.b16 %v153
    %v674 = vunpack.c.h.b16 %v153
    %v675 = vunpack.c.l.b16 %v154
    %v676 = vunpack.c.h.b16 %v154
    %v677 = vunpack.c.l.b16 %v155
    %v678 = vunpack.c.h.b16 %v155
    %v679 = vunpack.c.l.b16 %v156
    %v680 = vunpack.c.h.b16 %v156
    %v681 = vunpack.c.l.b16 %v157
    %v682 = vunpack.c.h.b16 %v157
    %v683 = vunpack.c.l.b16 %v158
    %v684 = vunpack.c.h.b16 %v158
    %v685 = vunpack.c.l.b16 %v159
    %v686 = vunpack.c.h.b16 %v159
    %v687 = vunpack.c.l.b16 %v160
    %v688 = vunpack.c.h.b16 %v160
    %v689 = vunpack.c.l.b16 %v161
    %v690 = vunpack.c.h.b16 %v161
    %v691 = vunpack.c.l.b16 %v162
    %v692 = vunpack.c.h.b16 %v162
    %v693 = vunpack.c.l.b16 %v163
    %v694 = vunpack.c.h.b16 %v163
    %v695 = vunpack.c.l.b16 %v164
    %v696 = vunpack.c.h.b16 %v164
    %v697 = vunpack.c.l.b16 %v165
    %v698 = vunpack.c.h.b16 %v165
    %v699 = vunpack.c.l.b16 %v166
    %v700 = vunpack.c.h.b16 %v166
    %v701 = vunpack.c.l.b16 %v167
    %v702 = vunpack.c.h.b16 %v167
    %v703 = vunpack.c.l.b16 %v168
    %v704 = vunpack.c.h.b16 %v168
    %v705 = vunpack.c.l.b16 %v169
    %v706 = vunpack.c.h.b16 %v169
    %v707 = vunpack.c.l.b16 %v170
    %v708 = vunpack.c.h.b16 %v170
    %v709 = vunpack.c.l.b16 %v171
    %v710 = vunpack.c.h.b16 %v171
    %v711 = vunpack.c.l.b16 %v172
    %v712 = vunpack.c.h.b16 %v172
    %v713 = vunpack.c.l.b16 %v173
    %v714 = vunpack.c.h.b16 %v173
    %v715 = vunpack.c.l.b16 %v174
    %v716 = vunpack.c.h.b16 %v174
    %v717 = vunpack.c.l.b16 %v175
    %v718 = vunpack.c.h.b16 %v175
    %v719 = vunpack.c.l.b16 %v176
    %v720 = vunpack.c.h.b16 %v176
    %v721 = vunpack.c.l.b16 %v177
    %v722 = vunpack.c.h.b16 %v177
    %v723 = vunpack.c.l.b16 %v178
    %v724 = vunpack.c.h.b16 %v178
    %v725 = vunpack.c.l.b16 %v179
    %v726 = vunpack.c.h.b16 %v179
    %v727 = vunpack.c.l.b16 %v180
    %v728 = vunpack.c.h.b16 %v180
    %v729 = vunpack.c.l.b16 %v181
    %v730 = vunpack.c.h.b16 %v181
    %v731 = vunpack.c.l.b16 %v182
    %v732 = vunpack.c.h.b16 %v182
    %v733 = vunpack.c.l.b16 %v183
    %v734 = vunpack.c.h.b16 %v183
    %v735 = vunpack.c.l.b16 %v184
    %v736 = vunpack.c.h.b16 %v184
    %v737 = vunpack.c.l.b16 %v185
    %v738 = vunpack.c.h.b16 %v185
    %v739 = vunpack.c.l.b16 %v186
    %v740 = vunpack.c.h.b16 %v186
    %v741 = vunpack.c.l.b16 %v187
    %v742 = vunpack.c.h.b16 %v187
    %v743 = vunpack.c.l.b16 %v188
    %v744 = vunpack.c.h.b16 %v188
    %v745 = vunpack.c.l.b16 %v189
    %v746 = vunpack.c.h.b16 %v189
    %v747 = vunpack.c.l.b16 %v190
    %v748 = vunpack.c.h.b16 %v190
    %v749 = vunpack.c.l.b16 %v191
    %v750 = vunpack.c.h.b16 %v191
    %v751 = vunpack.c.l.b16 %v192
    %v752 = vunpack.c.h.b16 %v192
    %v753 = vunpack.c.l.b16 %v193
    %v754 = vunpack.c.h.b16 %v193
    %v755 = vunpack.c.l.b16 %v194
    %v756 = vunpack.c.h.b16 %v194
    %v757 = vunpack.c.l.b16 %v195
    %v758 = vunpack.c.h.b16 %v195
    %v759 = vunpack.c.l.b16 %v196
    %v760 = vunpack.c.h.b16 %v196
    %v761 = vunpack.c.l.b16 %v197
    %v762 = vunpack.c.h.b16 %v197
    %v763 = vunpack.c.l.b16 %v198
    %v764 = vunpack.c.h.b16 %v198
    %v765 = vunpack.c.l.b16 %v199
    %v766 = vunpack.c.h.b16 %v199
    %v767 = vunpack.c.l.b16 %v200
    %v768 = vunpack.c.h.b16 %v200
    %v769 = vunpack.c.l.b16 %v201
    %v770 = vunpack.c.h.b16 %v201
    %v771 = vunpack.c.l.b16 %v202
    %v772 = vunpack.c.h.b16 %v202
    %v773 = vunpack.c.l.b16 %v203
    %v774 = vunpack.c.h.b16 %v203
    %v775 = vunpack.c.l.b16 %v204
    %v776 = vunpack.c.h.b16 %v204
    %v777 = vunpack.c.l.b16 %v205
    %v778 = vunpack.c.h.b16 %v205
    %v779 = vunpack.c.l.b16 %v206
    %v780 = vunpack.c.h.b16 %v206
    %v781 = vunpack.c.l.b16 %v207
    %v782 = vunpack.c.h.b16 %v207
    %v783 = vunpack.c.l.b16 %v208
    %v784 = vunpack.c.h.b16 %v208
    %v785 = vunpack.c.l.b16 %v209
    %v786 = vunpack.c.h.b16 %v209
    %v787 = vunpack.c.l.b16 %v210
    %v788 = vunpack.c.h.b16 %v210
    %v789 = vunpack.c.l.b16 %v211
    %v790 = vunpack.c.h.b16 %v211
    %v791 = vunpack.c.l.b16 %v212
    %v792 = vunpack.c.h.b16 %v212
    %v793 = vunpack.c.l.b16 %v213
    %v794 = vunpack.c.h.b16 %v213
    %v795 = vunpack.c.l.b16 %v214
    %v796 = vunpack.c.h.b16 %v214
    %v797 = vunpack.c.l.b16 %v215
    %v798 = vunpack.c.h.b16 %v215
    %v799 = vunpack.c.l.b16 %v216
    %v800 = vunpack.c.h.b16 %v216
    %v801 = vunpack.c.l.b16 %v217
    %v802 = vunpack.c.h.b16 %v217
    %v803 = vunpack.c.l.b16 %v218
    %v804 = vunpack.c.h.b16 %v218
    %v805 = vunpack.c.l.b16 %v219
    %v806 = vunpack.c.h.b16 %v219
    %v807 = vunpack.c.l.b16 %v220
    %v808 = vunpack.c.h.b16 %v220
    %v809 = vunpack.c.l.b16 %v221
    %v810 = vunpack.c.h.b16 %v221
    %v811 = vunpack.c.l.b16 %v222
    %v812 = vunpack.c.h.b16 %v222
    %v813 = vunpack.c.l.b16 %v223
    %v814 = vunpack.c.h.b16 %v223
    %v815 = vunpack.c.l.b16 %v224
    %v816 = vunpack.c.h.b16 %v224
    %v817 = vunpack.c.l.b16 %v225
    %v818 = vunpack.c.h.b16 %v225
    %v819 = vunpack.c.l.b16 %v226
    %v820 = vunpack.c.h.b16 %v226
    %v821 = vunpack.c.l.b16 %v227
    %v822 = vunpack.c.h.b16 %v227
    %v823 = vunpack.c.l.b16 %v228
    %v824 = vunpack.c.h.b16 %v228
    %v825 = vunpack.c.l.b16 %v229
    %v826 = vunpack.c.h.b16 %v229
    %v827 = vunpack.c.l.b16 %v230
    %v828 = vunpack.c.h.b16 %v230
    %v829 = vunpack.c.l.b16 %v231
    %v830 = vunpack.c.h.b16 %v231
    %v831 = vunpack.c.l.b16 %v232
    %v832 = vunpack.c.h.b16 %v232
    %v833 = vunpack.c.l.b16 %v233
    %v834 = vunpack.c.h.b16 %v233
    %v835 = vunpack.c.l.b16 %v234
    %v836 = vunpack.c.h.b16 %v234
    %v837 = vunpack.c.l.b16 %v235
    %v838 = vunpack.c.h.b16 %v235
    %v839 = vunpack.c.l.b16 %v236
    %v840 = vunpack.c.h.b16 %v236
    %v841 = vunpack.c.l.b16 %v237
    %v842 = vunpack.c.h.b16 %v237
    %v843 = vunpack.c.l.b16 %v238
    %v844 = vunpack.c.h.b16 %v238
    %v845 = vunpack.c.l.b16 %v239
    %v846 = vunpack.c.h.b16 %v239
    %v847 = vunpack.c.l.b16 %v240
    %v848 = vunpack.c.h.b16 %v240
    %v849 = vunpack.c.l.b16 %v241
    %v850 = vunpack.c.h.b16 %v241
    %v851 = vunpack.c.l.b16 %v242
    %v852 = vunpack.c.h.b16 %v242
    %v853 = vunpack.c.l.b16 %v243
    %v854 = vunpack.c.h.b16 %v243
    %v855 = vunpack.c.l.b16 %v244
    %v856 = vunpack.c.h.b16 %v244
    %v857 = vunpack.c.l.b16 %v245
    %v858 = vunpack.c.h.b16 %v245
    %v859 = vunpack.c.l.b16 %v246
    %v860 = vunpack.c.h.b16 %v246
    %v861 = vunpack.c.l.b16 %v247
    %v862 = vunpack.c.h.b16 %v247
    %v863 = vunpack.c.l.b16 %v248
    %v864 = vunpack.c.h.b16 %v248
    %v865 = vunpack.c.l.b16 %v249
    %v866 = vunpack.c.h.b16 %v249
    %v867 = vunpack.c.l.b16 %v250
    %v868 = vunpack.c.h.b16 %v250
    %v869 = vunpack.c.l.b16 %v251
    %v870 = vunpack.c.h.b16 %v251
    %v871 = vunpack.c.l.b16 %v252
    %v872 = vunpack.c.h.b16 %v252
    %v873 = vunpack.c.l.b16 %v253
    %v874 = vunpack.c.h.b16 %v253
    %v875 = vunpack.c.l.b16 %v254
    %v876 = vunpack.c.h.b16 %v254
    %v877 = vunpack.c.l.b16 %v255
    %v878 = vunpack.c.h.b16 %v255
    %v879 = vunpack.c.l.b16 %v256
    %v880 = vunpack.c.h.b16 %v256
    %v881 = vunpack.c.l.b16 %v257
    %v882 = vunpack.c.h.b16 %v257
    %v883 = vunpack.c.l.b16 %v258
    %v884 = vunpack.c.h.b16 %v258
    %v885 = vunpack.c.l.b16 %v259
    %v886 = vunpack.c.h.b16 %v259
    %v887 = vunpack.c.l.b16 %v260
    %v888 = vunpack.c.h.b16 %v260
    %v889 = vunpack.c.l.b16 %v261
    %v890 = vunpack.c.h.b16 %v261
    %v891 = vunpack.c.l.b16 %v262
    %v892 = vunpack.c.h.b16 %v262
    %v893 = vunpack.c.l.b16 %v263
    %v894 = vunpack.c.h.b16 %v263
    %v895 = vunpack.c.l.b16 %v264
    %v896 = vunpack.c.h.b16 %v264
    %v897 = vunpack.c.l.b16 %v265
    %v898 = vunpack.c.h.b16 %v265
    %v899 = vunpack.c.l.b16 %v266
    %v900 = vunpack.c.h.b16 %v266
    %v901 = vpack.c.b16 %v513, %v509
    %v902 = vpack.c.b16 %v514, %v510
    %v903 = vpack.c.b16 %v515, %v511
    %v904 = vpack.c.b16 %v516, %v512
    %v905 = vpack.c.b16 %v521, %v517
    %v906 = vpack.c.b16 %v522, %v518
    %v907 = vpack.c.b16 %v523, %v519
    %v908 = vpack.c.b16 %v524, %v520
    %v909 = vpack.c.b16 %v529, %v525
    %v910 = vpack.c.b16 %v530, %v526
    %v911 = vpack.c.b16 %v531, %v527
    %v912 = vpack.c.b16 %v532, %v528
    %v913 = vpack.c.b16 %v537, %v533
    %v914 = vpack.c.b16 %v538, %v534
    %v915 = vpack.c.b16 %v539, %v535
    %v916 = vpack.c.b16 %v540, %v536
    %v917 = vpack.c.b16 %v545, %v541
    %v918 = vpack.c.b16 %v546, %v542
    %v919 = vpack.c.b16 %v547, %v543
    %v920 = vpack.c.b16 %v548, %v544
    %v921 = vpack.c.b16 %v553, %v549
    %v922 = vpack.c.b16 %v554, %v550
    %v923 = vpack.c.b16 %v555, %v551
    %v924 = vpack.c.b16 %v556, %v552
    %v925 = vpack.c.b16 %v561, %v557
    %v926 = vpack.c.b16 %v562, %v558
    %v927 = vpack.c.b16 %v563, %v559
    %v928 = vpack.c.b16 %v564, %v560
    %v929 = vpack.c.b16 %v569, %v565
    %v930 = vpack.c.b16 %v570, %v566
    %v931 = vpack.c.b16 %v571, %v567
    %v932 = vpack.c.b16 %v572, %v568
    %v933 = vpack.c.b16 %v577, %v573
    %v934 = vpack.c.b16 %v578, %v574
    %v935 = vpack.c.b16 %v579, %v575
    %v936 = vpack.c.b16 %v580, %v576
    %v937 = vpack.c.b16 %v585, %v581
    %v938 = vpack.c.b16 %v586, %v582
    %v939 = vpack.c.b16 %v587, %v583
    %v940 = vpack.c.b16 %v588, %v584
    %v941 = vpack.c.b16 %v593, %v589
    %v942 = vpack.c.b16 %v594, %v590
    %v943 = vpack.c.b16 %v595, %v591
    %v944 = vpack.c.b16 %v596, %v592
    %v945 = vpack.c.b16 %v601, %v597
    %v946 = vpack.c.b16 %v602, %v598
    %v947 = vpack.c.b16 %v603, %v599
    %v948 = vpack.c.b16 %v604, %v600
    %v949 = vpack.c.b16 %v609, %v605
    %v950 = vpack.c.b16 %v610, %v606
    %v951 = vpack.c.b16 %v611, %v607
    %v952 = vpack.c.b16 %v612, %v608
    %v953 = vpack.c.b16 %v617, %v613
    %v954 = vpack.c.b16 %v618, %v614
    %v955 = vpack.c.b16 %v619, %v615
    %v956 = vpack.c.b16 %v620, %v616
    %v957 = vpack.c.b16 %v625, %v621
    %v958 = vpack.c.b16 %v626, %v622
    %v959 = vpack.c.b16 %v627, %v623
    %v960 = vpack.c.b16 %v628, %v624
    %v961 = vpack.c.b16 %v633, %v629
    %v962 = vpack.c.b16 %v634, %v630
    %v963 = vpack.c.b16 %v635, %v631
    %v964 = vpack.c.b16 %v636, %v632
    %v965 = vpack.c.b16 %v641, %v637
    %v966 = vpack.c.b16 %v642, %v638
    %v967 = vpack.c.b16 %v643, %v639
    %v968 = vpack.c.b16 %v644, %v640
    %v969 = vpack.c.b16 %v649, %v645
    %v970 = vpack.c.b16 %v650, %v646
    %v971 = vpack.c.b16 %v651, %v647
    %v972 = vpack.c.b16 %v652, %v648
    %v973 = vpack.c.b16 %v657, %v653
    %v974 = vpack.c.b16 %v658, %v654
    %v975 = vpack.c.b16 %v659, %v655
    %v976 = vpack.c.b16 %v660, %v656
    %v977 = vpack.c.b16 %v665, %v661
    %v978 = vpack.c.b16 %v666, %v662
    %v979 = vpack.c.b16 %v667, %v663
    %v980 = vpack.c.b16 %v668, %v664
    %v981 = vpack.c.b16 %v673, %v669
    %v982 = vpack.c.b16 %v674, %v670
    %v983 = vpack.c.b16 %v675, %v671
    %v984 = vpack.c.b16 %v676, %v672
    %v985 = vpack.c.b16 %v681, %v677
    %v986 = vpack.c.b16 %v682, %v678
    %v987 = vpack.c.b16 %v683, %v679
    %v988 = vpack.c.b16 %v684, %v680
    %v989 = vpack.c.b16 %v689, %v685
    %v990 = vpack.c.b16 %v690, %v686
    %v991 = vpack.c.b16 %v691, %v687
    %v992 = vpack.c.b16 %v692, %v688
    %v993 = vpack.c.b16 %v697, %v693
    %v994 = vpack.c.b16 %v698, %v694
    %v995 = vpack.c.b16 %v699, %v695
    %v996 = vpack.c.b16 %v700, %v696
    %v997 = vpack.c.b16 %v705, %v701
    %v998 = vpack.c.b16 %v706, %v702
    %v999 = vpack.c.b16 %v707, %v703
    %v1000 = vpack.c.b16 %v708, %v704
    %v1001 = vpack.c.b16 %v713, %v709
    %v1002 = vpack.c.b16 %v714, %v710
    %v1003 = vpack.c.b16 %v715, %v711
    %v1004 = vpack.c.b16 %v716, %v712
    %v1005 = vpack.c.b16 %v721, %v717
    %v1006 = vpack.c.b16 %v722, %v718
    %v1007 = vpack.c.b16 %v723, %v719
    %v1008 = vpack.c.b16 %v724, %v720
    %v1009 = vpack.c.b16 %v729, %v725
    %v1010 = vpack.c.b16 %v730, %v726
    %v1011 = vpack.c.b16 %v731, %v727
    %v1012 = vpack.c.b16 %v732, %v728
    %v1013 = vpack.c.b16 %v737, %v733
    %v1014 = vpack.c.b16 %v738, %v734
    %v1015 = vpack.c.b16 %v739, %v735
    %v1016 = vpack.c.b16 %v740, %v736
    %v1017 = vpack.c.b16 %v745, %v741
    %v1018 = vpack.c.b16 %v746, %v742
    %v1019 = vpack.c.b16 %v747, %v743
    %v1020 = vpack.c.b16 %v748, %v744
    %v1021 = vpack.c.b16 %v753, %v749
    %v1022 = vpack.c.b16 %v754, %v750
    %v1023 = vpack.c.b16 %v755, %v751
    %v1024 = vpack.c.b16 %v756, %v752
    %v1025 = vpack.c.b16 %v761, %v757
    %v1026 = vpack.c.b16 %v762, %v758
    %v1027 = vpack.c.b16 %v763, %v759
    %v1028 = vpack.c.b16 %v764, %v760
    %v1029 = vpack.c.b16 %v769, %v765
    %v1030 = vpack.c.b16 %v770, %v766
    %v1031 = vpack.c.b16 %v771, %v767
    %v1032 = vpack.c.b16 %v772, %v768
    %v1033 = vpack.c.b16 %v777, %v773
    %v1034 = vpack.c.b16 %v778, %v774
    %v1035 = vpack.c.b16 %v779, %v775
    %v1036 = vpack.c.b16 %v780, %v776
    %v1037 = vpack.c.b16 %v785, %v781
    %v1038 = vpack.c.b16 %v786, %v782
    %v1039 = vpack.c.b16 %v787, %v783
    %v1040 = vpack.c.b16 %v788, %v784
    %v1041 = vpack.c.b16 %v793, %v789
    %v1042 = vpack.c.b16 %v794, %v790
    %v1043 = vpack.c.b16 %v795, %v791
    %v1044 = vpack.c.b16 %v796, %v792
    %v1045 = vpack.c.b16 %v801, %v797
    %v1046 = vpack.c.b16 %v802, %v798
    %v1047 = vpack.c.b16 %v803, %v799
    %v1048 = vpack.c.b16 %v804, %v800
    %v1049 = vpack.c.b16 %v809, %v805
    %v1050 = vpack.c.b16 %v810, %v806
    %v1051 = vpack.c.b16 %v811, %v807
    %v1052 = vpack.c.b16 %v812, %v808
    %v1053 = vpack.c.b16 %v817, %v813
    %v1054 = vpack.c.b16 %v818, %v814
    %v1055 = vpack.c.b16 %v819, %v815
    %v1056 = vpack.c.b16 %v820, %v816
    %v1057 = vpack.c.b16 %v825, %v821
    %v1058 = vpack.c.b16 %v826, %v822
    %v1059 = vpack.c.b16 %v827, %v823
    %v1060 = vpack.c.b16 %v828, %v824
    %v1061 = vpack.c.b16 %v833, %v829
    %v1062 = vpack.c.b16 %v834, %v830
    %v1063 = vpack.c.b16 %v835, %v831
    %v1064 = vpack.c.b16 %v836, %v832
    %v1065 = vpack.c.b16 %v841, %v837
    %v1066 = vpack.c.b16 %v842, %v838
    %v1067 = vpack.c.b16 %v843, %v839
    %v1068 = vpack.c.b16 %v844, %v840
    %v1069 = vpack.c.b16 %v849, %v845
    %v1070 = vpack.c.b16 %v850, %v846
    %v1071 = vpack.c.b16 %v851, %v847
    %v1072 = vpack.c.b16 %v852, %v848
    %v1073 = vpack.c.b16 %v857, %v853
    %v1074 = vpack.c.b16 %v858, %v854
    %v1075 = vpack.c.b16 %v859, %v855
    %v1076 = vpack.c.b16 %v860, %v856
    %v1077 = vpack.c.b16 %v865, %v861
    %v1078 = vpack.c.b16 %v866, %v862
    %v1079 = vpack.c.b16 %v867, %v863
    %v1080 = vpack.c.b16 %v868, %v864
    %v1081 = vpack.c.b16 %v873, %v869
    %v1082 = vpack.c.b16 %v874, %v870
    %v1083 = vpack.c.b16 %v875, %v871
    %v1084 = vpack.c.b16 %v876, %v872
    %v1085 = vpack.c.b16 %v881, %v877
    %v1086 = vpack.c.b16 %v882, %v878
    %v1087 = vpack.c.b16 %v883, %v879
    %v1088 = vpack.c.b16 %v884, %v880
    %v1089 = vpack.c.b16 %v889, %v885
    %v1090 = vpack.c.b16 %v890, %v886
    %v1091 = vpack.c.b16 %v891, %v887
    %v1092 = vpack.c.b16 %v892, %v888
    %v1093 = vpack.c.b16 %v897, %v893
    %v1094 = vpack.c.b16 %v898, %v894
    %v1095 = vpack.c.b16 %v899, %v895
    %v1096 = vpack.c.b16 %v900, %v896
    %vm1293 = vcmask 130048
    %v1295 = vsel %vm1293, %v306, 0
    %1297 = vmatprep.subr.bf16.mxu0 %v902
    %1298 = vmatpush1.bf16.msra.mxu0 %v901
    %1299 = vmatprep.subr.bf16.mxu0 %v906
    %1300 = vmatpush1.bf16.msra.mxu0 %v905
    %1301 = vmatprep.subr.bf16.mxu0 %v910
    %1302 = vmatpush1.bf16.msra.mxu0 %v909
    %1303 = vmatprep.subr.bf16.mxu0 %v914
    %1304 = vmatpush1.bf16.msra.mxu0 %v913
    %1305 = vmatprep.subr.bf16.mxu0 %v918
    %1306 = vmatpush1.bf16.msra.mxu0 %v917
    %1307 = vmatprep.subr.bf16.mxu0 %v922
    %1308 = vmatpush1.bf16.msra.mxu0 %v921
    %1309 = vmatprep.subr.bf16.mxu0 %v926
    %1310 = vmatpush1.bf16.msra.mxu0 %v925
    %1311 = vmatprep.subr.bf16.mxu0 %v930
    %1312 = vmatpush1.bf16.msra.mxu0 %v929
    %1313 = vmatprep.subr.bf16.mxu0 %v934
    %1314 = vmatpush1.bf16.msra.mxu0 %v933
    %1315 = vmatprep.subr.bf16.mxu0 %v938
    %1316 = vmatpush1.bf16.msra.mxu0 %v937
    %1317 = vmatprep.subr.bf16.mxu0 %v942
    %1318 = vmatpush1.bf16.msra.mxu0 %v941
    %1319 = vmatprep.subr.bf16.mxu0 %v946
    %1320 = vmatpush1.bf16.msra.mxu0 %v945
    %1321 = vmatprep.subr.bf16.mxu0 %v950
    %1322 = vmatpush1.bf16.msra.mxu0 %v949
    %1323 = vmatprep.subr.bf16.mxu0 %v954
    %1324 = vmatpush1.bf16.msra.mxu0 %v953
    %1325 = vmatprep.subr.bf16.mxu0 %v958
    %1326 = vmatpush1.bf16.msra.mxu0 %v957
    %1327 = vmatprep.subr.bf16.mxu0 %v962
    %1328 = vmatpush1.bf16.msra.mxu0 %v961
    %1329 = vmatprep.mubr.bf16.mxu0 %v301
    %1330 = vmatmul.mubr.bf16.gmra.mrb[0].mxu0 %v300
    %v1331 = vpop.f32.mrb[0].mxu0
    %v1332 = vadd.f32 %v272, %v1331
    %v1333 = vpop.f32.mrb[0].mxu0
    %v1334 = vadd.f32 %v276, %v1333
    %v1335 = vpop.f32.mrb[0].mxu0
    %v1336 = vpop.f32.mrb[0].mxu0
    %1337 = vdwg.mxu0
    %1338 = vmatprep.subr.bf16.mxu0 %v966
    %1339 = vmatpush1.bf16.msra.mxu0 %v965
    %1340 = vmatprep.subr.bf16.mxu0 %v970
    %1341 = vmatpush1.bf16.msra.mxu0 %v969
    %1342 = vmatprep.subr.bf16.mxu0 %v974
    %1343 = vmatpush1.bf16.msra.mxu0 %v973
    %1344 = vmatprep.subr.bf16.mxu0 %v978
    %1345 = vmatpush1.bf16.msra.mxu0 %v977
    %1346 = vmatprep.subr.bf16.mxu0 %v982
    %1347 = vmatpush1.bf16.msra.mxu0 %v981
    %1348 = vmatprep.subr.bf16.mxu0 %v986
    %1349 = vmatpush1.bf16.msra.mxu0 %v985
    %1350 = vmatprep.subr.bf16.mxu0 %v990
    %1351 = vmatpush1.bf16.msra.mxu0 %v989
    %1352 = vmatprep.subr.bf16.mxu0 %v994
    %1353 = vmatpush1.bf16.msra.mxu0 %v993
    %1354 = vmatprep.subr.bf16.mxu0 %v998
    %1355 = vmatpush1.bf16.msra.mxu0 %v997
    %1356 = vmatprep.subr.bf16.mxu0 %v1002
    %1357 = vmatpush1.bf16.msra.mxu0 %v1001
    %1358 = vmatprep.subr.bf16.mxu0 %v1006
    %1359 = vmatpush1.bf16.msra.mxu0 %v1005
    %1360 = vmatprep.subr.bf16.mxu0 %v1010
    %1361 = vmatpush1.bf16.msra.mxu0 %v1009
    %1362 = vmatprep.subr.bf16.mxu0 %v1014
    %1363 = vmatpush1.bf16.msra.mxu0 %v1013
    %1364 = vmatprep.subr.bf16.mxu0 %v1018
    %1365 = vmatpush1.bf16.msra.mxu0 %v1017
    %1366 = vmatprep.subr.bf16.mxu0 %v1022
    %1367 = vmatpush1.bf16.msra.mxu0 %v1021
    %1368 = vmatprep.subr.bf16.mxu0 %v1026
    %1369 = vmatpush1.bf16.msra.mxu0 %v1025
    %1370 = vmatprep.mubr.bf16.mxu0 %v303
    %1371 = vmatmul.mubr.bf16.gmra.mrb[0].mxu0 %v302
    %v1372 = vpop.f32.mrb[0].mxu0
    %v1373 = vadd.f32 %v1332, %v1372
    %v1374 = vpop.f32.mrb[0].mxu0
    %v1375 = vadd.f32 %v1334, %v1374
    %v1376 = vpop.f32.mrb[0].mxu0
    %v1377 = vpop.f32.mrb[0].mxu0
    %1378 = vdwg.mxu0
    %1379 = vmatprep.subr.bf16.mxu0 %v1030
    %1380 = vmatpush1.bf16.msra.mxu0 %v1029
    %1381 = vmatprep.subr.bf16.mxu0 %v1034
    %1382 = vmatpush1.bf16.msra.mxu0 %v1033
    %1383 = vmatprep.subr.bf16.mxu0 %v1038
    %1384 = vmatpush1.bf16.msra.mxu0 %v1037
    %1385 = vmatprep.subr.bf16.mxu0 %v1042
    %1386 = vmatpush1.bf16.msra.mxu0 %v1041
    %1387 = vmatprep.subr.bf16.mxu0 %v1046
    %1388 = vmatpush1.bf16.msra.mxu0 %v1045
    %1389 = vmatprep.subr.bf16.mxu0 %v1050
    %1390 = vmatpush1.bf16.msra.mxu0 %v1049
    %1391 = vmatprep.subr.bf16.mxu0 %v1054
    %1392 = vmatpush1.bf16.msra.mxu0 %v1053
    %1393 = vmatprep.subr.bf16.mxu0 %v1058
    %1394 = vmatpush1.bf16.msra.mxu0 %v1057
    %1395 = vmatprep.subr.bf16.mxu0 %v1062
    %1396 = vmatpush1.bf16.msra.mxu0 %v1061
    %1397 = vmatprep.subr.bf16.mxu0 %v1066
    %1398 = vmatpush1.bf16.msra.mxu0 %v1065
    %1399 = vmatprep.subr.bf16.mxu0 %v1070
    %1400 = vmatpush1.bf16.msra.mxu0 %v1069
    %1401 = vmatprep.subr.bf16.mxu0 %v1074
    %1402 = vmatpush1.bf16.msra.mxu0 %v1073
    %1403 = vmatprep.subr.bf16.mxu0 %v1078
    %1404 = vmatpush1.bf16.msra.mxu0 %v1077
    %1405 = vmatprep.subr.bf16.mxu0 %v1082
    %1406 = vmatpush1.bf16.msra.mxu0 %v1081
    %1407 = vmatprep.subr.bf16.mxu0 %v1086
    %1408 = vmatpush1.bf16.msra.mxu0 %v1085
    %1409 = vmatprep.subr.bf16.mxu0 %v1090
    %1410 = vmatpush1.bf16.msra.mxu0 %v1089
    %1411 = vmatprep.mubr.bf16.mxu0 %v305
    %1412 = vmatmul.mubr.bf16.gmra.mrb[0].mxu0 %v304
    %v1413 = vpop.f32.mrb[0].mxu0
    %v1414 = vadd.f32 %v1373, %v1413
    %v1415 = vpop.f32.mrb[0].mxu0
    %v1416 = vadd.f32 %v1375, %v1415
    %v1417 = vpop.f32.mrb[0].mxu0
    %v1418 = vpop.f32.mrb[0].mxu0
    %1419 = vdwg.mxu0
    %1420 = vmatprep.subr.bf16.mxu0 %v1094
    %1421 = vmatpush1.bf16.msra.mxu0 %v1093
    %1422 = vmatprep.subr.bf16.mxu0 0
    %1423 = vmatpush1.bf16.msra.mxu0 0
    %1424 = vmatprep.subr.bf16.mxu0 0
    %1425 = vmatpush1.bf16.msra.mxu0 0
    %1426 = vmatprep.subr.bf16.mxu0 0
    %1427 = vmatpush1.bf16.msra.mxu0 0
    %1428 = vmatprep.subr.bf16.mxu0 0
    %1429 = vmatpush1.bf16.msra.mxu0 0
    %1430 = vmatprep.subr.bf16.mxu0 0
    %1431 = vmatpush1.bf16.msra.mxu0 0
    %1432 = vmatprep.subr.bf16.mxu0 0
    %1433 = vmatpush1.bf16.msra.mxu0 0
    %1434 = vmatprep.subr.bf16.mxu0 0
    %1435 = vmatpush1.bf16.msra.mxu0 0
    %1436 = vmatprep.subr.bf16.mxu0 0
    %1437 = vmatpush1.bf16.msra.mxu0 0
    %1438 = vmatprep.subr.bf16.mxu0 0
    %1439 = vmatpush1.bf16.msra.mxu0 0
    %1440 = vmatprep.subr.bf16.mxu0 0
    %1441 = vmatpush1.bf16.msra.mxu0 0
    %1442 = vmatprep.subr.bf16.mxu0 0
    %1443 = vmatpush1.bf16.msra.mxu0 0
    %1444 = vmatprep.subr.bf16.mxu0 0
    %1445 = vmatpush1.bf16.msra.mxu0 0
    %1446 = vmatprep.subr.bf16.mxu0 0
    %1447 = vmatpush1.bf16.msra.mxu0 0
    %1448 = vmatprep.subr.bf16.mxu0 0
    %1449 = vmatpush1.bf16.msra.mxu0 0
    %1450 = vmatprep.subr.bf16.mxu0 0
    %1451 = vmatpush1.bf16.msra.mxu0 0
    %1452 = vmatprep.mubr.bf16.mxu0 0
    %1453 = vmatmul.mubr.bf16.gmra.mrb[0].mxu0 %v1295
    %v1454 = vpop.f32.mrb[0].mxu0
    %v1455 = vadd.f32 %v1414, %v1454
    %v1456 = vpop.f32.mrb[0].mxu0
    %v1457 = vadd.f32 %v1416, %v1456
    %v1458 = vpop.f32.mrb[0].mxu0
    %v1459 = vpop.f32.mrb[0].mxu0
    %1460 = vdwg.mxu0
    %1461 = vmatprep.subr.bf16.mxu0 %v904
    %1462 = vmatpush1.bf16.msra.mxu0 %v903
    %1463 = vmatprep.subr.bf16.mxu0 %v908
    %1464 = vmatpush1.bf16.msra.mxu0 %v907
    %1465 = vmatprep.subr.bf16.mxu0 %v912
    %1466 = vmatpush1.bf16.msra.mxu0 %v911
    %1467 = vmatprep.subr.bf16.mxu0 %v916
    %1468 = vmatpush1.bf16.msra.mxu0 %v915
    %1469 = vmatprep.subr.bf16.mxu0 %v920
    %1470 = vmatpush1.bf16.msra.mxu0 %v919
    %1471 = vmatprep.subr.bf16.mxu0 %v924
    %1472 = vmatpush1.bf16.msra.mxu0 %v923
    %1473 = vmatprep.subr.bf16.mxu0 %v928
    %1474 = vmatpush1.bf16.msra.mxu0 %v927
    %1475 = vmatprep.subr.bf16.mxu0 %v932
    %1476 = vmatpush1.bf16.msra.mxu0 %v931
    %1477 = vmatprep.subr.bf16.mxu0 %v936
    %1478 = vmatpush1.bf16.msra.mxu0 %v935
    %1479 = vmatprep.subr.bf16.mxu0 %v940
    %1480 = vmatpush1.bf16.msra.mxu0 %v939
    %1481 = vmatprep.subr.bf16.mxu0 %v944
    %1482 = vmatpush1.bf16.msra.mxu0 %v943
    %1483 = vmatprep.subr.bf16.mxu0 %v948
    %1484 = vmatpush1.bf16.msra.mxu0 %v947
    %1485 = vmatprep.subr.bf16.mxu0 %v952
    %1486 = vmatpush1.bf16.msra.mxu0 %v951
    %1487 = vmatprep.subr.bf16.mxu0 %v956
    %1488 = vmatpush1.bf16.msra.mxu0 %v955
    %1489 = vmatprep.subr.bf16.mxu0 %v960
    %1490 = vmatpush1.bf16.msra.mxu0 %v959
    %1491 = vmatprep.subr.bf16.mxu0 %v964
    %1492 = vmatpush1.bf16.msra.mxu0 %v963
    %1493 = vmatprep.mubr.bf16.mxu0 %v301
    %1494 = vmatmul.mubr.bf16.gmra.mrb[0].mxu0 %v300
    %v1495 = vpop.f32.mrb[0].mxu0
    %v1496 = vadd.f32 %v280, %v1495
    %v1497 = vpop.f32.mrb[0].mxu0
    %v1498 = vadd.f32 %v284, %v1497
    %v1499 = vpop.f32.mrb[0].mxu0
    %v1500 = vpop.f32.mrb[0].mxu0
    %1501 = vdwg.mxu0
    %1502 = vmatprep.subr.bf16.mxu0 %v968
    %1503 = vmatpush1.bf16.msra.mxu0 %v967
    %1504 = vmatprep.subr.bf16.mxu0 %v972
    %1505 = vmatpush1.bf16.msra.mxu0 %v971
    %1506 = vmatprep.subr.bf16.mxu0 %v976
    %1507 = vmatpush1.bf16.msra.mxu0 %v975
    %1508 = vmatprep.subr.bf16.mxu0 %v980
    %1509 = vmatpush1.bf16.msra.mxu0 %v979
    %1510 = vmatprep.subr.bf16.mxu0 %v984
    %1511 = vmatpush1.bf16.msra.mxu0 %v983
    %1512 = vmatprep.subr.bf16.mxu0 %v988
    %1513 = vmatpush1.bf16.msra.mxu0 %v987
    %1514 = vmatprep.subr.bf16.mxu0 %v992
    %1515 = vmatpush1.bf16.msra.mxu0 %v991
    %1516 = vmatprep.subr.bf16.mxu0 %v996
    %1517 = vmatpush1.bf16.msra.mxu0 %v995
    %1518 = vmatprep.subr.bf16.mxu0 %v1000
    %1519 = vmatpush1.bf16.msra.mxu0 %v999
    %1520 = vmatprep.subr.bf16.mxu0 %v1004
    %1521 = vmatpush1.bf16.msra.mxu0 %v1003
    %1522 = vmatprep.subr.bf16.mxu0 %v1008
    %1523 = vmatpush1.bf16.msra.mxu0 %v1007
    %1524 = vmatprep.subr.bf16.mxu0 %v1012
    %1525 = vmatpush1.bf16.msra.mxu0 %v1011
    %1526 = vmatprep.subr.bf16.mxu0 %v1016
    %1527 = vmatpush1.bf16.msra.mxu0 %v1015
    %1528 = vmatprep.subr.bf16.mxu0 %v1020
    %1529 = vmatpush1.bf16.msra.mxu0 %v1019
    %1530 = vmatprep.subr.bf16.mxu0 %v1024
    %1531 = vmatpush1.bf16.msra.mxu0 %v1023
    %1532 = vmatprep.subr.bf16.mxu0 %v1028
    %1533 = vmatpush1.bf16.msra.mxu0 %v1027
    %1534 = vmatprep.mubr.bf16.mxu0 %v303
    %1535 = vmatmul.mubr.bf16.gmra.mrb[0].mxu0 %v302
    %v1536 = vpop.f32.mrb[0].mxu0
    %v1537 = vadd.f32 %v1496, %v1536
    %v1538 = vpop.f32.mrb[0].mxu0
    %v1539 = vadd.f32 %v1498, %v1538
    %v1540 = vpop.f32.mrb[0].mxu0
    %v1541 = vpop.f32.mrb[0].mxu0
    %1542 = vdwg.mxu0
    %1543 = vmatprep.subr.bf16.mxu0 %v1032
    %1544 = vmatpush1.bf16.msra.mxu0 %v1031
    %1545 = vmatprep.subr.bf16.mxu0 %v1036
    %1546 = vmatpush1.bf16.msra.mxu0 %v1035
    %1547 = vmatprep.subr.bf16.mxu0 %v1040
    %1548 = vmatpush1.bf16.msra.mxu0 %v1039
    %1549 = vmatprep.subr.bf16.mxu0 %v1044
    %1550 = vmatpush1.bf16.msra.mxu0 %v1043
    %1551 = vmatprep.subr.bf16.mxu0 %v1048
    %1552 = vmatpush1.bf16.msra.mxu0 %v1047
    %1553 = vmatprep.subr.bf16.mxu0 %v1052
    %1554 = vmatpush1.bf16.msra.mxu0 %v1051
    %1555 = vmatprep.subr.bf16.mxu0 %v1056
    %1556 = vmatpush1.bf16.msra.mxu0 %v1055
    %1557 = vmatprep.subr.bf16.mxu0 %v1060
    %1558 = vmatpush1.bf16.msra.mxu0 %v1059
    %1559 = vmatprep.subr.bf16.mxu0 %v1064
    %1560 = vmatpush1.bf16.msra.mxu0 %v1063
    %1561 = vmatprep.subr.bf16.mxu0 %v1068
    %1562 = vmatpush1.bf16.msra.mxu0 %v1067
    %1563 = vmatprep.subr.bf16.mxu0 %v1072
    %1564 = vmatpush1.bf16.msra.mxu0 %v1071
    %1565 = vmatprep.subr.bf16.mxu0 %v1076
    %1566 = vmatpush1.bf16.msra.mxu0 %v1075
    %1567 = vmatprep.subr.bf16.mxu0 %v1080
    %1568 = vmatpush1.bf16.msra.mxu0 %v1079
    %1569 = vmatprep.subr.bf16.mxu0 %v1084
    %1570 = vmatpush1.bf16.msra.mxu0 %v1083
    %1571 = vmatprep.subr.bf16.mxu0 %v1088
    %1572 = vmatpush1.bf16.msra.mxu0 %v1087
    %1573 = vmatprep.subr.bf16.mxu0 %v1092
    %1574 = vmatpush1.bf16.msra.mxu0 %v1091
    %1575 = vmatprep.mubr.bf16.mxu0 %v305
    %1576 = vmatmul.mubr.bf16.gmra.mrb[0].mxu0 %v304
    %v1577 = vpop.f32.mrb[0].mxu0
    %v1578 = vadd.f32 %v1537, %v1577
    %v1579 = vpop.f32.mrb[0].mxu0
    %v1580 = vadd.f32 %v1539, %v1579
    %v1581 = vpop.f32.mrb[0].mxu0
    %v1582 = vpop.f32.mrb[0].mxu0
    %1583 = vdwg.mxu0
    %1584 = vmatprep.subr.bf16.mxu0 %v1096
    %1585 = vmatpush1.bf16.msra.mxu0 %v1095
    %1586 = vmatprep.subr.bf16.mxu0 0
    %1587 = vmatpush1.bf16.msra.mxu0 0
    %1588 = vmatprep.subr.bf16.mxu0 0
    %1589 = vmatpush1.bf16.msra.mxu0 0
    %1590 = vmatprep.subr.bf16.mxu0 0
    %1591 = vmatpush1.bf16.msra.mxu0 0
    %1592 = vmatprep.subr.bf16.mxu0 0
    %1593 = vmatpush1.bf16.msra.mxu0 0
    %1594 = vmatprep.subr.bf16.mxu0 0
    %1595 = vmatpush1.bf16.msra.mxu0 0
    %1596 = vmatprep.subr.bf16.mxu0 0
    %1597 = vmatpush1.bf16.msra.mxu0 0
    %1598 = vmatprep.subr.bf16.mxu0 0
    %1599 = vmatpush1.bf16.msra.mxu0 0
    %1600 = vmatprep.subr.bf16.mxu0 0
    %1601 = vmatpush1.bf16.msra.mxu0 0
    %1602 = vmatprep.subr.bf16.mxu0 0
    %1603 = vmatpush1.bf16.msra.mxu0 0
    %1604 = vmatprep.subr.bf16.mxu0 0
    %1605 = vmatpush1.bf16.msra.mxu0 0
    %1606 = vmatprep.subr.bf16.mxu0 0
    %1607 = vmatpush1.bf16.msra.mxu0 0
    %1608 = vmatprep.subr.bf16.mxu0 0
    %1609 = vmatpush1.bf16.msra.mxu0 0
    %1610 = vmatprep.subr.bf16.mxu0 0
    %1611 = vmatpush1.bf16.msra.mxu0 0
    %1612 = vmatprep.subr.bf16.mxu0 0
    %1613 = vmatpush1.bf16.msra.mxu0 0
    %1614 = vmatprep.subr.bf16.mxu0 0
    %1615 = vmatpush1.bf16.msra.mxu0 0
    %1616 = vmatprep.mubr.bf16.mxu0 0
    %1617 = vmatmul.mubr.bf16.gmra.mrb[0].mxu0 %v1295
    %v1618 = vpop.f32.mrb[0].mxu0
    %v1619 = vadd.f32 %v1578, %v1618
    %v1620 = vpop.f32.mrb[0].mxu0
    %v1621 = vadd.f32 %v1580, %v1620
    %v1622 = vpop.f32.mrb[0].mxu0
    %v1623 = vpop.f32.mrb[0].mxu0
    %1624 = vdwg.mxu0
    %v1625 = vmax.f32 %v1455, 0.0
    %v1626 = vmax.f32 %v1457, 0.0
    %v1627 = vmax.f32 %v1619, 0.0
    %v1628 = vmax.f32 %v1621, 0.0
    %v1629 = vpack.c.bf16 %v1625, %v1625
    %v1630 = vpack.c.bf16 %v1626, %v1626
    %v1631 = vpack.c.bf16 %v1627, %v1627
    %v1632 = vpack.c.bf16 %v1628, %v1628
    %v1633 = vld [vmem:[%s4] sm:$0xf]
    %v1634 = vld [vmem:[%s4 + $0x4] sm:$0xf]
    %v1635 = vld [vmem:[%s4 + $0x8] sm:$0xf]
    %v1636 = vld [vmem:[%s4 + $0xc] sm:$0xf]
    %v1637 = vld [vmem:[%s4 + $0x10] sm:$0xf]
    %v1638 = vld [vmem:[%s4 + $0x14] sm:$0xf]
    %v1639 = vld [vmem:[%s4 + $0x18] sm:$0xf]
    %v1640 = vld [vmem:[%s4 + $0x1c] sm:$0xf]
    %v1641 = vld [vmem:[%s4 + $0x20] sm:$0xf]
    %v1642 = vld [vmem:[%s4 + $0x24] sm:$0xf]
    %v1643 = vld [vmem:[%s4 + $0x28] sm:$0xf]
    %v1644 = vld [vmem:[%s4 + $0x2c] sm:$0xf]
    %v1645 = vld [vmem:[%s4 + $0x30] sm:$0xf]
    %v1646 = vld [vmem:[%s4 + $0x34] sm:$0xf]
    %v1647 = vld [vmem:[%s4 + $0x38] sm:$0xf]
    %v1648 = vld [vmem:[%s4 + $0x3c] sm:$0xf]
    %v1649 = vld [vmem:[%s4 + $0x40] sm:$0xf]
    %v1650 = vld [vmem:[%s4 + $0x44] sm:$0xf]
    %v1651 = vld [vmem:[%s4 + $0x48] sm:$0xf]
    %v1652 = vld [vmem:[%s4 + $0x4c] sm:$0xf]
    %v1653 = vld [vmem:[%s4 + $0x50] sm:$0xf]
    %v1654 = vld [vmem:[%s4 + $0x54] sm:$0xf]
    %v1655 = vld [vmem:[%s4 + $0x58] sm:$0xf]
    %v1656 = vld [vmem:[%s4 + $0x5c] sm:$0xf]
    %v1657 = vld [vmem:[%s4 + $0x60] sm:$0xf]
    %v1658 = vld [vmem:[%s4 + $0x64] sm:$0xf]
    %v1659 = vld [vmem:[%s4 + $0x68] sm:$0xf]
    %v1660 = vld [vmem:[%s4 + $0x6c] sm:$0xf]
    %v1661 = vld [vmem:[%s4 + $0x70] sm:$0xf]
    %v1662 = vld [vmem:[%s4 + $0x74] sm:$0xf]
    %v1663 = vld [vmem:[%s4 + $0x78] sm:$0xf]
    %v1664 = vld [vmem:[%s4 + $0x7c] sm:$0xf]
    %v1665 = vld [vmem:[%s4 + $0x80] sm:$0xf]
    %v1666 = vld [vmem:[%s4 + $0x84] sm:$0xf]
    %v1667 = vld [vmem:[%s4 + $0x88] sm:$0xf]
    %v1668 = vld [vmem:[%s4 + $0x8c] sm:$0xf]
    %v1669 = vld [vmem:[%s4 + $0x90] sm:$0xf]
    %v1670 = vld [vmem:[%s4 + $0x94] sm:$0xf]
    %v1671 = vld [vmem:[%s4 + $0x98] sm:$0xf]
    %v1672 = vld [vmem:[%s4 + $0x9c] sm:$0xf]
    %v1673 = vld [vmem:[%s4 + $0xa0] sm:$0xf]
    %v1674 = vld [vmem:[%s4 + $0xa4] sm:$0xf]
    %v1675 = vld [vmem:[%s4 + $0xa8] sm:$0xf]
    %v1676 = vld [vmem:[%s4 + $0xac] sm:$0xf]
    %v1677 = vld [vmem:[%s4 + $0xb0] sm:$0xf]
    %v1678 = vld [vmem:[%s4 + $0xb4] sm:$0xf]
    %v1679 = vld [vmem:[%s4 + $0xb8] sm:$0xf]
    %v1680 = vld [vmem:[%s4 + $0xbc] sm:$0xf]
    %v1681 = vld [vmem:[%s4 + $0xc0] sm:$0xf]
    %v1682 = vld [vmem:[%s4 + $0xc4] sm:$0xf]
    %v1683 = vld [vmem:[%s4 + $0xc8] sm:$0xf]
    %v1684 = vld [vmem:[%s4 + $0xcc] sm:$0xf]
    %v1685 = vld [vmem:[%s4 + $0xd0] sm:$0xf]
    %v1686 = vld [vmem:[%s4 + $0xd4] sm:$0xf]
    %v1687 = vld [vmem:[%s4 + $0xd8] sm:$0xf]
    %v1688 = vld [vmem:[%s4 + $0xdc] sm:$0xf]
    %v1689 = vld [vmem:[%s4 + $0xe0] sm:$0xf]
    %v1690 = vld [vmem:[%s4 + $0xe4] sm:$0xf]
    %v1691 = vld [vmem:[%s4 + $0xe8] sm:$0xf]
    %v1692 = vld [vmem:[%s4 + $0xec] sm:$0xf]
    %v1693 = vld [vmem:[%s4 + $0xf0] sm:$0xf]
    %v1694 = vld [vmem:[%s4 + $0xf4] sm:$0xf]
    %v1695 = vld [vmem:[%s4 + $0xf8] sm:$0xf]
    %v1696 = vld [vmem:[%s4 + $0xfc] sm:$0xf]
    %v1697 = vld [vmem:[%s5] sm:$0x1]
    %v1699 = vlaneseq
    %v1700 = vshrl.u32 %v1699, 7
    %v1701 = vsub.s32 0, %v1700
    %v1702 = vrot.slane %v1697, %v1701
    %v1768 = vunpack.c.l.b16 %v1633
    %v1769 = vunpack.c.l.b16 %v1634
    %v1770 = vunpack.c.l.b16 %v1635
    %v1771 = vunpack.c.l.b16 %v1636
    %v1772 = vunpack.c.l.b16 %v1637
    %v1773 = vunpack.c.l.b16 %v1638
    %v1774 = vunpack.c.l.b16 %v1639
    %v1775 = vunpack.c.l.b16 %v1640
    %v1776 = vunpack.c.l.b16 %v1641
    %v1777 = vunpack.c.l.b16 %v1642
    %v1778 = vunpack.c.l.b16 %v1643
    %v1779 = vunpack.c.l.b16 %v1644
    %v1780 = vunpack.c.l.b16 %v1645
    %v1781 = vunpack.c.l.b16 %v1646
    %v1782 = vunpack.c.l.b16 %v1647
    %v1783 = vunpack.c.l.b16 %v1648
    %v1784 = vunpack.c.l.b16 %v1649
    %v1785 = vunpack.c.l.b16 %v1650
    %v1786 = vunpack.c.l.b16 %v1651
    %v1787 = vunpack.c.l.b16 %v1652
    %v1788 = vunpack.c.l.b16 %v1653
    %v1789 = vunpack.c.l.b16 %v1654
    %v1790 = vunpack.c.l.b16 %v1655
    %v1791 = vunpack.c.l.b16 %v1656
    %v1792 = vunpack.c.l.b16 %v1657
    %v1793 = vunpack.c.l.b16 %v1658
    %v1794 = vunpack.c.l.b16 %v1659
    %v1795 = vunpack.c.l.b16 %v1660
    %v1796 = vunpack.c.l.b16 %v1661
    %v1797 = vunpack.c.l.b16 %v1662
    %v1798 = vunpack.c.l.b16 %v1663
    %v1799 = vunpack.c.l.b16 %v1664
    %v1800 = vunpack.c.l.b16 %v1665
    %v1801 = vunpack.c.l.b16 %v1666
    %v1802 = vunpack.c.l.b16 %v1667
    %v1803 = vunpack.c.l.b16 %v1668
    %v1804 = vunpack.c.l.b16 %v1669
    %v1805 = vunpack.c.l.b16 %v1670
    %v1806 = vunpack.c.l.b16 %v1671
    %v1807 = vunpack.c.l.b16 %v1672
    %v1808 = vunpack.c.l.b16 %v1673
    %v1809 = vunpack.c.l.b16 %v1674
    %v1810 = vunpack.c.l.b16 %v1675
    %v1811 = vunpack.c.l.b16 %v1676
    %v1812 = vunpack.c.l.b16 %v1677
    %v1813 = vunpack.c.l.b16 %v1678
    %v1814 = vunpack.c.l.b16 %v1679
    %v1815 = vunpack.c.l.b16 %v1680
    %v1816 = vunpack.c.l.b16 %v1681
    %v1817 = vunpack.c.l.b16 %v1682
    %v1818 = vunpack.c.l.b16 %v1683
    %v1819 = vunpack.c.l.b16 %v1684
    %v1820 = vunpack.c.l.b16 %v1685
    %v1821 = vunpack.c.l.b16 %v1686
    %v1822 = vunpack.c.l.b16 %v1687
    %v1823 = vunpack.c.l.b16 %v1688
    %v1824 = vunpack.c.l.b16 %v1689
    %v1825 = vunpack.c.l.b16 %v1690
    %v1826 = vunpack.c.l.b16 %v1691
    %v1827 = vunpack.c.l.b16 %v1692
    %v1828 = vunpack.c.l.b16 %v1693
    %v1829 = vunpack.c.l.b16 %v1694
    %v1830 = vunpack.c.l.b16 %v1695
    %v1831 = vunpack.c.l.b16 %v1696
    %v1832 = vpack.c.b16 %v1769, %v1768
    %v1833 = vpack.c.b16 %v1771, %v1770
    %v1834 = vpack.c.b16 %v1773, %v1772
    %v1835 = vpack.c.b16 %v1775, %v1774
    %v1836 = vpack.c.b16 %v1777, %v1776
    %v1837 = vpack.c.b16 %v1779, %v1778
    %v1838 = vpack.c.b16 %v1781, %v1780
    %v1839 = vpack.c.b16 %v1783, %v1782
    %v1840 = vpack.c.b16 %v1785, %v1784
    %v1841 = vpack.c.b16 %v1787, %v1786
    %v1842 = vpack.c.b16 %v1789, %v1788
    %v1843 = vpack.c.b16 %v1791, %v1790
    %v1844 = vpack.c.b16 %v1793, %v1792
    %v1845 = vpack.c.b16 %v1795, %v1794
    %v1846 = vpack.c.b16 %v1797, %v1796
    %v1847 = vpack.c.b16 %v1799, %v1798
    %v1848 = vpack.c.b16 %v1801, %v1800
    %v1849 = vpack.c.b16 %v1803, %v1802
    %v1850 = vpack.c.b16 %v1805, %v1804
    %v1851 = vpack.c.b16 %v1807, %v1806
    %v1852 = vpack.c.b16 %v1809, %v1808
    %v1853 = vpack.c.b16 %v1811, %v1810
    %v1854 = vpack.c.b16 %v1813, %v1812
    %v1855 = vpack.c.b16 %v1815, %v1814
    %v1856 = vpack.c.b16 %v1817, %v1816
    %v1857 = vpack.c.b16 %v1819, %v1818
    %v1858 = vpack.c.b16 %v1821, %v1820
    %v1859 = vpack.c.b16 %v1823, %v1822
    %v1860 = vpack.c.b16 %v1825, %v1824
    %v1861 = vpack.c.b16 %v1827, %v1826
    %v1862 = vpack.c.b16 %v1829, %v1828
    %v1863 = vpack.c.b16 %v1831, %v1830
    %1896 = vmatprep.subr.bf16.mxu0 0
    %1897 = vmatpush1.bf16.msra.mxu0 %v1832
    %1898 = vmatprep.subr.bf16.mxu0 0
    %1899 = vmatpush1.bf16.msra.mxu0 %v1833
    %1900 = vmatprep.subr.bf16.mxu0 0
    %1901 = vmatpush1.bf16.msra.mxu0 %v1834
    %1902 = vmatprep.subr.bf16.mxu0 0
    %1903 = vmatpush1.bf16.msra.mxu0 %v1835
    %1904 = vmatprep.subr.bf16.mxu0 0
    %1905 = vmatpush1.bf16.msra.mxu0 %v1836
    %1906 = vmatprep.subr.bf16.mxu0 0
    %1907 = vmatpush1.bf16.msra.mxu0 %v1837
    %1908 = vmatprep.subr.bf16.mxu0 0
    %1909 = vmatpush1.bf16.msra.mxu0 %v1838
    %1910 = vmatprep.subr.bf16.mxu0 0
    %1911 = vmatpush1.bf16.msra.mxu0 %v1839
    %1912 = vmatprep.subr.bf16.mxu0 0
    %1913 = vmatpush1.bf16.msra.mxu0 %v1840
    %1914 = vmatprep.subr.bf16.mxu0 0
    %1915 = vmatpush1.bf16.msra.mxu0 %v1841
    %1916 = vmatprep.subr.bf16.mxu0 0
    %1917 = vmatpush1.bf16.msra.mxu0 %v1842
    %1918 = vmatprep.subr.bf16.mxu0 0
    %1919 = vmatpush1.bf16.msra.mxu0 %v1843
    %1920 = vmatprep.subr.bf16.mxu0 0
    %1921 = vmatpush1.bf16.msra.mxu0 %v1844
    %1922 = vmatprep.subr.bf16.mxu0 0
    %1923 = vmatpush1.bf16.msra.mxu0 %v1845
    %1924 = vmatprep.subr.bf16.mxu0 0
    %1925 = vmatpush1.bf16.msra.mxu0 %v1846
    %1926 = vmatprep.subr.bf16.mxu0 0
    %1927 = vmatpush1.bf16.msra.mxu0 %v1847
    %1928 = vmatprep.mubr.bf16.mxu0 %v1630
    %1929 = vmatmul.mubr.bf16.gmra.mrb[0].mxu0 %v1629
    %v1930 = vpop.f32.mrb[0].mxu0
    %v1931 = vadd.f32 %v1702, %v1930
    %v1932 = vpop.f32.mrb[0].mxu0
    %v1933 = vpop.f32.mrb[0].mxu0
    %v1934 = vpop.f32.mrb[0].mxu0
    %1935 = vdwg.mxu0
    %1936 = vmatprep.subr.bf16.mxu0 0
    %1937 = vmatpush1.bf16.msra.mxu0 %v1848
    %1938 = vmatprep.subr.bf16.mxu0 0
    %1939 = vmatpush1.bf16.msra.mxu0 %v1849
    %1940 = vmatprep.subr.bf16.mxu0 0
    %1941 = vmatpush1.bf16.msra.mxu0 %v1850
    %1942 = vmatprep.subr.bf16.mxu0 0
    %1943 = vmatpush1.bf16.msra.mxu0 %v1851
    %1944 = vmatprep.subr.bf16.mxu0 0
    %1945 = vmatpush1.bf16.msra.mxu0 %v1852
    %1946 = vmatprep.subr.bf16.mxu0 0
    %1947 = vmatpush1.bf16.msra.mxu0 %v1853
    %1948 = vmatprep.subr.bf16.mxu0 0
    %1949 = vmatpush1.bf16.msra.mxu0 %v1854
    %1950 = vmatprep.subr.bf16.mxu0 0
    %1951 = vmatpush1.bf16.msra.mxu0 %v1855
    %1952 = vmatprep.subr.bf16.mxu0 0
    %1953 = vmatpush1.bf16.msra.mxu0 %v1856
    %1954 = vmatprep.subr.bf16.mxu0 0
    %1955 = vmatpush1.bf16.msra.mxu0 %v1857
    %1956 = vmatprep.subr.bf16.mxu0 0
    %1957 = vmatpush1.bf16.msra.mxu0 %v1858
    %1958 = vmatprep.subr.bf16.mxu0 0
    %1959 = vmatpush1.bf16.msra.mxu0 %v1859
    %1960 = vmatprep.subr.bf16.mxu0 0
    %1961 = vmatpush1.bf16.msra.mxu0 %v1860
    %1962 = vmatprep.subr.bf16.mxu0 0
    %1963 = vmatpush1.bf16.msra.mxu0 %v1861
    %1964 = vmatprep.subr.bf16.mxu0 0
    %1965 = vmatpush1.bf16.msra.mxu0 %v1862
    %1966 = vmatprep.subr.bf16.mxu0 0
    %1967 = vmatpush1.bf16.msra.mxu0 %v1863
    %1968 = vmatprep.mubr.bf16.mxu0 %v1632
    %1969 = vmatmul.mubr.bf16.gmra.mrb[0].mxu0 %v1631
    %v1970 = vpop.f32.mrb[0].mxu0
    %v1971 = vadd.f32 %v1931, %v1970
    %v1972 = vpop.f32.mrb[0].mxu0
    %v1973 = vpop.f32.mrb[0].mxu0
    %v1974 = vpop.f32.mrb[0].mxu0
    %1975 = vdwg.mxu0
    %1976 = vst [vmem:[%s11] sm:$0xff] %v1971
    %v1977 = vld [vmem:[%s1] sm:$0xff]
    %v1978 = vmul.f32 %v1971, 0.5
    %v1979 = vmul.f32 %v1978, 1.442695
    %v1980 = vpow.pop %v1979
    %1982 = vrot.lane.b32.xlu0 %v1980, 64
    %v1983 = vpop.permute.xlu0 %1982
    %v1985 = vmul.f32 %v1977, %v1983
    %v1986 = vadd.f32 %v1985, %v1971
    %v1987 = vpack.c.bf16 %v1986, %v1986
    %v1988 = vld [vmem:[%s6] sm:$0xff]
    %v1989 = vld [vmem:[%s6 + $0x8] sm:$0xff]
    %v1990 = vld [vmem:[%s6 + $0x10] sm:$0xff]
    %v1991 = vld [vmem:[%s6 + $0x18] sm:$0xff]
    %v1992 = vld [vmem:[%s6 + $0x20] sm:$0xff]
    %v1993 = vld [vmem:[%s6 + $0x28] sm:$0xff]
    %v1994 = vld [vmem:[%s6 + $0x30] sm:$0xff]
    %v1995 = vld [vmem:[%s6 + $0x38] sm:$0xff]
    %v1996 = vld [vmem:[%s7] sm:$0xf]
    %v1998 = vlaneseq
    %v1999 = vshrl.u32 %v1998, 7
    %v2000 = vsub.s32 0, %v1999
    %v2001 = vrot.slane %v1996, %v2000
    %v2002 = vlaneseq
    %v2003 = vshrl.u32 %v2002, 7
    %v2004 = vsub.s32 1, %v2003
    %v2005 = vrot.slane %v1996, %v2004
    %v2006 = vlaneseq
    %v2007 = vshrl.u32 %v2006, 7
    %v2008 = vsub.s32 2, %v2007
    %v2009 = vrot.slane %v1996, %v2008
    %v2010 = vlaneseq
    %v2011 = vshrl.u32 %v2010, 7
    %v2012 = vsub.s32 3, %v2011
    %v2013 = vrot.slane %v1996, %v2012
    %v2026 = vunpack.c.l.b16 %v1988
    %v2027 = vunpack.c.h.b16 %v1988
    %v2028 = vunpack.c.l.b16 %v1989
    %v2029 = vunpack.c.h.b16 %v1989
    %v2030 = vunpack.c.l.b16 %v1990
    %v2031 = vunpack.c.h.b16 %v1990
    %v2032 = vunpack.c.l.b16 %v1991
    %v2033 = vunpack.c.h.b16 %v1991
    %v2034 = vunpack.c.l.b16 %v1992
    %v2035 = vunpack.c.h.b16 %v1992
    %v2036 = vunpack.c.l.b16 %v1993
    %v2037 = vunpack.c.h.b16 %v1993
    %v2038 = vunpack.c.l.b16 %v1994
    %v2039 = vunpack.c.h.b16 %v1994
    %v2040 = vunpack.c.l.b16 %v1995
    %v2041 = vunpack.c.h.b16 %v1995
    %v2042 = vpack.c.b16 %v2030, %v2026
    %v2043 = vpack.c.b16 %v2031, %v2027
    %v2044 = vpack.c.b16 %v2032, %v2028
    %v2045 = vpack.c.b16 %v2033, %v2029
    %v2046 = vpack.c.b16 %v2038, %v2034
    %v2047 = vpack.c.b16 %v2039, %v2035
    %v2048 = vpack.c.b16 %v2040, %v2036
    %v2049 = vpack.c.b16 %v2041, %v2037
    %vm2058 = vcmask 261120
    %v2060 = vsel %vm2058, %v1987, 0
    %2062 = vmatprep.subr.bf16.mxu0 %v2043
    %2063 = vmatpush1.bf16.msra.mxu0 %v2042
    %2064 = vmatprep.subr.bf16.mxu0 %v2047
    %2065 = vmatpush1.bf16.msra.mxu0 %v2046
    %2066 = vmatprep.subr.bf16.mxu0 0
    %2067 = vmatpush1.bf16.msra.mxu0 0
    %2068 = vmatprep.subr.bf16.mxu0 0
    %2069 = vmatpush1.bf16.msra.mxu0 0
    %2070 = vmatprep.subr.bf16.mxu0 0
    %2071 = vmatpush1.bf16.msra.mxu0 0
    %2072 = vmatprep.subr.bf16.mxu0 0
    %2073 = vmatpush1.bf16.msra.mxu0 0
    %2074 = vmatprep.subr.bf16.mxu0 0
    %2075 = vmatpush1.bf16.msra.mxu0 0
    %2076 = vmatprep.subr.bf16.mxu0 0
    %2077 = vmatpush1.bf16.msra.mxu0 0
    %2078 = vmatprep.subr.bf16.mxu0 0
    %2079 = vmatpush1.bf16.msra.mxu0 0
    %2080 = vmatprep.subr.bf16.mxu0 0
    %2081 = vmatpush1.bf16.msra.mxu0 0
    %2082 = vmatprep.subr.bf16.mxu0 0
    %2083 = vmatpush1.bf16.msra.mxu0 0
    %2084 = vmatprep.subr.bf16.mxu0 0
    %2085 = vmatpush1.bf16.msra.mxu0 0
    %2086 = vmatprep.subr.bf16.mxu0 0
    %2087 = vmatpush1.bf16.msra.mxu0 0
    %2088 = vmatprep.subr.bf16.mxu0 0
    %2089 = vmatpush1.bf16.msra.mxu0 0
    %2090 = vmatprep.subr.bf16.mxu0 0
    %2091 = vmatpush1.bf16.msra.mxu0 0
    %2092 = vmatprep.subr.bf16.mxu0 0
    %2093 = vmatpush1.bf16.msra.mxu0 0
    %2094 = vmatprep.mubr.bf16.mxu0 0
    %2095 = vmatmul.mubr.bf16.gmra.mrb[0].mxu0 %v2060
    %v2096 = vpop.f32.mrb[0].mxu0
    %v2097 = vadd.f32 %v2001, %v2096
    %v2098 = vpop.f32.mrb[0].mxu0
    %v2099 = vadd.f32 %v2005, %v2098
    %v2100 = vpop.f32.mrb[0].mxu0
    %v2101 = vpop.f32.mrb[0].mxu0
    %2102 = vdwg.mxu0
    %2103 = vmatprep.subr.bf16.mxu0 %v2045
    %2104 = vmatpush1.bf16.msra.mxu0 %v2044
    %2105 = vmatprep.subr.bf16.mxu0 %v2049
    %2106 = vmatpush1.bf16.msra.mxu0 %v2048
    %2107 = vmatprep.subr.bf16.mxu0 0
    %2108 = vmatpush1.bf16.msra.mxu0 0
    %2109 = vmatprep.subr.bf16.mxu0 0
    %2110 = vmatpush1.bf16.msra.mxu0 0
    %2111 = vmatprep.subr.bf16.mxu0 0
    %2112 = vmatpush1.bf16.msra.mxu0 0
    %2113 = vmatprep.subr.bf16.mxu0 0
    %2114 = vmatpush1.bf16.msra.mxu0 0
    %2115 = vmatprep.subr.bf16.mxu0 0
    %2116 = vmatpush1.bf16.msra.mxu0 0
    %2117 = vmatprep.subr.bf16.mxu0 0
    %2118 = vmatpush1.bf16.msra.mxu0 0
    %2119 = vmatprep.subr.bf16.mxu0 0
    %2120 = vmatpush1.bf16.msra.mxu0 0
    %2121 = vmatprep.subr.bf16.mxu0 0
    %2122 = vmatpush1.bf16.msra.mxu0 0
    %2123 = vmatprep.subr.bf16.mxu0 0
    %2124 = vmatpush1.bf16.msra.mxu0 0
    %2125 = vmatprep.subr.bf16.mxu0 0
    %2126 = vmatpush1.bf16.msra.mxu0 0
    %2127 = vmatprep.subr.bf16.mxu0 0
    %2128 = vmatpush1.bf16.msra.mxu0 0
    %2129 = vmatprep.subr.bf16.mxu0 0
    %2130 = vmatpush1.bf16.msra.mxu0 0
    %2131 = vmatprep.subr.bf16.mxu0 0
    %2132 = vmatpush1.bf16.msra.mxu0 0
    %2133 = vmatprep.subr.bf16.mxu0 0
    %2134 = vmatpush1.bf16.msra.mxu0 0
    %2135 = vmatprep.mubr.bf16.mxu0 0
    %2136 = vmatmul.mubr.bf16.gmra.mrb[0].mxu0 %v2060
    %v2137 = vpop.f32.mrb[0].mxu0
    %v2138 = vadd.f32 %v2009, %v2137
    %v2139 = vpop.f32.mrb[0].mxu0
    %v2140 = vadd.f32 %v2013, %v2139
    %v2141 = vpop.f32.mrb[0].mxu0
    %v2142 = vpop.f32.mrb[0].mxu0
    %2143 = vdwg.mxu0
    %v2144 = vmax.f32 %v2097, 0.0
    %v2145 = vmax.f32 %v2099, 0.0
    %v2146 = vmax.f32 %v2138, 0.0
    %v2147 = vmax.f32 %v2140, 0.0
    %v2148 = vpack.c.bf16 %v2144, %v2144
    %v2149 = vpack.c.bf16 %v2145, %v2145
    %v2150 = vpack.c.bf16 %v2146, %v2146
    %v2151 = vpack.c.bf16 %v2147, %v2147
    %v2152 = vld [vmem:[#allocation5] sm:$0xff]
    %v2153 = vld [vmem:[#allocation5 + $0x8] sm:$0xff]
    %v2154 = vld [vmem:[#allocation5 + $0x10] sm:$0xff]
    %v2155 = vld [vmem:[#allocation5 + $0x18] sm:$0xf]
    %v2156 = vld [vmem:[#allocation5 + $0x1c] sm:$0xff]
    %v2157 = vld [vmem:[#allocation5 + $0x24] sm:$0xff]
    %v2158 = vld [vmem:[#allocation5 + $0x2c] sm:$0xff]
    %v2159 = vld [vmem:[#allocation5 + $0x34] sm:$0xf]
    %v2160 = vld [vmem:[#allocation5 + $0x38] sm:$0xff]
    %v2161 = vld [vmem:[#allocation5 + $0x40] sm:$0xff]
    %v2162 = vld [vmem:[#allocation5 + $0x48] sm:$0xff]
    %v2163 = vld [vmem:[#allocation5 + $0x50] sm:$0xf]
    %v2164 = vld [vmem:[#allocation5 + $0x54] sm:$0xff]
    %v2165 = vld [vmem:[#allocation5 + $0x5c] sm:$0xff]
    %v2166 = vld [vmem:[#allocation5 + $0x64] sm:$0xff]
    %v2167 = vld [vmem:[#allocation5 + $0x6c] sm:$0xf]
    %v2168 = vld [vmem:[#allocation5 + $0x70] sm:$0xff]
    %v2169 = vld [vmem:[#allocation5 + $0x78] sm:$0xff]
    %v2170 = vld [vmem:[#allocation5 + $0x80] sm:$0xff]
    %v2171 = vld [vmem:[#allocation5 + $0x88] sm:$0xf]
    %v2172 = vld [vmem:[#allocation5 + $0x8c] sm:$0xff]
    %v2173 = vld [vmem:[#allocation5 + $0x94] sm:$0xff]
    %v2174 = vld [vmem:[#allocation5 + $0x9c] sm:$0xff]
    %v2175 = vld [vmem:[#allocation5 + $0xa4] sm:$0xf]
    %v2176 = vld [vmem:[#allocation5 + $0xa8] sm:$0xff]
    %v2177 = vld [vmem:[#allocation5 + $0xb0] sm:$0xff]
    %v2178 = vld [vmem:[#allocation5 + $0xb8] sm:$0xff]
    %v2179 = vld [vmem:[#allocation5 + $0xc0] sm:$0xf]
    %v2180 = vld [vmem:[#allocation5 + $0xc4] sm:$0xff]
    %v2181 = vld [vmem:[#allocation5 + $0xcc] sm:$0xff]
    %v2182 = vld [vmem:[#allocation5 + $0xd4] sm:$0xff]
    %v2183 = vld [vmem:[#allocation5 + $0xdc] sm:$0xf]
    %v2184 = vld [vmem:[#allocation5 + $0xe0] sm:$0xff]
    %v2185 = vld [vmem:[#allocation5 + $0xe8] sm:$0xff]
    %v2186 = vld [vmem:[#allocation5 + $0xf0] sm:$0xff]
    %v2187 = vld [vmem:[#allocation5 + $0xf8] sm:$0xf]
    %v2188 = vld [vmem:[#allocation5 + $0xfc] sm:$0xff]
    %v2189 = vld [vmem:[#allocation5 + $0x104] sm:$0xff]
    %v2190 = vld [vmem:[#allocation5 + $0x10c] sm:$0xff]
    %v2191 = vld [vmem:[#allocation5 + $0x114] sm:$0xf]
    %v2192 = vld [vmem:[#allocation5 + $0x118] sm:$0xff]
    %v2193 = vld [vmem:[#allocation5 + $0x120] sm:$0xff]
    %v2194 = vld [vmem:[#allocation5 + $0x128] sm:$0xff]
    %v2195 = vld [vmem:[#allocation5 + $0x130] sm:$0xf]
    %v2196 = vld [vmem:[#allocation5 + $0x134] sm:$0xff]
    %v2197 = vld [vmem:[#allocation5 + $0x13c] sm:$0xff]
    %v2198 = vld [vmem:[#allocation5 + $0x144] sm:$0xff]
    %v2199 = vld [vmem:[#allocation5 + $0x14c] sm:$0xf]
    %v2200 = vld [vmem:[#allocation5 + $0x150] sm:$0xff]
    %v2201 = vld [vmem:[#allocation5 + $0x158] sm:$0xff]
    %v2202 = vld [vmem:[#allocation5 + $0x160] sm:$0xff]
    %v2203 = vld [vmem:[#allocation5 + $0x168] sm:$0xf]
    %v2204 = vld [vmem:[#allocation5 + $0x16c] sm:$0xff]
    %v2205 = vld [vmem:[#allocation5 + $0x174] sm:$0xff]
    %v2206 = vld [vmem:[#allocation5 + $0x17c] sm:$0xff]
    %v2207 = vld [vmem:[#allocation5 + $0x184] sm:$0xf]
    %v2208 = vld [vmem:[#allocation5 + $0x188] sm:$0xff]
    %v2209 = vld [vmem:[#allocation5 + $0x190] sm:$0xff]
    %v2210 = vld [vmem:[#allocation5 + $0x198] sm:$0xff]
    %v2211 = vld [vmem:[#allocation5 + $0x1a0] sm:$0xf]
    %v2212 = vld [vmem:[#allocation5 + $0x1a4] sm:$0xff]
    %v2213 = vld [vmem:[#allocation5 + $0x1ac] sm:$0xff]
    %v2214 = vld [vmem:[#allocation5 + $0x1b4] sm:$0xff]
    %v2215 = vld [vmem:[#allocation5 + $0x1bc] sm:$0xf]
    %v2216 = vld [vmem:[#allocation5 + $0x1c0] sm:$0xff]
    %v2217 = vld [vmem:[#allocation5 + $0x1c8] sm:$0xff]
    %v2218 = vld [vmem:[#allocation5 + $0x1d0] sm:$0xff]
    %v2219 = vld [vmem:[#allocation5 + $0x1d8] sm:$0xf]
    %v2220 = vld [vmem:[#allocation5 + $0x1dc] sm:$0xff]
    %v2221 = vld [vmem:[#allocation5 + $0x1e4] sm:$0xff]
    %v2222 = vld [vmem:[#allocation5 + $0x1ec] sm:$0xff]
    %v2223 = vld [vmem:[#allocation5 + $0x1f4] sm:$0xf]
    %v2224 = vld [vmem:[#allocation5 + $0x1f8] sm:$0xff]
    %v2225 = vld [vmem:[#allocation5 + $0x200] sm:$0xff]
    %v2226 = vld [vmem:[#allocation5 + $0x208] sm:$0xff]
    %v2227 = vld [vmem:[#allocation5 + $0x210] sm:$0xf]
    %v2228 = vld [vmem:[#allocation5 + $0x214] sm:$0xff]
    %v2229 = vld [vmem:[#allocation5 + $0x21c] sm:$0xff]
    %v2230 = vld [vmem:[#allocation5 + $0x224] sm:$0xff]
    %v2231 = vld [vmem:[#allocation5 + $0x22c] sm:$0xf]
    %v2232 = vld [vmem:[#allocation5 + $0x230] sm:$0xff]
    %v2233 = vld [vmem:[#allocation5 + $0x238] sm:$0xff]
    %v2234 = vld [vmem:[#allocation5 + $0x240] sm:$0xff]
    %v2235 = vld [vmem:[#allocation5 + $0x248] sm:$0xf]
    %v2236 = vld [vmem:[#allocation5 + $0x24c] sm:$0xff]
    %v2237 = vld [vmem:[#allocation5 + $0x254] sm:$0xff]
    %v2238 = vld [vmem:[#allocation5 + $0x25c] sm:$0xff]
    %v2239 = vld [vmem:[#allocation5 + $0x264] sm:$0xf]
    %v2240 = vld [vmem:[#allocation5 + $0x268] sm:$0xff]
    %v2241 = vld [vmem:[#allocation5 + $0x270] sm:$0xff]
    %v2242 = vld [vmem:[#allocation5 + $0x278] sm:$0xff]
    %v2243 = vld [vmem:[#allocation5 + $0x280] sm:$0xf]
    %v2244 = vld [vmem:[#allocation5 + $0x284] sm:$0xff]
    %v2245 = vld [vmem:[#allocation5 + $0x28c] sm:$0xff]
    %v2246 = vld [vmem:[#allocation5 + $0x294] sm:$0xff]
    %v2247 = vld [vmem:[#allocation5 + $0x29c] sm:$0xf]
    %v2248 = vld [vmem:[#allocation5 + $0x2a0] sm:$0xff]
    %v2249 = vld [vmem:[#allocation5 + $0x2a8] sm:$0xff]
    %v2250 = vld [vmem:[#allocation5 + $0x2b0] sm:$0xff]
    %v2251 = vld [vmem:[#allocation5 + $0x2b8] sm:$0xf]
    %v2252 = vld [vmem:[#allocation5 + $0x2bc] sm:$0xff]
    %v2253 = vld [vmem:[#allocation5 + $0x2c4] sm:$0xff]
    %v2254 = vld [vmem:[#allocation5 + $0x2cc] sm:$0xff]
    %v2255 = vld [vmem:[#allocation5 + $0x2d4] sm:$0xf]
    %v2256 = vld [vmem:[#allocation5 + $0x2d8] sm:$0xff]
    %v2257 = vld [vmem:[#allocation5 + $0x2e0] sm:$0xff]
    %v2258 = vld [vmem:[#allocation5 + $0x2e8] sm:$0xff]
    %v2259 = vld [vmem:[#allocation5 + $0x2f0] sm:$0xf]
    %v2260 = vld [vmem:[#allocation5 + $0x2f4] sm:$0xff]
    %v2261 = vld [vmem:[#allocation5 + $0x2fc] sm:$0xff]
    %v2262 = vld [vmem:[#allocation5 + $0x304] sm:$0xff]
    %v2263 = vld [vmem:[#allocation5 + $0x30c] sm:$0xf]
    %v2264 = vld [vmem:[#allocation5 + $0x310] sm:$0xff]
    %v2265 = vld [vmem:[#allocation5 + $0x318] sm:$0xff]
    %v2266 = vld [vmem:[#allocation5 + $0x320] sm:$0xff]
    %v2267 = vld [vmem:[#allocation5 + $0x328] sm:$0xf]
    %v2268 = vld [vmem:[#allocation5 + $0x32c] sm:$0xff]
    %v2269 = vld [vmem:[#allocation5 + $0x334] sm:$0xff]
    %v2270 = vld [vmem:[#allocation5 + $0x33c] sm:$0xff]
    %v2271 = vld [vmem:[#allocation5 + $0x344] sm:$0xf]
    %v2272 = vld [vmem:[#allocation5 + $0x348] sm:$0xff]
    %v2273 = vld [vmem:[#allocation5 + $0x350] sm:$0xff]
    %v2274 = vld [vmem:[#allocation5 + $0x358] sm:$0xff]
    %v2275 = vld [vmem:[#allocation5 + $0x360] sm:$0xf]
    %v2276 = vld [vmem:[#allocation5 + $0x364] sm:$0xff]
    %v2277 = vld [vmem:[#allocation5 + $0x36c] sm:$0xff]
    %v2278 = vld [vmem:[#allocation5 + $0x374] sm:$0xff]
    %v2279 = vld [vmem:[#allocation5 + $0x37c] sm:$0xf]
    %v2280 = vld [vmem:[#allocation5 + $0x380] sm:$0xff]
    %v2281 = vld [vmem:[#allocation5 + $0x388] sm:$0xff]
    %v2282 = vld [vmem:[#allocation5 + $0x390] sm:$0xff]
    %v2283 = vld [vmem:[#allocation5 + $0x398] sm:$0xf]
    %v2284 = vld [vmem:[#allocation5 + $0x39c] sm:$0xff]
    %v2285 = vld [vmem:[#allocation5 + $0x3a4] sm:$0xff]
    %v2286 = vld [vmem:[#allocation5 + $0x3ac] sm:$0xff]
    %v2287 = vld [vmem:[#allocation5 + $0x3b4] sm:$0xf]
    %v2288 = vld [vmem:[#allocation5 + $0x3b8] sm:$0xff]
    %v2289 = vld [vmem:[#allocation5 + $0x3c0] sm:$0xff]
    %v2290 = vld [vmem:[#allocation5 + $0x3c8] sm:$0xff]
    %v2291 = vld [vmem:[#allocation5 + $0x3d0] sm:$0xf]
    %v2292 = vld [vmem:[#allocation5 + $0x3d4] sm:$0xff]
    %v2293 = vld [vmem:[#allocation5 + $0x3dc] sm:$0xff]
    %v2294 = vld [vmem:[#allocation5 + $0x3e4] sm:$0xff]
    %v2295 = vld [vmem:[#allocation5 + $0x3ec] sm:$0xf]
    %v2296 = vld [vmem:[#allocation5 + $0x3f0] sm:$0xff]
    %v2297 = vld [vmem:[#allocation5 + $0x3f8] sm:$0xff]
    %v2298 = vld [vmem:[#allocation5 + $0x400] sm:$0xff]
    %v2299 = vld [vmem:[#allocation5 + $0x408] sm:$0xf]
    %v2300 = vld [vmem:[#allocation5 + $0x40c] sm:$0xff]
    %v2301 = vld [vmem:[#allocation5 + $0x414] sm:$0xff]
    %v2302 = vld [vmem:[#allocation5 + $0x41c] sm:$0xff]
    %v2303 = vld [vmem:[#allocation5 + $0x424] sm:$0xf]
    %v2304 = vld [vmem:[#allocation5 + $0x428] sm:$0xff]
    %v2305 = vld [vmem:[#allocation5 + $0x430] sm:$0xff]
    %v2306 = vld [vmem:[#allocation5 + $0x438] sm:$0xff]
    %v2307 = vld [vmem:[#allocation5 + $0x440] sm:$0xf]
    %v2308 = vld [vmem:[#allocation5 + $0x444] sm:$0xff]
    %v2309 = vld [vmem:[#allocation5 + $0x44c] sm:$0xff]
    %v2310 = vld [vmem:[#allocation5 + $0x454] sm:$0xff]
    %v2311 = vld [vmem:[#allocation5 + $0x45c] sm:$0xf]
    %v2312 = vld [vmem:[#allocation5 + $0x460] sm:$0xff]
    %v2313 = vld [vmem:[#allocation5 + $0x468] sm:$0xff]
    %v2314 = vld [vmem:[#allocation5 + $0x470] sm:$0xff]
    %v2315 = vld [vmem:[#allocation5 + $0x478] sm:$0xf]
    %v2316 = vld [vmem:[#allocation5 + $0x47c] sm:$0xff]
    %v2317 = vld [vmem:[#allocation5 + $0x484] sm:$0xff]
    %v2318 = vld [vmem:[#allocation5 + $0x48c] sm:$0xff]
    %v2319 = vld [vmem:[#allocation5 + $0x494] sm:$0xf]
    %v2320 = vld [vmem:[#allocation5 + $0x498] sm:$0xff]
    %v2321 = vld [vmem:[#allocation5 + $0x4a0] sm:$0xff]
    %v2322 = vld [vmem:[#allocation5 + $0x4a8] sm:$0xff]
    %v2323 = vld [vmem:[#allocation5 + $0x4b0] sm:$0xf]
    %v2324 = vld [vmem:[#allocation5 + $0x4b4] sm:$0xff]
    %v2325 = vld [vmem:[#allocation5 + $0x4bc] sm:$0xff]
    %v2326 = vld [vmem:[#allocation5 + $0x4c4] sm:$0xff]
    %v2327 = vld [vmem:[#allocation5 + $0x4cc] sm:$0xf]
    %v2328 = vld [vmem:[#allocation5 + $0x4d0] sm:$0xff]
    %v2329 = vld [vmem:[#allocation5 + $0x4d8] sm:$0xff]
    %v2330 = vld [vmem:[#allocation5 + $0x4e0] sm:$0xff]
    %v2331 = vld [vmem:[#allocation5 + $0x4e8] sm:$0xf]
    %v2332 = vld [vmem:[#allocation5 + $0x4ec] sm:$0xff]
    %v2333 = vld [vmem:[#allocation5 + $0x4f4] sm:$0xff]
    %v2334 = vld [vmem:[#allocation5 + $0x4fc] sm:$0xff]
    %v2335 = vld [vmem:[#allocation5 + $0x504] sm:$0xf]
    %v2336 = vld [vmem:[#allocation5 + $0x508] sm:$0xff]
    %v2337 = vld [vmem:[#allocation5 + $0x510] sm:$0xff]
    %v2338 = vld [vmem:[#allocation5 + $0x518] sm:$0xff]
    %v2339 = vld [vmem:[#allocation5 + $0x520] sm:$0xf]
    %v2340 = vld [vmem:[#allocation5 + $0x524] sm:$0xff]
    %v2341 = vld [vmem:[#allocation5 + $0x52c] sm:$0xff]
    %v2342 = vld [vmem:[#allocation5 + $0x534] sm:$0xff]
    %v2343 = vld [vmem:[#allocation5 + $0x53c] sm:$0xf]
    %v2344 = vld [vmem:[#allocation5 + $0x540] sm:$0xff]
    %v2345 = vld [vmem:[#allocation5 + $0x548] sm:$0xff]
    %v2346 = vld [vmem:[#allocation5 + $0x550] sm:$0xff]
    %v2347 = vld [vmem:[#allocation5 + $0x558] sm:$0xf]
    %v2348 = vld [vmem:[#allocation5 + $0x55c] sm:$0xff]
    %v2349 = vld [vmem:[#allocation5 + $0x564] sm:$0xff]
    %v2350 = vld [vmem:[#allocation5 + $0x56c] sm:$0xff]
    %v2351 = vld [vmem:[#allocation5 + $0x574] sm:$0xf]
    %v2352 = vld [vmem:[#allocation5 + $0x578] sm:$0xff]
    %v2353 = vld [vmem:[#allocation5 + $0x580] sm:$0xff]
    %v2354 = vld [vmem:[#allocation5 + $0x588] sm:$0xff]
    %v2355 = vld [vmem:[#allocation5 + $0x590] sm:$0xf]
    %v2356 = vld [vmem:[#allocation5 + $0x594] sm:$0xff]
    %v2357 = vld [vmem:[#allocation5 + $0x59c] sm:$0xff]
    %v2358 = vld [vmem:[#allocation5 + $0x5a4] sm:$0xff]
    %v2359 = vld [vmem:[#allocation5 + $0x5ac] sm:$0xf]
    %v2360 = vld [vmem:[#allocation5 + $0x5b0] sm:$0xff]
    %v2361 = vld [vmem:[#allocation5 + $0x5b8] sm:$0xff]
    %v2362 = vld [vmem:[#allocation5 + $0x5c0] sm:$0xff]
    %v2363 = vld [vmem:[#allocation5 + $0x5c8] sm:$0xf]
    %v2364 = vld [vmem:[#allocation5 + $0x5cc] sm:$0xff]
    %v2365 = vld [vmem:[#allocation5 + $0x5d4] sm:$0xff]
    %v2366 = vld [vmem:[#allocation5 + $0x5dc] sm:$0xff]
    %v2367 = vld [vmem:[#allocation5 + $0x5e4] sm:$0xf]
    %v2368 = vld [vmem:[#allocation5 + $0x5e8] sm:$0xff]
    %v2369 = vld [vmem:[#allocation5 + $0x5f0] sm:$0xff]
    %v2370 = vld [vmem:[#allocation5 + $0x5f8] sm:$0xff]
    %v2371 = vld [vmem:[#allocation5 + $0x600] sm:$0xf]
    %v2372 = vld [vmem:[#allocation5 + $0x604] sm:$0xff]
    %v2373 = vld [vmem:[#allocation5 + $0x60c] sm:$0xff]
    %v2374 = vld [vmem:[#allocation5 + $0x614] sm:$0xff]
    %v2375 = vld [vmem:[#allocation5 + $0x61c] sm:$0xf]
    %v2376 = vld [vmem:[#allocation5 + $0x620] sm:$0xff]
    %v2377 = vld [vmem:[#allocation5 + $0x628] sm:$0xff]
    %v2378 = vld [vmem:[#allocation5 + $0x630] sm:$0xff]
    %v2379 = vld [vmem:[#allocation5 + $0x638] sm:$0xf]
    %v2380 = vld [vmem:[#allocation5 + $0x63c] sm:$0xff]
    %v2381 = vld [vmem:[#allocation5 + $0x644] sm:$0xff]
    %v2382 = vld [vmem:[#allocation5 + $0x64c] sm:$0xff]
    %v2383 = vld [vmem:[#allocation5 + $0x654] sm:$0xf]
    %v2384 = vld [vmem:[#allocation5 + $0x658] sm:$0xff]
    %v2385 = vld [vmem:[#allocation5 + $0x660] sm:$0xff]
    %v2386 = vld [vmem:[#allocation5 + $0x668] sm:$0xff]
    %v2387 = vld [vmem:[#allocation5 + $0x670] sm:$0xf]
    %v2388 = vld [vmem:[#allocation5 + $0x674] sm:$0xff]
    %v2389 = vld [vmem:[#allocation5 + $0x67c] sm:$0xff]
    %v2390 = vld [vmem:[#allocation5 + $0x684] sm:$0xff]
    %v2391 = vld [vmem:[#allocation5 + $0x68c] sm:$0xf]
    %v2392 = vld [vmem:[#allocation5 + $0x690] sm:$0xff]
    %v2393 = vld [vmem:[#allocation5 + $0x698] sm:$0xff]
    %v2394 = vld [vmem:[#allocation5 + $0x6a0] sm:$0xff]
    %v2395 = vld [vmem:[#allocation5 + $0x6a8] sm:$0xf]
    %v2396 = vld [vmem:[#allocation5 + $0x6ac] sm:$0xff]
    %v2397 = vld [vmem:[#allocation5 + $0x6b4] sm:$0xff]
    %v2398 = vld [vmem:[#allocation5 + $0x6bc] sm:$0xff]
    %v2399 = vld [vmem:[#allocation5 + $0x6c4] sm:$0xf]
    %v2400 = vld [vmem:[#allocation5 + $0x6c8] sm:$0xff]
    %v2401 = vld [vmem:[#allocation5 + $0x6d0] sm:$0xff]
    %v2402 = vld [vmem:[#allocation5 + $0x6d8] sm:$0xff]
    %v2403 = vld [vmem:[#allocation5 + $0x6e0] sm:$0xf]
    %v2404 = vld [vmem:[#allocation5 + $0x6e4] sm:$0xff]
    %v2405 = vld [vmem:[#allocation5 + $0x6ec] sm:$0xff]
    %v2406 = vld [vmem:[#allocation5 + $0x6f4] sm:$0xff]
    %v2407 = vld [vmem:[#allocation5 + $0x6fc] sm:$0xf]
    %v2408 = vld [vmem:[%s9] sm:$0xff]
    %v2410 = vlaneseq
    %v2411 = vshrl.u32 %v2410, 7
    %v2412 = vsub.s32 0, %v2411
    %v2413 = vrot.slane %v2408, %v2412
    %v2414 = vlaneseq
    %v2415 = vshrl.u32 %v2414, 7
    %v2416 = vsub.s32 1, %v2415
    %v2417 = vrot.slane %v2408, %v2416
    %v2418 = vlaneseq
    %v2419 = vshrl.u32 %v2418, 7
    %v2420 = vsub.s32 2, %v2419
    %v2421 = vrot.slane %v2408, %v2420
    %v2422 = vlaneseq
    %v2423 = vshrl.u32 %v2422, 7
    %v2424 = vsub.s32 3, %v2423
    %v2425 = vrot.slane %v2408, %v2424
    %v2426 = vlaneseq
    %v2427 = vshrl.u32 %v2426, 7
    %v2428 = vsub.s32 4, %v2427
    %v2429 = vrot.slane %v2408, %v2428
    %v2430 = vlaneseq
    %v2431 = vshrl.u32 %v2430, 7
    %v2432 = vsub.s32 5, %v2431
    %v2433 = vrot.slane %v2408, %v2432
    %v2434 = vlaneseq
    %v2435 = vshrl.u32 %v2434, 7
    %v2436 = vsub.s32 6, %v2435
    %v2437 = vrot.slane %v2408, %v2436
    %v2701 = vunpack.c.l.b16 %v2152
    %v2702 = vunpack.c.h.b16 %v2152
    %v2703 = vunpack.c.l.b16 %v2153
    %v2704 = vunpack.c.h.b16 %v2153
    %v2705 = vunpack.c.l.b16 %v2154
    %v2706 = vunpack.c.h.b16 %v2154
    %v2707 = vunpack.c.l.b16 %v2155
    %v2708 = vunpack.c.l.b16 %v2156
    %v2709 = vunpack.c.h.b16 %v2156
    %v2710 = vunpack.c.l.b16 %v2157
    %v2711 = vunpack.c.h.b16 %v2157
    %v2712 = vunpack.c.l.b16 %v2158
    %v2713 = vunpack.c.h.b16 %v2158
    %v2714 = vunpack.c.l.b16 %v2159
    %v2715 = vunpack.c.l.b16 %v2160
    %v2716 = vunpack.c.h.b16 %v2160
    %v2717 = vunpack.c.l.b16 %v2161
    %v2718 = vunpack.c.h.b16 %v2161
    %v2719 = vunpack.c.l.b16 %v2162
    %v2720 = vunpack.c.h.b16 %v2162
    %v2721 = vunpack.c.l.b16 %v2163
    %v2722 = vunpack.c.l.b16 %v2164
    %v2723 = vunpack.c.h.b16 %v2164
    %v2724 = vunpack.c.l.b16 %v2165
    %v2725 = vunpack.c.h.b16 %v2165
    %v2726 = vunpack.c.l.b16 %v2166
    %v2727 = vunpack.c.h.b16 %v2166
    %v2728 = vunpack.c.l.b16 %v2167
    %v2729 = vunpack.c.l.b16 %v2168
    %v2730 = vunpack.c.h.b16 %v2168
    %v2731 = vunpack.c.l.b16 %v2169
    %v2732 = vunpack.c.h.b16 %v2169
    %v2733 = vunpack.c.l.b16 %v2170
    %v2734 = vunpack.c.h.b16 %v2170
    %v2735 = vunpack.c.l.b16 %v2171
    %v2736 = vunpack.c.l.b16 %v2172
    %v2737 = vunpack.c.h.b16 %v2172
    %v2738 = vunpack.c.l.b16 %v2173
    %v2739 = vunpack.c.h.b16 %v2173
    %v2740 = vunpack.c.l.b16 %v2174
    %v2741 = vunpack.c.h.b16 %v2174
    %v2742 = vunpack.c.l.b16 %v2175
    %v2743 = vunpack.c.l.b16 %v2176
    %v2744 = vunpack.c.h.b16 %v2176
    %v2745 = vunpack.c.l.b16 %v2177
    %v2746 = vunpack.c.h.b16 %v2177
    %v2747 = vunpack.c.l.b16 %v2178
    %v2748 = vunpack.c.h.b16 %v2178
    %v2749 = vunpack.c.l.b16 %v2179
    %v2750 = vunpack.c.l.b16 %v2180
    %v2751 = vunpack.c.h.b16 %v2180
    %v2752 = vunpack.c.l.b16 %v2181
    %v2753 = vunpack.c.h.b16 %v2181
    %v2754 = vunpack.c.l.b16 %v2182
    %v2755 = vunpack.c.h.b16 %v2182
    %v2756 = vunpack.c.l.b16 %v2183
    %v2757 = vunpack.c.l.b16 %v2184
    %v2758 = vunpack.c.h.b16 %v2184
    %v2759 = vunpack.c.l.b16 %v2185
    %v2760 = vunpack.c.h.b16 %v2185
    %v2761 = vunpack.c.l.b16 %v2186
    %v2762 = vunpack.c.h.b16 %v2186
    %v2763 = vunpack.c.l.b16 %v2187
    %v2764 = vunpack.c.l.b16 %v2188
    %v2765 = vunpack.c.h.b16 %v2188
    %v2766 = vunpack.c.l.b16 %v2189
    %v2767 = vunpack.c.h.b16 %v2189
    %v2768 = vunpack.c.l.b16 %v2190
    %v2769 = vunpack.c.h.b16 %v2190
    %v2770 = vunpack.c.l.b16 %v2191
    %v2771 = vunpack.c.l.b16 %v2192
    %v2772 = vunpack.c.h.b16 %v2192
    %v2773 = vunpack.c.l.b16 %v2193
    %v2774 = vunpack.c.h.b16 %v2193
    %v2775 = vunpack.c.l.b16 %v2194
    %v2776 = vunpack.c.h.b16 %v2194
    %v2777 = vunpack.c.l.b16 %v2195
    %v2778 = vunpack.c.l.b16 %v2196
    %v2779 = vunpack.c.h.b16 %v2196
    %v2780 = vunpack.c.l.b16 %v2197
    %v2781 = vunpack.c.h.b16 %v2197
    %v2782 = vunpack.c.l.b16 %v2198
    %v2783 = vunpack.c.h.b16 %v2198
    %v2784 = vunpack.c.l.b16 %v2199
    %v2785 = vunpack.c.l.b16 %v2200
    %v2786 = vunpack.c.h.b16 %v2200
    %v2787 = vunpack.c.l.b16 %v2201
    %v2788 = vunpack.c.h.b16 %v2201
    %v2789 = vunpack.c.l.b16 %v2202
    %v2790 = vunpack.c.h.b16 %v2202
    %v2791 = vunpack.c.l.b16 %v2203
    %v2792 = vunpack.c.l.b16 %v2204
    %v2793 = vunpack.c.h.b16 %v2204
    %v2794 = vunpack.c.l.b16 %v2205
    %v2795 = vunpack.c.h.b16 %v2205
    %v2796 = vunpack.c.l.b16 %v2206
    %v2797 = vunpack.c.h.b16 %v2206
    %v2798 = vunpack.c.l.b16 %v2207
    %v2799 = vunpack.c.l.b16 %v2208
    %v2800 = vunpack.c.h.b16 %v2208
    %v2801 = vunpack.c.l.b16 %v2209
    %v2802 = vunpack.c.h.b16 %v2209
    %v2803 = vunpack.c.l.b16 %v2210
    %v2804 = vunpack.c.h.b16 %v2210
    %v2805 = vunpack.c.l.b16 %v2211
    %v2806 = vunpack.c.l.b16 %v2212
    %v2807 = vunpack.c.h.b16 %v2212
    %v2808 = vunpack.c.l.b16 %v2213
    %v2809 = vunpack.c.h.b16 %v2213
    %v2810 = vunpack.c.l.b16 %v2214
    %v2811 = vunpack.c.h.b16 %v2214
    %v2812 = vunpack.c.l.b16 %v2215
    %v2813 = vunpack.c.l.b16 %v2216
    %v2814 = vunpack.c.h.b16 %v2216
    %v2815 = vunpack.c.l.b16 %v2217
    %v2816 = vunpack.c.h.b16 %v2217
    %v2817 = vunpack.c.l.b16 %v2218
    %v2818 = vunpack.c.h.b16 %v2218
    %v2819 = vunpack.c.l.b16 %v2219
    %v2820 = vunpack.c.l.b16 %v2220
    %v2821 = vunpack.c.h.b16 %v2220
    %v2822 = vunpack.c.l.b16 %v2221
    %v2823 = vunpack.c.h.b16 %v2221
    %v2824 = vunpack.c.l.b16 %v2222
    %v2825 = vunpack.c.h.b16 %v2222
    %v2826 = vunpack.c.l.b16 %v2223
    %v2827 = vunpack.c.l.b16 %v2224
    %v2828 = vunpack.c.h.b16 %v2224
    %v2829 = vunpack.c.l.b16 %v2225
    %v2830 = vunpack.c.h.b16 %v2225
    %v2831 = vunpack.c.l.b16 %v2226
    %v2832 = vunpack.c.h.b16 %v2226
    %v2833 = vunpack.c.l.b16 %v2227
    %v2834 = vunpack.c.l.b16 %v2228
    %v2835 = vunpack.c.h.b16 %v2228
    %v2836 = vunpack.c.l.b16 %v2229
    %v2837 = vunpack.c.h.b16 %v2229
    %v2838 = vunpack.c.l.b16 %v2230
    %v2839 = vunpack.c.h.b16 %v2230
    %v2840 = vunpack.c.l.b16 %v2231
    %v2841 = vunpack.c.l.b16 %v2232
    %v2842 = vunpack.c.h.b16 %v2232
    %v2843 = vunpack.c.l.b16 %v2233
    %v2844 = vunpack.c.h.b16 %v2233
    %v2845 = vunpack.c.l.b16 %v2234
    %v2846 = vunpack.c.h.b16 %v2234
    %v2847 = vunpack.c.l.b16 %v2235
    %v2848 = vunpack.c.l.b16 %v2236
    %v2849 = vunpack.c.h.b16 %v2236
    %v2850 = vunpack.c.l.b16 %v2237
    %v2851 = vunpack.c.h.b16 %v2237
    %v2852 = vunpack.c.l.b16 %v2238
    %v2853 = vunpack.c.h.b16 %v2238
    %v2854 = vunpack.c.l.b16 %v2239
    %v2855 = vunpack.c.l.b16 %v2240
    %v2856 = vunpack.c.h.b16 %v2240
    %v2857 = vunpack.c.l.b16 %v2241
    %v2858 = vunpack.c.h.b16 %v2241
    %v2859 = vunpack.c.l.b16 %v2242
    %v2860 = vunpack.c.h.b16 %v2242
    %v2861 = vunpack.c.l.b16 %v2243
    %v2862 = vunpack.c.l.b16 %v2244
    %v2863 = vunpack.c.h.b16 %v2244
    %v2864 = vunpack.c.l.b16 %v2245
    %v2865 = vunpack.c.h.b16 %v2245
    %v2866 = vunpack.c.l.b16 %v2246
    %v2867 = vunpack.c.h.b16 %v2246
    %v2868 = vunpack.c.l.b16 %v2247
    %v2869 = vunpack.c.l.b16 %v2248
    %v2870 = vunpack.c.h.b16 %v2248
    %v2871 = vunpack.c.l.b16 %v2249
    %v2872 = vunpack.c.h.b16 %v2249
    %v2873 = vunpack.c.l.b16 %v2250
    %v2874 = vunpack.c.h.b16 %v2250
    %v2875 = vunpack.c.l.b16 %v2251
    %v2876 = vunpack.c.l.b16 %v2252
    %v2877 = vunpack.c.h.b16 %v2252
    %v2878 = vunpack.c.l.b16 %v2253
    %v2879 = vunpack.c.h.b16 %v2253
    %v2880 = vunpack.c.l.b16 %v2254
    %v2881 = vunpack.c.h.b16 %v2254
    %v2882 = vunpack.c.l.b16 %v2255
    %v2883 = vunpack.c.l.b16 %v2256
    %v2884 = vunpack.c.h.b16 %v2256
    %v2885 = vunpack.c.l.b16 %v2257
    %v2886 = vunpack.c.h.b16 %v2257
    %v2887 = vunpack.c.l.b16 %v2258
    %v2888 = vunpack.c.h.b16 %v2258
    %v2889 = vunpack.c.l.b16 %v2259
    %v2890 = vunpack.c.l.b16 %v2260
    %v2891 = vunpack.c.h.b16 %v2260
    %v2892 = vunpack.c.l.b16 %v2261
    %v2893 = vunpack.c.h.b16 %v2261
    %v2894 = vunpack.c.l.b16 %v2262
    %v2895 = vunpack.c.h.b16 %v2262
    %v2896 = vunpack.c.l.b16 %v2263
    %v2897 = vunpack.c.l.b16 %v2264
    %v2898 = vunpack.c.h.b16 %v2264
    %v2899 = vunpack.c.l.b16 %v2265
    %v2900 = vunpack.c.h.b16 %v2265
    %v2901 = vunpack.c.l.b16 %v2266
    %v2902 = vunpack.c.h.b16 %v2266
    %v2903 = vunpack.c.l.b16 %v2267
    %v2904 = vunpack.c.l.b16 %v2268
    %v2905 = vunpack.c.h.b16 %v2268
    %v2906 = vunpack.c.l.b16 %v2269
    %v2907 = vunpack.c.h.b16 %v2269
    %v2908 = vunpack.c.l.b16 %v2270
    %v2909 = vunpack.c.h.b16 %v2270
    %v2910 = vunpack.c.l.b16 %v2271
    %v2911 = vunpack.c.l.b16 %v2272
    %v2912 = vunpack.c.h.b16 %v2272
    %v2913 = vunpack.c.l.b16 %v2273
    %v2914 = vunpack.c.h.b16 %v2273
    %v2915 = vunpack.c.l.b16 %v2274
    %v2916 = vunpack.c.h.b16 %v2274
    %v2917 = vunpack.c.l.b16 %v2275
    %v2918 = vunpack.c.l.b16 %v2276
    %v2919 = vunpack.c.h.b16 %v2276
    %v2920 = vunpack.c.l.b16 %v2277
    %v2921 = vunpack.c.h.b16 %v2277
    %v2922 = vunpack.c.l.b16 %v2278
    %v2923 = vunpack.c.h.b16 %v2278
    %v2924 = vunpack.c.l.b16 %v2279
    %v2925 = vunpack.c.l.b16 %v2280
    %v2926 = vunpack.c.h.b16 %v2280
    %v2927 = vunpack.c.l.b16 %v2281
    %v2928 = vunpack.c.h.b16 %v2281
    %v2929 = vunpack.c.l.b16 %v2282
    %v2930 = vunpack.c.h.b16 %v2282
    %v2931 = vunpack.c.l.b16 %v2283
    %v2932 = vunpack.c.l.b16 %v2284
    %v2933 = vunpack.c.h.b16 %v2284
    %v2934 = vunpack.c.l.b16 %v2285
    %v2935 = vunpack.c.h.b16 %v2285
    %v2936 = vunpack.c.l.b16 %v2286
    %v2937 = vunpack.c.h.b16 %v2286
    %v2938 = vunpack.c.l.b16 %v2287
    %v2939 = vunpack.c.l.b16 %v2288
    %v2940 = vunpack.c.h.b16 %v2288
    %v2941 = vunpack.c.l.b16 %v2289
    %v2942 = vunpack.c.h.b16 %v2289
    %v2943 = vunpack.c.l.b16 %v2290
    %v2944 = vunpack.c.h.b16 %v2290
    %v2945 = vunpack.c.l.b16 %v2291
    %v2946 = vunpack.c.l.b16 %v2292
    %v2947 = vunpack.c.h.b16 %v2292
    %v2948 = vunpack.c.l.b16 %v2293
    %v2949 = vunpack.c.h.b16 %v2293
    %v2950 = vunpack.c.l.b16 %v2294
    %v2951 = vunpack.c.h.b16 %v2294
    %v2952 = vunpack.c.l.b16 %v2295
    %v2953 = vunpack.c.l.b16 %v2296
    %v2954 = vunpack.c.h.b16 %v2296
    %v2955 = vunpack.c.l.b16 %v2297
    %v2956 = vunpack.c.h.b16 %v2297
    %v2957 = vunpack.c.l.b16 %v2298
    %v2958 = vunpack.c.h.b16 %v2298
    %v2959 = vunpack.c.l.b16 %v2299
    %v2960 = vunpack.c.l.b16 %v2300
    %v2961 = vunpack.c.h.b16 %v2300
    %v2962 = vunpack.c.l.b16 %v2301
    %v2963 = vunpack.c.h.b16 %v2301
    %v2964 = vunpack.c.l.b16 %v2302
    %v2965 = vunpack.c.h.b16 %v2302
    %v2966 = vunpack.c.l.b16 %v2303
    %v2967 = vunpack.c.l.b16 %v2304
    %v2968 = vunpack.c.h.b16 %v2304
    %v2969 = vunpack.c.l.b16 %v2305
    %v2970 = vunpack.c.h.b16 %v2305
    %v2971 = vunpack.c.l.b16 %v2306
    %v2972 = vunpack.c.h.b16 %v2306
    %v2973 = vunpack.c.l.b16 %v2307
    %v2974 = vunpack.c.l.b16 %v2308
    %v2975 = vunpack.c.h.b16 %v2308
    %v2976 = vunpack.c.l.b16 %v2309
    %v2977 = vunpack.c.h.b16 %v2309
    %v2978 = vunpack.c.l.b16 %v2310
    %v2979 = vunpack.c.h.b16 %v2310
    %v2980 = vunpack.c.l.b16 %v2311
    %v2981 = vunpack.c.l.b16 %v2312
    %v2982 = vunpack.c.h.b16 %v2312
    %v2983 = vunpack.c.l.b16 %v2313
    %v2984 = vunpack.c.h.b16 %v2313
    %v2985 = vunpack.c.l.b16 %v2314
    %v2986 = vunpack.c.h.b16 %v2314
    %v2987 = vunpack.c.l.b16 %v2315
    %v2988 = vunpack.c.l.b16 %v2316
    %v2989 = vunpack.c.h.b16 %v2316
    %v2990 = vunpack.c.l.b16 %v2317
    %v2991 = vunpack.c.h.b16 %v2317
    %v2992 = vunpack.c.l.b16 %v2318
    %v2993 = vunpack.c.h.b16 %v2318
    %v2994 = vunpack.c.l.b16 %v2319
    %v2995 = vunpack.c.l.b16 %v2320
    %v2996 = vunpack.c.h.b16 %v2320
    %v2997 = vunpack.c.l.b16 %v2321
    %v2998 = vunpack.c.h.b16 %v2321
    %v2999 = vunpack.c.l.b16 %v2322
    %v3000 = vunpack.c.h.b16 %v2322
    %v3001 = vunpack.c.l.b16 %v2323
    %v3002 = vunpack.c.l.b16 %v2324
    %v3003 = vunpack.c.h.b16 %v2324
    %v3004 = vunpack.c.l.b16 %v2325
    %v3005 = vunpack.c.h.b16 %v2325
    %v3006 = vunpack.c.l.b16 %v2326
    %v3007 = vunpack.c.h.b16 %v2326
    %v3008 = vunpack.c.l.b16 %v2327
    %v3009 = vunpack.c.l.b16 %v2328
    %v3010 = vunpack.c.h.b16 %v2328
    %v3011 = vunpack.c.l.b16 %v2329
    %v3012 = vunpack.c.h.b16 %v2329
    %v3013 = vunpack.c.l.b16 %v2330
    %v3014 = vunpack.c.h.b16 %v2330
    %v3015 = vunpack.c.l.b16 %v2331
    %v3016 = vunpack.c.l.b16 %v2332
    %v3017 = vunpack.c.h.b16 %v2332
    %v3018 = vunpack.c.l.b16 %v2333
    %v3019 = vunpack.c.h.b16 %v2333
    %v3020 = vunpack.c.l.b16 %v2334
    %v3021 = vunpack.c.h.b16 %v2334
    %v3022 = vunpack.c.l.b16 %v2335
    %v3023 = vunpack.c.l.b16 %v2336
    %v3024 = vunpack.c.h.b16 %v2336
    %v3025 = vunpack.c.l.b16 %v2337
    %v3026 = vunpack.c.h.b16 %v2337
    %v3027 = vunpack.c.l.b16 %v2338
    %v3028 = vunpack.c.h.b16 %v2338
    %v3029 = vunpack.c.l.b16 %v2339
    %v3030 = vunpack.c.l.b16 %v2340
    %v3031 = vunpack.c.h.b16 %v2340
    %v3032 = vunpack.c.l.b16 %v2341
    %v3033 = vunpack.c.h.b16 %v2341
    %v3034 = vunpack.c.l.b16 %v2342
    %v3035 = vunpack.c.h.b16 %v2342
    %v3036 = vunpack.c.l.b16 %v2343
    %v3037 = vunpack.c.l.b16 %v2344
    %v3038 = vunpack.c.h.b16 %v2344
    %v3039 = vunpack.c.l.b16 %v2345
    %v3040 = vunpack.c.h.b16 %v2345
    %v3041 = vunpack.c.l.b16 %v2346
    %v3042 = vunpack.c.h.b16 %v2346
    %v3043 = vunpack.c.l.b16 %v2347
    %v3044 = vunpack.c.l.b16 %v2348
    %v3045 = vunpack.c.h.b16 %v2348
    %v3046 = vunpack.c.l.b16 %v2349
    %v3047 = vunpack.c.h.b16 %v2349
    %v3048 = vunpack.c.l.b16 %v2350
    %v3049 = vunpack.c.h.b16 %v2350
    %v3050 = vunpack.c.l.b16 %v2351
    %v3051 = vunpack.c.l.b16 %v2352
    %v3052 = vunpack.c.h.b16 %v2352
    %v3053 = vunpack.c.l.b16 %v2353
    %v3054 = vunpack.c.h.b16 %v2353
    %v3055 = vunpack.c.l.b16 %v2354
    %v3056 = vunpack.c.h.b16 %v2354
    %v3057 = vunpack.c.l.b16 %v2355
    %v3058 = vunpack.c.l.b16 %v2356
    %v3059 = vunpack.c.h.b16 %v2356
    %v3060 = vunpack.c.l.b16 %v2357
    %v3061 = vunpack.c.h.b16 %v2357
    %v3062 = vunpack.c.l.b16 %v2358
    %v3063 = vunpack.c.h.b16 %v2358
    %v3064 = vunpack.c.l.b16 %v2359
    %v3065 = vunpack.c.l.b16 %v2360
    %v3066 = vunpack.c.h.b16 %v2360
    %v3067 = vunpack.c.l.b16 %v2361
    %v3068 = vunpack.c.h.b16 %v2361
    %v3069 = vunpack.c.l.b16 %v2362
    %v3070 = vunpack.c.h.b16 %v2362
    %v3071 = vunpack.c.l.b16 %v2363
    %v3072 = vunpack.c.l.b16 %v2364
    %v3073 = vunpack.c.h.b16 %v2364
    %v3074 = vunpack.c.l.b16 %v2365
    %v3075 = vunpack.c.h.b16 %v2365
    %v3076 = vunpack.c.l.b16 %v2366
    %v3077 = vunpack.c.h.b16 %v2366
    %v3078 = vunpack.c.l.b16 %v2367
    %v3079 = vunpack.c.l.b16 %v2368
    %v3080 = vunpack.c.h.b16 %v2368
    %v3081 = vunpack.c.l.b16 %v2369
    %v3082 = vunpack.c.h.b16 %v2369
    %v3083 = vunpack.c.l.b16 %v2370
    %v3084 = vunpack.c.h.b16 %v2370
    %v3085 = vunpack.c.l.b16 %v2371
    %v3086 = vunpack.c.l.b16 %v2372
    %v3087 = vunpack.c.h.b16 %v2372
    %v3088 = vunpack.c.l.b16 %v2373
    %v3089 = vunpack.c.h.b16 %v2373
    %v3090 = vunpack.c.l.b16 %v2374
    %v3091 = vunpack.c.h.b16 %v2374
    %v3092 = vunpack.c.l.b16 %v2375
    %v3093 = vunpack.c.l.b16 %v2376
    %v3094 = vunpack.c.h.b16 %v2376
    %v3095 = vunpack.c.l.b16 %v2377
    %v3096 = vunpack.c.h.b16 %v2377
    %v3097 = vunpack.c.l.b16 %v2378
    %v3098 = vunpack.c.h.b16 %v2378
    %v3099 = vunpack.c.l.b16 %v2379
    %v3100 = vunpack.c.l.b16 %v2380
    %v3101 = vunpack.c.h.b16 %v2380
    %v3102 = vunpack.c.l.b16 %v2381
    %v3103 = vunpack.c.h.b16 %v2381
    %v3104 = vunpack.c.l.b16 %v2382
    %v3105 = vunpack.c.h.b16 %v2382
    %v3106 = vunpack.c.l.b16 %v2383
    %v3107 = vunpack.c.l.b16 %v2384
    %v3108 = vunpack.c.h.b16 %v2384
    %v3109 = vunpack.c.l.b16 %v2385
    %v3110 = vunpack.c.h.b16 %v2385
    %v3111 = vunpack.c.l.b16 %v2386
    %v3112 = vunpack.c.h.b16 %v2386
    %v3113 = vunpack.c.l.b16 %v2387
    %v3114 = vunpack.c.l.b16 %v2388
    %v3115 = vunpack.c.h.b16 %v2388
    %v3116 = vunpack.c.l.b16 %v2389
    %v3117 = vunpack.c.h.b16 %v2389
    %v3118 = vunpack.c.l.b16 %v2390
    %v3119 = vunpack.c.h.b16 %v2390
    %v3120 = vunpack.c.l.b16 %v2391
    %v3121 = vunpack.c.l.b16 %v2392
    %v3122 = vunpack.c.h.b16 %v2392
    %v3123 = vunpack.c.l.b16 %v2393
    %v3124 = vunpack.c.h.b16 %v2393
    %v3125 = vunpack.c.l.b16 %v2394
    %v3126 = vunpack.c.h.b16 %v2394
    %v3127 = vunpack.c.l.b16 %v2395
    %v3128 = vunpack.c.l.b16 %v2396
    %v3129 = vunpack.c.h.b16 %v2396
    %v3130 = vunpack.c.l.b16 %v2397
    %v3131 = vunpack.c.h.b16 %v2397
    %v3132 = vunpack.c.l.b16 %v2398
    %v3133 = vunpack.c.h.b16 %v2398
    %v3134 = vunpack.c.l.b16 %v2399
    %v3135 = vunpack.c.l.b16 %v2400
    %v3136 = vunpack.c.h.b16 %v2400
    %v3137 = vunpack.c.l.b16 %v2401
    %v3138 = vunpack.c.h.b16 %v2401
    %v3139 = vunpack.c.l.b16 %v2402
    %v3140 = vunpack.c.h.b16 %v2402
    %v3141 = vunpack.c.l.b16 %v2403
    %v3142 = vunpack.c.l.b16 %v2404
    %v3143 = vunpack.c.h.b16 %v2404
    %v3144 = vunpack.c.l.b16 %v2405
    %v3145 = vunpack.c.h.b16 %v2405
    %v3146 = vunpack.c.l.b16 %v2406
    %v3147 = vunpack.c.h.b16 %v2406
    %v3148 = vunpack.c.l.b16 %v2407
    %v3149 = vpack.c.b16 %v2708, %v2701
    %v3150 = vpack.c.b16 %v2709, %v2702
    %v3151 = vpack.c.b16 %v2710, %v2703
    %v3152 = vpack.c.b16 %v2711, %v2704
    %v3153 = vpack.c.b16 %v2712, %v2705
    %v3154 = vpack.c.b16 %v2713, %v2706
    %v3155 = vpack.c.b16 %v2714, %v2707
    %v3156 = vpack.c.b16 %v2722, %v2715
    %v3157 = vpack.c.b16 %v2723, %v2716
    %v3158 = vpack.c.b16 %v2724, %v2717
    %v3159 = vpack.c.b16 %v2725, %v2718
    %v3160 = vpack.c.b16 %v2726, %v2719
    %v3161 = vpack.c.b16 %v2727, %v2720
    %v3162 = vpack.c.b16 %v2728, %v2721
    %v3163 = vpack.c.b16 %v2736, %v2729
    %v3164 = vpack.c.b16 %v2737, %v2730
    %v3165 = vpack.c.b16 %v2738, %v2731
    %v3166 = vpack.c.b16 %v2739, %v2732
    %v3167 = vpack.c.b16 %v2740, %v2733
    %v3168 = vpack.c.b16 %v2741, %v2734
    %v3169 = vpack.c.b16 %v2742, %v2735
    %v3170 = vpack.c.b16 %v2750, %v2743
    %v3171 = vpack.c.b16 %v2751, %v2744
    %v3172 = vpack.c.b16 %v2752, %v2745
    %v3173 = vpack.c.b16 %v2753, %v2746
    %v3174 = vpack.c.b16 %v2754, %v2747
    %v3175 = vpack.c.b16 %v2755, %v2748
    %v3176 = vpack.c.b16 %v2756, %v2749
    %v3177 = vpack.c.b16 %v2764, %v2757
    %v3178 = vpack.c.b16 %v2765, %v2758
    %v3179 = vpack.c.b16 %v2766, %v2759
    %v3180 = vpack.c.b16 %v2767, %v2760
    %v3181 = vpack.c.b16 %v2768, %v2761
    %v3182 = vpack.c.b16 %v2769, %v2762
    %v3183 = vpack.c.b16 %v2770, %v2763
    %v3184 = vpack.c.b16 %v2778, %v2771
    %v3185 = vpack.c.b16 %v2779, %v2772
    %v3186 = vpack.c.b16 %v2780, %v2773
    %v3187 = vpack.c.b16 %v2781, %v2774
    %v3188 = vpack.c.b16 %v2782, %v2775
    %v3189 = vpack.c.b16 %v2783, %v2776
    %v3190 = vpack.c.b16 %v2784, %v2777
    %v3191 = vpack.c.b16 %v2792, %v2785
    %v3192 = vpack.c.b16 %v2793, %v2786
    %v3193 = vpack.c.b16 %v2794, %v2787
    %v3194 = vpack.c.b16 %v2795, %v2788
    %v3195 = vpack.c.b16 %v2796, %v2789
    %v3196 = vpack.c.b16 %v2797, %v2790
    %v3197 = vpack.c.b16 %v2798, %v2791
    %v3198 = vpack.c.b16 %v2806, %v2799
    %v3199 = vpack.c.b16 %v2807, %v2800
    %v3200 = vpack.c.b16 %v2808, %v2801
    %v3201 = vpack.c.b16 %v2809, %v2802
    %v3202 = vpack.c.b16 %v2810, %v2803
    %v3203 = vpack.c.b16 %v2811, %v2804
    %v3204 = vpack.c.b16 %v2812, %v2805
    %v3205 = vpack.c.b16 %v2820, %v2813
    %v3206 = vpack.c.b16 %v2821, %v2814
    %v3207 = vpack.c.b16 %v2822, %v2815
    %v3208 = vpack.c.b16 %v2823, %v2816
    %v3209 = vpack.c.b16 %v2824, %v2817
    %v3210 = vpack.c.b16 %v2825, %v2818
    %v3211 = vpack.c.b16 %v2826, %v2819
    %v3212 = vpack.c.b16 %v2834, %v2827
    %v3213 = vpack.c.b16 %v2835, %v2828
    %v3214 = vpack.c.b16 %v2836, %v2829
    %v3215 = vpack.c.b16 %v2837, %v2830
    %v3216 = vpack.c.b16 %v2838, %v2831
    %v3217 = vpack.c.b16 %v2839, %v2832
    %v3218 = vpack.c.b16 %v2840, %v2833
    %v3219 = vpack.c.b16 %v2848, %v2841
    %v3220 = vpack.c.b16 %v2849, %v2842
    %v3221 = vpack.c.b16 %v2850, %v2843
    %v3222 = vpack.c.b16 %v2851, %v2844
    %v3223 = vpack.c.b16 %v2852, %v2845
    %v3224 = vpack.c.b16 %v2853, %v2846
    %v3225 = vpack.c.b16 %v2854, %v2847
    %v3226 = vpack.c.b16 %v2862, %v2855
    %v3227 = vpack.c.b16 %v2863, %v2856
    %v3228 = vpack.c.b16 %v2864, %v2857
    %v3229 = vpack.c.b16 %v2865, %v2858
    %v3230 = vpack.c.b16 %v2866, %v2859
    %v3231 = vpack.c.b16 %v2867, %v2860
    %v3232 = vpack.c.b16 %v2868, %v2861
    %v3233 = vpack.c.b16 %v2876, %v2869
    %v3234 = vpack.c.b16 %v2877, %v2870
    %v3235 = vpack.c.b16 %v2878, %v2871
    %v3236 = vpack.c.b16 %v2879, %v2872
    %v3237 = vpack.c.b16 %v2880, %v2873
    %v3238 = vpack.c.b16 %v2881, %v2874
    %v3239 = vpack.c.b16 %v2882, %v2875
    %v3240 = vpack.c.b16 %v2890, %v2883
    %v3241 = vpack.c.b16 %v2891, %v2884
    %v3242 = vpack.c.b16 %v2892, %v2885
    %v3243 = vpack.c.b16 %v2893, %v2886
    %v3244 = vpack.c.b16 %v2894, %v2887
    %v3245 = vpack.c.b16 %v2895, %v2888
    %v3246 = vpack.c.b16 %v2896, %v2889
    %v3247 = vpack.c.b16 %v2904, %v2897
    %v3248 = vpack.c.b16 %v2905, %v2898
    %v3249 = vpack.c.b16 %v2906, %v2899
    %v3250 = vpack.c.b16 %v2907, %v2900
    %v3251 = vpack.c.b16 %v2908, %v2901
    %v3252 = vpack.c.b16 %v2909, %v2902
    %v3253 = vpack.c.b16 %v2910, %v2903
    %v3254 = vpack.c.b16 %v2918, %v2911
    %v3255 = vpack.c.b16 %v2919, %v2912
    %v3256 = vpack.c.b16 %v2920, %v2913
    %v3257 = vpack.c.b16 %v2921, %v2914
    %v3258 = vpack.c.b16 %v2922, %v2915
    %v3259 = vpack.c.b16 %v2923, %v2916
    %v3260 = vpack.c.b16 %v2924, %v2917
    %v3261 = vpack.c.b16 %v2932, %v2925
    %v3262 = vpack.c.b16 %v2933, %v2926
    %v3263 = vpack.c.b16 %v2934, %v2927
    %v3264 = vpack.c.b16 %v2935, %v2928
    %v3265 = vpack.c.b16 %v2936, %v2929
    %v3266 = vpack.c.b16 %v2937, %v2930
    %v3267 = vpack.c.b16 %v2938, %v2931
    %v3268 = vpack.c.b16 %v2946, %v2939
    %v3269 = vpack.c.b16 %v2947, %v2940
    %v3270 = vpack.c.b16 %v2948, %v2941
    %v3271 = vpack.c.b16 %v2949, %v2942
    %v3272 = vpack.c.b16 %v2950, %v2943
    %v3273 = vpack.c.b16 %v2951, %v2944
    %v3274 = vpack.c.b16 %v2952, %v2945
    %v3275 = vpack.c.b16 %v2960, %v2953
    %v3276 = vpack.c.b16 %v2961, %v2954
    %v3277 = vpack.c.b16 %v2962, %v2955
    %v3278 = vpack.c.b16 %v2963, %v2956
    %v3279 = vpack.c.b16 %v2964, %v2957
    %v3280 = vpack.c.b16 %v2965, %v2958
    %v3281 = vpack.c.b16 %v2966, %v2959
    %v3282 = vpack.c.b16 %v2974, %v2967
    %v3283 = vpack.c.b16 %v2975, %v2968
    %v3284 = vpack.c.b16 %v2976, %v2969
    %v3285 = vpack.c.b16 %v2977, %v2970
    %v3286 = vpack.c.b16 %v2978, %v2971
    %v3287 = vpack.c.b16 %v2979, %v2972
    %v3288 = vpack.c.b16 %v2980, %v2973
    %v3289 = vpack.c.b16 %v2988, %v2981
    %v3290 = vpack.c.b16 %v2989, %v2982
    %v3291 = vpack.c.b16 %v2990, %v2983
    %v3292 = vpack.c.b16 %v2991, %v2984
    %v3293 = vpack.c.b16 %v2992, %v2985
    %v3294 = vpack.c.b16 %v2993, %v2986
    %v3295 = vpack.c.b16 %v2994, %v2987
    %v3296 = vpack.c.b16 %v3002, %v2995
    %v3297 = vpack.c.b16 %v3003, %v2996
    %v3298 = vpack.c.b16 %v3004, %v2997
    %v3299 = vpack.c.b16 %v3005, %v2998
    %v3300 = vpack.c.b16 %v3006, %v2999
    %v3301 = vpack.c.b16 %v3007, %v3000
    %v3302 = vpack.c.b16 %v3008, %v3001
    %v3303 = vpack.c.b16 %v3016, %v3009
    %v3304 = vpack.c.b16 %v3017, %v3010
    %v3305 = vpack.c.b16 %v3018, %v3011
    %v3306 = vpack.c.b16 %v3019, %v3012
    %v3307 = vpack.c.b16 %v3020, %v3013
    %v3308 = vpack.c.b16 %v3021, %v3014
    %v3309 = vpack.c.b16 %v3022, %v3015
    %v3310 = vpack.c.b16 %v3030, %v3023
    %v3311 = vpack.c.b16 %v3031, %v3024
    %v3312 = vpack.c.b16 %v3032, %v3025
    %v3313 = vpack.c.b16 %v3033, %v3026
    %v3314 = vpack.c.b16 %v3034, %v3027
    %v3315 = vpack.c.b16 %v3035, %v3028
    %v3316 = vpack.c.b16 %v3036, %v3029
    %v3317 = vpack.c.b16 %v3044, %v3037
    %v3318 = vpack.c.b16 %v3045, %v3038
    %v3319 = vpack.c.b16 %v3046, %v3039
    %v3320 = vpack.c.b16 %v3047, %v3040
    %v3321 = vpack.c.b16 %v3048, %v3041
    %v3322 = vpack.c.b16 %v3049, %v3042
    %v3323 = vpack.c.b16 %v3050, %v3043
    %v3324 = vpack.c.b16 %v3058, %v3051
    %v3325 = vpack.c.b16 %v3059, %v3052
    %v3326 = vpack.c.b16 %v3060, %v3053
    %v3327 = vpack.c.b16 %v3061, %v3054
    %v3328 = vpack.c.b16 %v3062, %v3055
    %v3329 = vpack.c.b16 %v3063, %v3056
    %v3330 = vpack.c.b16 %v3064, %v3057
    %v3331 = vpack.c.b16 %v3072, %v3065
    %v3332 = vpack.c.b16 %v3073, %v3066
    %v3333 = vpack.c.b16 %v3074, %v3067
    %v3334 = vpack.c.b16 %v3075, %v3068
    %v3335 = vpack.c.b16 %v3076, %v3069
    %v3336 = vpack.c.b16 %v3077, %v3070
    %v3337 = vpack.c.b16 %v3078, %v3071
    %v3338 = vpack.c.b16 %v3086, %v3079
    %v3339 = vpack.c.b16 %v3087, %v3080
    %v3340 = vpack.c.b16 %v3088, %v3081
    %v3341 = vpack.c.b16 %v3089, %v3082
    %v3342 = vpack.c.b16 %v3090, %v3083
    %v3343 = vpack.c.b16 %v3091, %v3084
    %v3344 = vpack.c.b16 %v3092, %v3085
    %v3345 = vpack.c.b16 %v3100, %v3093
    %v3346 = vpack.c.b16 %v3101, %v3094
    %v3347 = vpack.c.b16 %v3102, %v3095
    %v3348 = vpack.c.b16 %v3103, %v3096
    %v3349 = vpack.c.b16 %v3104, %v3097
    %v3350 = vpack.c.b16 %v3105, %v3098
    %v3351 = vpack.c.b16 %v3106, %v3099
    %v3352 = vpack.c.b16 %v3114, %v3107
    %v3353 = vpack.c.b16 %v3115, %v3108
    %v3354 = vpack.c.b16 %v3116, %v3109
    %v3355 = vpack.c.b16 %v3117, %v3110
    %v3356 = vpack.c.b16 %v3118, %v3111
    %v3357 = vpack.c.b16 %v3119, %v3112
    %v3358 = vpack.c.b16 %v3120, %v3113
    %v3359 = vpack.c.b16 %v3128, %v3121
    %v3360 = vpack.c.b16 %v3129, %v3122
    %v3361 = vpack.c.b16 %v3130, %v3123
    %v3362 = vpack.c.b16 %v3131, %v3124
    %v3363 = vpack.c.b16 %v3132, %v3125
    %v3364 = vpack.c.b16 %v3133, %v3126
    %v3365 = vpack.c.b16 %v3134, %v3127
    %v3366 = vpack.c.b16 %v3142, %v3135
    %v3367 = vpack.c.b16 %v3143, %v3136
    %v3368 = vpack.c.b16 %v3144, %v3137
    %v3369 = vpack.c.b16 %v3145, %v3138
    %v3370 = vpack.c.b16 %v3146, %v3139
    %v3371 = vpack.c.b16 %v3147, %v3140
    %v3372 = vpack.c.b16 %v3148, %v3141
    %3597 = vmatprep.subr.bf16.mxu0 %v3150
    %3598 = vmatpush1.bf16.msra.mxu0 %v3149
    %3599 = vmatprep.subr.bf16.mxu0 %v3157
    %3600 = vmatpush1.bf16.msra.mxu0 %v3156
    %3601 = vmatprep.subr.bf16.mxu0 %v3164
    %3602 = vmatpush1.bf16.msra.mxu0 %v3163
    %3603 = vmatprep.subr.bf16.mxu0 %v3171
    %3604 = vmatpush1.bf16.msra.mxu0 %v3170
    %3605 = vmatprep.subr.bf16.mxu0 %v3178
    %3606 = vmatpush1.bf16.msra.mxu0 %v3177
    %3607 = vmatprep.subr.bf16.mxu0 %v3185
    %3608 = vmatpush1.bf16.msra.mxu0 %v3184
    %3609 = vmatprep.subr.bf16.mxu0 %v3192
    %3610 = vmatpush1.bf16.msra.mxu0 %v3191
    %3611 = vmatprep.subr.bf16.mxu0 %v3199
    %3612 = vmatpush1.bf16.msra.mxu0 %v3198
    %3613 = vmatprep.subr.bf16.mxu0 %v3206
    %3614 = vmatpush1.bf16.msra.mxu0 %v3205
    %3615 = vmatprep.subr.bf16.mxu0 %v3213
    %3616 = vmatpush1.bf16.msra.mxu0 %v3212
    %3617 = vmatprep.subr.bf16.mxu0 %v3220
    %3618 = vmatpush1.bf16.msra.mxu0 %v3219
    %3619 = vmatprep.subr.bf16.mxu0 %v3227
    %3620 = vmatpush1.bf16.msra.mxu0 %v3226
    %3621 = vmatprep.subr.bf16.mxu0 %v3234
    %3622 = vmatpush1.bf16.msra.mxu0 %v3233
    %3623 = vmatprep.subr.bf16.mxu0 %v3241
    %3624 = vmatpush1.bf16.msra.mxu0 %v3240
    %3625 = vmatprep.subr.bf16.mxu0 %v3248
    %3626 = vmatpush1.bf16.msra.mxu0 %v3247
    %3627 = vmatprep.subr.bf16.mxu0 %v3255
    %3628 = vmatpush1.bf16.msra.mxu0 %v3254
    %3629 = vmatprep.mubr.bf16.mxu0 %v2149
    %3630 = vmatmul.mubr.bf16.gmra.mrb[0].mxu0 %v2148
    %v3631 = vpop.f32.mrb[0].mxu0
    %v3632 = vadd.f32 %v2413, %v3631
    %v3633 = vpop.f32.mrb[0].mxu0
    %v3634 = vadd.f32 %v2417, %v3633
    %v3635 = vpop.f32.mrb[0].mxu0
    %v3636 = vpop.f32.mrb[0].mxu0
    %3637 = vdwg.mxu0
    %3638 = vmatprep.subr.bf16.mxu0 %v3262
    %3639 = vmatpush1.bf16.msra.mxu0 %v3261
    %3640 = vmatprep.subr.bf16.mxu0 %v3269
    %3641 = vmatpush1.bf16.msra.mxu0 %v3268
    %3642 = vmatprep.subr.bf16.mxu0 %v3276
    %3643 = vmatpush1.bf16.msra.mxu0 %v3275
    %3644 = vmatprep.subr.bf16.mxu0 %v3283
    %3645 = vmatpush1.bf16.msra.mxu0 %v3282
    %3646 = vmatprep.subr.bf16.mxu0 %v3290
    %3647 = vmatpush1.bf16.msra.mxu0 %v3289
    %3648 = vmatprep.subr.bf16.mxu0 %v3297
    %3649 = vmatpush1.bf16.msra.mxu0 %v3296
    %3650 = vmatprep.subr.bf16.mxu0 %v3304
    %3651 = vmatpush1.bf16.msra.mxu0 %v3303
    %3652 = vmatprep.subr.bf16.mxu0 %v3311
    %3653 = vmatpush1.bf16.msra.mxu0 %v3310
    %3654 = vmatprep.subr.bf16.mxu0 %v3318
    %3655 = vmatpush1.bf16.msra.mxu0 %v3317
    %3656 = vmatprep.subr.bf16.mxu0 %v3325
    %3657 = vmatpush1.bf16.msra.mxu0 %v3324
    %3658 = vmatprep.subr.bf16.mxu0 %v3332
    %3659 = vmatpush1.bf16.msra.mxu0 %v3331
    %3660 = vmatprep.subr.bf16.mxu0 %v3339
    %3661 = vmatpush1.bf16.msra.mxu0 %v3338
    %3662 = vmatprep.subr.bf16.mxu0 %v3346
    %3663 = vmatpush1.bf16.msra.mxu0 %v3345
    %3664 = vmatprep.subr.bf16.mxu0 %v3353
    %3665 = vmatpush1.bf16.msra.mxu0 %v3352
    %3666 = vmatprep.subr.bf16.mxu0 %v3360
    %3667 = vmatpush1.bf16.msra.mxu0 %v3359
    %3668 = vmatprep.subr.bf16.mxu0 %v3367
    %3669 = vmatpush1.bf16.msra.mxu0 %v3366
    %3670 = vmatprep.mubr.bf16.mxu0 %v2151
    %3671 = vmatmul.mubr.bf16.gmra.mrb[0].mxu0 %v2150
    %v3672 = vpop.f32.mrb[0].mxu0
    %v3673 = vadd.f32 %v3632, %v3672
    %v3674 = vpop.f32.mrb[0].mxu0
    %v3675 = vadd.f32 %v3634, %v3674
    %v3676 = vpop.f32.mrb[0].mxu0
    %v3677 = vpop.f32.mrb[0].mxu0
    %3678 = vdwg.mxu0
    %3679 = vmatprep.subr.bf16.mxu0 %v3152
    %3680 = vmatpush1.bf16.msra.mxu0 %v3151
    %3681 = vmatprep.subr.bf16.mxu0 %v3159
    %3682 = vmatpush1.bf16.msra.mxu0 %v3158
    %3683 = vmatprep.subr.bf16.mxu0 %v3166
    %3684 = vmatpush1.bf16.msra.mxu0 %v3165
    %3685 = vmatprep.subr.bf16.mxu0 %v3173
    %3686 = vmatpush1.bf16.msra.mxu0 %v3172
    %3687 = vmatprep.subr.bf16.mxu0 %v3180
    %3688 = vmatpush1.bf16.msra.mxu0 %v3179
    %3689 = vmatprep.subr.bf16.mxu0 %v3187
    %3690 = vmatpush1.bf16.msra.mxu0 %v3186
    %3691 = vmatprep.subr.bf16.mxu0 %v3194
    %3692 = vmatpush1.bf16.msra.mxu0 %v3193
    %3693 = vmatprep.subr.bf16.mxu0 %v3201
    %3694 = vmatpush1.bf16.msra.mxu0 %v3200
    %3695 = vmatprep.subr.bf16.mxu0 %v3208
    %3696 = vmatpush1.bf16.msra.mxu0 %v3207
    %3697 = vmatprep.subr.bf16.mxu0 %v3215
    %3698 = vmatpush1.bf16.msra.mxu0 %v3214
    %3699 = vmatprep.subr.bf16.mxu0 %v3222
    %3700 = vmatpush1.bf16.msra.mxu0 %v3221
    %3701 = vmatprep.subr.bf16.mxu0 %v3229
    %3702 = vmatpush1.bf16.msra.mxu0 %v3228
    %3703 = vmatprep.subr.bf16.mxu0 %v3236
    %3704 = vmatpush1.bf16.msra.mxu0 %v3235
    %3705 = vmatprep.subr.bf16.mxu0 %v3243
    %3706 = vmatpush1.bf16.msra.mxu0 %v3242
    %3707 = vmatprep.subr.bf16.mxu0 %v3250
    %3708 = vmatpush1.bf16.msra.mxu0 %v3249
    %3709 = vmatprep.subr.bf16.mxu0 %v3257
    %3710 = vmatpush1.bf16.msra.mxu0 %v3256
    %3711 = vmatprep.mubr.bf16.mxu0 %v2149
    %3712 = vmatmul.mubr.bf16.gmra.mrb[0].mxu0 %v2148
    %v3713 = vpop.f32.mrb[0].mxu0
    %v3714 = vadd.f32 %v2421, %v3713
    %v3715 = vpop.f32.mrb[0].mxu0
    %v3716 = vadd.f32 %v2425, %v3715
    %v3717 = vpop.f32.mrb[0].mxu0
    %v3718 = vpop.f32.mrb[0].mxu0
    %3719 = vdwg.mxu0
    %3720 = vmatprep.subr.bf16.mxu0 %v3264
    %3721 = vmatpush1.bf16.msra.mxu0 %v3263
    %3722 = vmatprep.subr.bf16.mxu0 %v3271
    %3723 = vmatpush1.bf16.msra.mxu0 %v3270
    %3724 = vmatprep.subr.bf16.mxu0 %v3278
    %3725 = vmatpush1.bf16.msra.mxu0 %v3277
    %3726 = vmatprep.subr.bf16.mxu0 %v3285
    %3727 = vmatpush1.bf16.msra.mxu0 %v3284
    %3728 = vmatprep.subr.bf16.mxu0 %v3292
    %3729 = vmatpush1.bf16.msra.mxu0 %v3291
    %3730 = vmatprep.subr.bf16.mxu0 %v3299
    %3731 = vmatpush1.bf16.msra.mxu0 %v3298
    %3732 = vmatprep.subr.bf16.mxu0 %v3306
    %3733 = vmatpush1.bf16.msra.mxu0 %v3305
    %3734 = vmatprep.subr.bf16.mxu0 %v3313
    %3735 = vmatpush1.bf16.msra.mxu0 %v3312
    %3736 = vmatprep.subr.bf16.mxu0 %v3320
    %3737 = vmatpush1.bf16.msra.mxu0 %v3319
    %3738 = vmatprep.subr.bf16.mxu0 %v3327
    %3739 = vmatpush1.bf16.msra.mxu0 %v3326
    %3740 = vmatprep.subr.bf16.mxu0 %v3334
    %3741 = vmatpush1.bf16.msra.mxu0 %v3333
    %3742 = vmatprep.subr.bf16.mxu0 %v3341
    %3743 = vmatpush1.bf16.msra.mxu0 %v3340
    %3744 = vmatprep.subr.bf16.mxu0 %v3348
    %3745 = vmatpush1.bf16.msra.mxu0 %v3347
    %3746 = vmatprep.subr.bf16.mxu0 %v3355
    %3747 = vmatpush1.bf16.msra.mxu0 %v3354
    %3748 = vmatprep.subr.bf16.mxu0 %v3362
    %3749 = vmatpush1.bf16.msra.mxu0 %v3361
    %3750 = vmatprep.subr.bf16.mxu0 %v3369
    %3751 = vmatpush1.bf16.msra.mxu0 %v3368
    %3752 = vmatprep.mubr.bf16.mxu0 %v2151
    %3753 = vmatmul.mubr.bf16.gmra.mrb[0].mxu0 %v2150
    %v3754 = vpop.f32.mrb[0].mxu0
    %v3755 = vadd.f32 %v3714, %v3754
    %v3756 = vpop.f32.mrb[0].mxu0
    %v3757 = vadd.f32 %v3716, %v3756
    %v3758 = vpop.f32.mrb[0].mxu0
    %v3759 = vpop.f32.mrb[0].mxu0
    %3760 = vdwg.mxu0
    %3761 = vmatprep.subr.bf16.mxu0 %v3154
    %3762 = vmatpush1.bf16.msra.mxu0 %v3153
    %3763 = vmatprep.subr.bf16.mxu0 %v3161
    %3764 = vmatpush1.bf16.msra.mxu0 %v3160
    %3765 = vmatprep.subr.bf16.mxu0 %v3168
    %3766 = vmatpush1.bf16.msra.mxu0 %v3167
    %3767 = vmatprep.subr.bf16.mxu0 %v3175
    %3768 = vmatpush1.bf16.msra.mxu0 %v3174
    %3769 = vmatprep.subr.bf16.mxu0 %v3182
    %3770 = vmatpush1.bf16.msra.mxu0 %v3181
    %3771 = vmatprep.subr.bf16.mxu0 %v3189
    %3772 = vmatpush1.bf16.msra.mxu0 %v3188
    %3773 = vmatprep.subr.bf16.mxu0 %v3196
    %3774 = vmatpush1.bf16.msra.mxu0 %v3195
    %3775 = vmatprep.subr.bf16.mxu0 %v3203
    %3776 = vmatpush1.bf16.msra.mxu0 %v3202
    %3777 = vmatprep.subr.bf16.mxu0 %v3210
    %3778 = vmatpush1.bf16.msra.mxu0 %v3209
    %3779 = vmatprep.subr.bf16.mxu0 %v3217
    %3780 = vmatpush1.bf16.msra.mxu0 %v3216
    %3781 = vmatprep.subr.bf16.mxu0 %v3224
    %3782 = vmatpush1.bf16.msra.mxu0 %v3223
    %3783 = vmatprep.subr.bf16.mxu0 %v3231
    %3784 = vmatpush1.bf16.msra.mxu0 %v3230
    %3785 = vmatprep.subr.bf16.mxu0 %v3238
    %3786 = vmatpush1.bf16.msra.mxu0 %v3237
    %3787 = vmatprep.subr.bf16.mxu0 %v3245
    %3788 = vmatpush1.bf16.msra.mxu0 %v3244
    %3789 = vmatprep.subr.bf16.mxu0 %v3252
    %3790 = vmatpush1.bf16.msra.mxu0 %v3251
    %3791 = vmatprep.subr.bf16.mxu0 %v3259
    %3792 = vmatpush1.bf16.msra.mxu0 %v3258
    %3793 = vmatprep.mubr.bf16.mxu0 %v2149
    %3794 = vmatmul.mubr.bf16.gmra.mrb[0].mxu0 %v2148
    %v3795 = vpop.f32.mrb[0].mxu0
    %v3796 = vadd.f32 %v2429, %v3795
    %v3797 = vpop.f32.mrb[0].mxu0
    %v3798 = vadd.f32 %v2433, %v3797
    %v3799 = vpop.f32.mrb[0].mxu0
    %v3800 = vpop.f32.mrb[0].mxu0
    %3801 = vdwg.mxu0
    %3802 = vmatprep.subr.bf16.mxu0 %v3266
    %3803 = vmatpush1.bf16.msra.mxu0 %v3265
    %3804 = vmatprep.subr.bf16.mxu0 %v3273
    %3805 = vmatpush1.bf16.msra.mxu0 %v3272
    %3806 = vmatprep.subr.bf16.mxu0 %v3280
    %3807 = vmatpush1.bf16.msra.mxu0 %v3279
    %3808 = vmatprep.subr.bf16.mxu0 %v3287
    %3809 = vmatpush1.bf16.msra.mxu0 %v3286
    %3810 = vmatprep.subr.bf16.mxu0 %v3294
    %3811 = vmatpush1.bf16.msra.mxu0 %v3293
    %3812 = vmatprep.subr.bf16.mxu0 %v3301
    %3813 = vmatpush1.bf16.msra.mxu0 %v3300
    %3814 = vmatprep.subr.bf16.mxu0 %v3308
    %3815 = vmatpush1.bf16.msra.mxu0 %v3307
    %3816 = vmatprep.subr.bf16.mxu0 %v3315
    %3817 = vmatpush1.bf16.msra.mxu0 %v3314
    %3818 = vmatprep.subr.bf16.mxu0 %v3322
    %3819 = vmatpush1.bf16.msra.mxu0 %v3321
    %3820 = vmatprep.subr.bf16.mxu0 %v3329
    %3821 = vmatpush1.bf16.msra.mxu0 %v3328
    %3822 = vmatprep.subr.bf16.mxu0 %v3336
    %3823 = vmatpush1.bf16.msra.mxu0 %v3335
    %3824 = vmatprep.subr.bf16.mxu0 %v3343
    %3825 = vmatpush1.bf16.msra.mxu0 %v3342
    %3826 = vmatprep.subr.bf16.mxu0 %v3350
    %3827 = vmatpush1.bf16.msra.mxu0 %v3349
    %3828 = vmatprep.subr.bf16.mxu0 %v3357
    %3829 = vmatpush1.bf16.msra.mxu0 %v3356
    %3830 = vmatprep.subr.bf16.mxu0 %v3364
    %3831 = vmatpush1.bf16.msra.mxu0 %v3363
    %3832 = vmatprep.subr.bf16.mxu0 %v3371
    %3833 = vmatpush1.bf16.msra.mxu0 %v3370
    %3834 = vmatprep.mubr.bf16.mxu0 %v2151
    %3835 = vmatmul.mubr.bf16.gmra.mrb[0].mxu0 %v2150
    %v3836 = vpop.f32.mrb[0].mxu0
    %v3837 = vadd.f32 %v3796, %v3836
    %v3838 = vpop.f32.mrb[0].mxu0
    %v3839 = vadd.f32 %v3798, %v3838
    %v3840 = vpop.f32.mrb[0].mxu0
    %v3841 = vpop.f32.mrb[0].mxu0
    %3842 = vdwg.mxu0
    %3843 = vmatprep.subr.bf16.mxu0 0
    %3844 = vmatpush1.bf16.msra.mxu0 %v3155
    %3845 = vmatprep.subr.bf16.mxu0 0
    %3846 = vmatpush1.bf16.msra.mxu0 %v3162
    %3847 = vmatprep.subr.bf16.mxu0 0
    %3848 = vmatpush1.bf16.msra.mxu0 %v3169
    %3849 = vmatprep.subr.bf16.mxu0 0
    %3850 = vmatpush1.bf16.msra.mxu0 %v3176
    %3851 = vmatprep.subr.bf16.mxu0 0
    %3852 = vmatpush1.bf16.msra.mxu0 %v3183
    %3853 = vmatprep.subr.bf16.mxu0 0
    %3854 = vmatpush1.bf16.msra.mxu0 %v3190
    %3855 = vmatprep.subr.bf16.mxu0 0
    %3856 = vmatpush1.bf16.msra.mxu0 %v3197
    %3857 = vmatprep.subr.bf16.mxu0 0
    %3858 = vmatpush1.bf16.msra.mxu0 %v3204
    %3859 = vmatprep.subr.bf16.mxu0 0
    %3860 = vmatpush1.bf16.msra.mxu0 %v3211
    %3861 = vmatprep.subr.bf16.mxu0 0
    %3862 = vmatpush1.bf16.msra.mxu0 %v3218
    %3863 = vmatprep.subr.bf16.mxu0 0
    %3864 = vmatpush1.bf16.msra.mxu0 %v3225
    %3865 = vmatprep.subr.bf16.mxu0 0
    %3866 = vmatpush1.bf16.msra.mxu0 %v3232
    %3867 = vmatprep.subr.bf16.mxu0 0
    %3868 = vmatpush1.bf16.msra.mxu0 %v3239
    %3869 = vmatprep.subr.bf16.mxu0 0
    %3870 = vmatpush1.bf16.msra.mxu0 %v3246
    %3871 = vmatprep.subr.bf16.mxu0 0
    %3872 = vmatpush1.bf16.msra.mxu0 %v3253
    %3873 = vmatprep.subr.bf16.mxu0 0
    %3874 = vmatpush1.bf16.msra.mxu0 %v3260
    %3875 = vmatprep.mubr.bf16.mxu0 %v2149
    %3876 = vmatmul.mubr.bf16.gmra.mrb[0].mxu0 %v2148
    %v3877 = vpop.f32.mrb[0].mxu0
    %v3878 = vadd.f32 %v2437, %v3877
    %v3879 = vpop.f32.mrb[0].mxu0
    %v3880 = vpop.f32.mrb[0].mxu0
    %v3881 = vpop.f32.mrb[0].mxu0
    %3882 = vdwg.mxu0
    %3883 = vmatprep.subr.bf16.mxu0 0
    %3884 = vmatpush1.bf16.msra.mxu0 %v3267
    %3885 = vmatprep.subr.bf16.mxu0 0
    %3886 = vmatpush1.bf16.msra.mxu0 %v3274
    %3887 = vmatprep.subr.bf16.mxu0 0
    %3888 = vmatpush1.bf16.msra.mxu0 %v3281
    %3889 = vmatprep.subr.bf16.mxu0 0
    %3890 = vmatpush1.bf16.msra.mxu0 %v3288
    %3891 = vmatprep.subr.bf16.mxu0 0
    %3892 = vmatpush1.bf16.msra.mxu0 %v3295
    %3893 = vmatprep.subr.bf16.mxu0 0
    %3894 = vmatpush1.bf16.msra.mxu0 %v3302
    %3895 = vmatprep.subr.bf16.mxu0 0
    %3896 = vmatpush1.bf16.msra.mxu0 %v3309
    %3897 = vmatprep.subr.bf16.mxu0 0
    %3898 = vmatpush1.bf16.msra.mxu0 %v3316
    %3899 = vmatprep.subr.bf16.mxu0 0
    %3900 = vmatpush1.bf16.msra.mxu0 %v3323
    %3901 = vmatprep.subr.bf16.mxu0 0
    %3902 = vmatpush1.bf16.msra.mxu0 %v3330
    %3903 = vmatprep.subr.bf16.mxu0 0
    %3904 = vmatpush1.bf16.msra.mxu0 %v3337
    %3905 = vmatprep.subr.bf16.mxu0 0
    %3906 = vmatpush1.bf16.msra.mxu0 %v3344
    %3907 = vmatprep.subr.bf16.mxu0 0
    %3908 = vmatpush1.bf16.msra.mxu0 %v3351
    %3909 = vmatprep.subr.bf16.mxu0 0
    %3910 = vmatpush1.bf16.msra.mxu0 %v3358
    %3911 = vmatprep.subr.bf16.mxu0 0
    %3912 = vmatpush1.bf16.msra.mxu0 %v3365
    %3913 = vmatprep.subr.bf16.mxu0 0
    %3914 = vmatpush1.bf16.msra.mxu0 %v3372
    %3915 = vmatprep.mubr.bf16.mxu0 %v2151
    %3916 = vmatmul.mubr.bf16.gmra.mrb[0].mxu0 %v2150
    %v3917 = vpop.f32.mrb[0].mxu0
    %v3918 = vadd.f32 %v3878, %v3917
    %v3919 = vpop.f32.mrb[0].mxu0
    %v3920 = vpop.f32.mrb[0].mxu0
    %v3921 = vpop.f32.mrb[0].mxu0
    %3922 = vdwg.mxu0
    %v3923 = vmul.f32 %v3673, 0.5
    %v3924 = vmul.f32 %v3675, 0.5
    %v3925 = vmul.f32 %v3755, 0.5
    %v3926 = vmul.f32 %v3757, 0.5
    %v3927 = vmul.f32 %v3837, 0.5
    %v3928 = vmul.f32 %v3839, 0.5
    %v3929 = vmul.f32 %v3918, 0.5
    %v3930 = vtanh.pop %v3923
    %v3931 = vtanh.pop %v3924
    %v3932 = vtanh.pop %v3925
    %v3933 = vtanh.pop %v3926
    %v3934 = vtanh.pop %v3927
    %v3935 = vtanh.pop %v3928
    %v3936 = vtanh.pop %v3929
    %v3937 = vadd.f32 %v3930, 1.0
    %v3938 = vadd.f32 %v3931, 1.0
    %v3939 = vadd.f32 %v3932, 1.0
    %v3940 = vadd.f32 %v3933, 1.0
    %v3941 = vadd.f32 %v3934, 1.0
    %v3942 = vadd.f32 %v3935, 1.0
    %v3943 = vadd.f32 %v3936, 1.0
    %v3944 = vmul.f32 %v3937, 0.5
    %v3945 = vmul.f32 %v3938, 0.5
    %v3946 = vmul.f32 %v3939, 0.5
    %v3947 = vmul.f32 %v3940, 0.5
    %v3948 = vmul.f32 %v3941, 0.5
    %v3949 = vmul.f32 %v3942, 0.5
    %v3950 = vmul.f32 %v3943, 0.5
    %v3951 = vpack.c.bf16 %v3944, %v3944
    %v3952 = vpack.c.bf16 %v3945, %v3945
    %v3953 = vpack.c.bf16 %v3946, %v3946
    %v3954 = vpack.c.bf16 %v3947, %v3947
    %v3955 = vpack.c.bf16 %v3948, %v3948
    %v3956 = vpack.c.bf16 %v3949, %v3949
    %v3957 = vpack.c.bf16 %v3950, %v3950
    %v3965 = vunpack.c.l.b16 %v3951
    %v3966 = vunpack.c.l.b16 %v3952
    %v3967 = vunpack.c.l.b16 %v3953
    %v3968 = vunpack.c.l.b16 %v3954
    %v3969 = vunpack.c.l.b16 %v3955
    %v3970 = vunpack.c.l.b16 %v3956
    %v3971 = vunpack.c.l.b16 %v3957
    %v3972 = vpack.c.b16 %v3966, %v3965
    %v3973 = vpack.c.b16 %v3968, %v3967
    %v3974 = vpack.c.b16 %v3970, %v3969
    %v3975 = vpack.c.b16 %v3971, %v3971
    %3980 = vst [vmem:[#allocation7] sm:$0xff] %v3972
    %3981 = vst [vmem:[#allocation7 + $0x8] sm:$0xff] %v3973
    %3982 = vst [vmem:[#allocation7 + $0x10] sm:$0xff] %v3974
    %3983 = vst [vmem:[#allocation7 + $0x18] sm:$0xf] %v3975
    // Predicated region
    $region50: #{vae_forward.1} parent=1 // pred_check
      _
    $region51: #{vae_forward.1} parent=1 // pred_check_branch
      %3985 = sbr.rel (0) target = $region53
    $region52: #{vae_forward.1} parent=1 // pred_region
      %s3987 = ssub.s32 448, 448
      %3988 = vsyncadd [#allocation4], %s3987
      %s3990 = sshll.u32 [#allocation7], 4
      %s3991 = int_to_ptr.vmem [resolvable:$true] %s3990
      %3993 = dma.vmem_to_hbm [thread:$0]  %s3991, 448, %s10, [#allocation4]
    $region53: #{vae_forward.1} parent=1 // pred_fallthru
      _
    // Predicated region
    $region54: #{vae_forward.1} parent=1 // pred_check
      _
    $region55: #{vae_forward.1} parent=1 // pred_check_branch
      %3995 = sbr.rel (0) target = $region57
    $region56: #{vae_forward.1} parent=1 // pred_region
      _
    $region57: #{vae_forward.1} parent=1 // pred_fallthru
      _
    // Predicated region
    $region58: #{vae_forward.1} parent=1 // pred_check
      _
    $region59: #{vae_forward.1} parent=1 // pred_check_branch
      %3997 = sbr.rel (0) target = $region61
    $region60: #{vae_forward.1} parent=1 // pred_region
      %3998 = dma.done [#allocation4], 448
    $region61: #{vae_forward.1} parent=1 // pred_fallthru
      _
    // Predicated region
    $region62: #{vae_forward.1} parent=1 // pred_check
      _
    $region63: #{vae_forward.1} parent=1 // pred_check_branch
      %4000 = sbr.rel (0) target = $region65
    $region64: #{vae_forward.1} parent=1 // pred_region
      _
    $region65: #{vae_forward.1} parent=1 // pred_fallthru
      _
    %4001 = vsyncpa [#allocation3], 1
    %4002 = vsyncpa [#allocation6], 1
    %4003 = vsyncpa [#allocation4], 1

</llo_original>
